<compile_context>
chip_gen: v5e
topology: v5e:2x2
jax: 0.10.0
libtpu: 0.0.40
codegen_flags: <defaults>
</compile_context>

<pallas_src>
import functools
import math

import jax
import jax.numpy as jnp
import numpy as np
from jax.experimental import pallas as pl
from jax.experimental.pallas import tpu as pltpu


# ------------------------------- kernel ----------------------------------- #

def _soft_relu(x, alpha=1.0):
    return x * 0.5 + jnp.sqrt(x * x + alpha * alpha) * 0.5 - alpha * 0.5


def _fused_blocks_kernel(rowcol_ref, x_ref,
                         wc1_ref, bc1_ref, wc2_ref, bc2_ref,
                         wm1_ref, bm1_ref, wm2_ref, bm2_ref,
                         o_ref, *, depth, C, Hp, Wp, N):
    """Runs all `depth` SwinTransformerV2 blocks for the whole (lane-folded)
    batch.  Activation layout: (C, N) with N = B * Sp flattened padded-grid
    positions in lanes (Sp 128-aligned per image)."""
    f32 = jnp.float32
    bf16 = jnp.bfloat16

    # ---- constant reflect-padding masks (hoisted, computed once) ----
    row = jnp.broadcast_to(rowcol_ref[0:1, :], (C, N))
    col = jnp.broadcast_to(rowcol_ref[1:2, :], (C, N))
    m_r0 = row == 0
    m_rL = row == Hp - 1
    m_c0 = col == 0
    m_cL = col == Wp - 1

    def shift(v, off):
        # result[:, p] = v[:, (p + off) % N]  — static lane rotation (XLU).
        # Wrap-around only lands on halo / lane-padding outputs, which are
        # never used for interior results and are cropped at exit.
        if off == 0:
            return v
        return pltpu.roll(v, (-off) % N, axis=1)

    def reflect_fix(v):
        # Rebuild the 1-pixel reflect halo of every padded image from its
        # interior (torch 'reflect': no edge repeat).  Row fix first, then the
        # column fix on the row-fixed value (handles the corners correctly).
        rf = jnp.where(m_r0, shift(v, 2 * Wp),
                       jnp.where(m_rL, shift(v, -2 * Wp), v))
        return jnp.where(m_c0, shift(rf, 2),
                         jnp.where(m_cL, shift(rf, -2), rf))

    def conv3x3(v, w_ref, b_ref, d):
        # ONE fused K = 9*C matmul: stack the 9 shifted taps (row shifts and
        # column rolls) into (9C, N), contract against (C, 9C) in bf16.
        taps = []
        for dy in (-1, 0, 1):
            r = shift(v, dy * Wp)
            for dx in (-1, 0, 1):
                taps.append(shift(r, dx))
        stack = jnp.concatenate(taps, axis=0).astype(bf16)        # (9C, N)
        return jnp.dot(w_ref[d], stack, preferred_element_type=f32) + b_ref[d]

    x = x_ref[...].astype(f32)                                    # (C, N)

    # depth = 2 here: static unroll is fine.  For deep stacks, switch to a
    # depth grid axis ('arbitrary') with per-depth (1, C, 9C) weight blocks.
    for d in range(depth):
        # -- "attention" branch (conv_type='Conv', use_attn=False) --
        xb = reflect_fix(x)                                       # valid halo
        y = _soft_relu(conv3x3(xb, wc1_ref, bc1_ref, d))
        yb = reflect_fix(y)                                       # re-pad
        x1 = xb + conv3x3(yb, wc2_ref, bc2_ref, d)                # residual 1
        # -- MLP branch (1x1 convs) --
        h = _soft_relu(jnp.dot(wm1_ref[d], x1.astype(bf16),
                               preferred_element_type=f32) + bm1_ref[d])
        x = x1 + jnp.dot(wm2_ref[d], h.astype(bf16),
                         preferred_element_type=f32) + bm2_ref[d]  # residual 2

    o_ref[...] = x.astype(o_ref.dtype)


# ------------------------------ wrapper ------------------------------------ #

def dehazeformer_block_forward(x_nchw, params):
    """DehazeFormer_Block forward (conv_type='Conv', use_attn=False).
    Input / output layout: NCHW, exactly like the PyTorch module."""
    B, C, H, W = x_nchw.shape
    depth = params["wc1"].shape[0]
    Hp, Wp = H + 2, W + 2
    S = Hp * Wp
    Sp = ((S + 127) // 128) * 128      # per-image lane segment, 128-aligned
    N = B * Sp                          # batch folded into the lane axis

    # Entry: zero halo (kernel rebuilds it by reflection), flatten spatial,
    # pad each image's segment to a lane-aligned width, fold batch into lanes.
    xp = jnp.pad(x_nchw, ((0, 0), (0, 0), (1, 1), (1, 1)))
    xf = jnp.pad(xp.reshape(B, C, S), ((0, 0), (0, 0), (0, Sp - S)))
    xk = jnp.transpose(xf, (1, 0, 2)).reshape(C, N)

    # Padded-grid row/col index per lane (-1 on the lane-padding tail so the
    # reflect masks never fire there); precomputed to avoid in-kernel div/mod.
    rr = np.full((Sp,), -1, np.int32)
    cc = np.full((Sp,), -1, np.int32)
    rr[:S] = np.repeat(np.arange(Hp, dtype=np.int32), Wp)
    cc[:S] = np.tile(np.arange(Wp, dtype=np.int32), Hp)
    rowcol = jnp.asarray(np.stack([np.tile(rr, B), np.tile(cc, B)]))  # (2, N)

    # Matmul-ready fused conv weights (depth, C_out, 9*C_in), bf16 MXU operands.
    bf16 = jnp.bfloat16
    wc1 = jnp.transpose(params["wc1"], (0, 2, 1, 3)).reshape(depth, C, 9 * C).astype(bf16)
    wc2 = jnp.transpose(params["wc2"], (0, 2, 1, 3)).reshape(depth, C, 9 * C).astype(bf16)
    wm1 = params["wm1"].astype(bf16)
    wm2 = params["wm2"].astype(bf16)

    kernel = functools.partial(_fused_blocks_kernel,
                               depth=depth, C=C, Hp=Hp, Wp=Wp, N=N)

    def full(a):  # whole-array, grid-invariant block
        nd = a.ndim
        return pl.BlockSpec(a.shape, lambda i: (0,) * nd)

    out_flat = pl.pallas_call(
        kernel,
        out_shape=jax.ShapeDtypeStruct((C, N), x_nchw.dtype),
        grid=(1,),
        in_specs=[full(rowcol), full(xk),
                  full(wc1), full(params["bc1"]),
                  full(wc2), full(params["bc2"]),
                  full(wm1), full(params["bm1"]),
                  full(wm2), full(params["bm2"])],
        out_specs=pl.BlockSpec((C, N), lambda i: (0, 0)),
        compiler_params=pltpu.CompilerParams(
            dimension_semantics=("arbitrary",),
            vmem_limit_bytes=32 * 1024 * 1024,
        ),
    )(rowcol, xk,
      wc1, params["bc1"], wc2, params["bc2"],
      wm1, params["bm1"], wm2, params["bm2"])

    # Exit: unfold batch, drop lane padding, un-flatten, crop the 1-pixel halo.
    out = out_flat.reshape(C, B, Sp)[:, :, :S]
    out = jnp.transpose(out, (1, 0, 2)).reshape(B, C, Hp, Wp)
    return out[:, :, 1:H + 1, 1:W + 1]


# -------------------------- params / reference ----------------------------- #

def init_params(key, network_depth, dim, depth, mlp_ratio, dtype=jnp.float32):
    """Synthetic init mirroring the module's _init_weights (gain-scaled normal
    weights, zero biases).  Conv weights stored as (depth, 9, C_out, C_in)."""
    hidden = int(dim * mlp_ratio)
    gain = (8.0 * network_depth) ** (-0.25)
    std_c = gain * math.sqrt(2.0 / (9 * dim + 9 * dim))
    std_m1 = gain * math.sqrt(2.0 / (dim + hidden))
    std_m2 = gain * math.sqrt(2.0 / (hidden + dim))
    k1, k2, k3, k4 = jax.random.split(key, 4)
    return dict(
        wc1=(jax.random.normal(k1, (depth, 9, dim, dim)) * std_c).astype(dtype),
        bc1=jnp.zeros((depth, dim, 1), dtype),
        wc2=(jax.random.normal(k2, (depth, 9, dim, dim)) * std_c).astype(dtype),
        bc2=jnp.zeros((depth, dim, 1), dtype),
        wm1=(jax.random.normal(k3, (depth, hidden, dim)) * std_m1).astype(dtype),
        bm1=jnp.zeros((depth, hidden, 1), dtype),
        wm2=(jax.random.normal(k4, (depth, dim, hidden)) * std_m2).astype(dtype),
        bm2=jnp.zeros((depth, dim, 1), dtype),
    )


def _reference_forward(x_nchw, params):
    """Independent plain-jnp reference (f32, HIGHEST precision) with the same
    math as the PyTorch module."""
    B, C, H, W = x_nchw.shape
    depth = params["wc1"].shape[0]
    hp = jax.lax.Precision.HIGHEST

    def conv3x3(z, w, b):                      # w: (9, C_out, C_in)
        zp = jnp.pad(z, ((0, 0), (0, 0), (1, 1), (1, 1)), mode="reflect")
        acc = 0.0
        for ky in range(3):
            for kx in range(3):
                win = zp[:, :, ky:ky + H, kx:kx + W]
                acc = acc + jnp.einsum("oi,bihw->bohw", w[ky * 3 + kx], win,
                                       precision=hp)
        return acc + b.reshape(1, -1, 1, 1)

    def conv1x1(z, w, b):
        return jnp.einsum("oi,bihw->bohw", w, z, precision=hp) + b.reshape(1, -1, 1, 1)

    x = x_nchw.astype(jnp.float32)
    for d in range(depth):
        x = x + conv3x3(_soft_relu(conv3x3(x, params["wc1"][d], params["bc1"][d])),
                        params["wc2"][d], params["bc2"][d])
        x = x + conv1x1(_soft_relu(conv1x1(x, params["wm1"][d], params["bm1"][d])),
                        params["wm2"][d], params["bm2"][d])
    return x


# -------------------------------- driver ----------------------------------- #

if __name__ == "__main__":
    key = jax.random.PRNGKey(0)
    k_x, k_p = jax.random.split(key)

    # Module hyperparameters (small, consistent with the constructor).
    network_depth = 8
    dim = 8
    depth = 2
    mlp_ratio = 4.0
    # num_heads / window_size are unused when use_attn=False (attn_ratio=0.0).

    B, H, W = 2, 16, 16
    x = jax.random.normal(k_x, (B, dim, H, W), jnp.float32)
    params = init_params(k_p, network_depth, dim, depth, mlp_ratio)

    fwd = jax.jit(dehazeformer_block_forward)
    out = jax.block_until_ready(fwd(x, params))
    assert out.shape == (B, dim, H, W), out.shape
    assert out.dtype == jnp.float32

    # Kernel uses bf16 MXU operands (f32 accumulation) per the perf review; the
    # reference is f32/HIGHEST, hence the slightly relaxed tolerance.
    ref = jax.block_until_ready(_reference_forward(x, params))
    np.testing.assert_allclose(np.asarray(out), np.asarray(ref),
                               rtol=2e-2, atol=2e-2)

    print("KERNEL_OK")
</pallas_src>

<mosaic_0001>
module attributes {stable_mosaic.version = 11 : i64} {
  func.func @_fused_blocks_kernel(%arg0: i32, %arg1: memref<2x768xi32, #tpu.memory_space<vmem>>, %arg2: memref<8x768xf32, #tpu.memory_space<vmem>>, %arg3: memref<2x8x72xbf16, #tpu.memory_space<vmem>>, %arg4: memref<2x8x1xf32, #tpu.memory_space<vmem>>, %arg5: memref<2x8x72xbf16, #tpu.memory_space<vmem>>, %arg6: memref<2x8x1xf32, #tpu.memory_space<vmem>>, %arg7: memref<2x32x8xbf16, #tpu.memory_space<vmem>>, %arg8: memref<2x32x1xf32, #tpu.memory_space<vmem>>, %arg9: memref<2x8x32xbf16, #tpu.memory_space<vmem>>, %arg10: memref<2x8x1xf32, #tpu.memory_space<vmem>>, %arg11: memref<8x768xf32, #tpu.memory_space<vmem>>) attributes {dimension_semantics = [#tpu.dimension_semantics<arbitrary>], iteration_bounds = array<i64: 1>, scalar_prefetch = 0 : i64, scratch_operands = 0 : i64, tpu.core_type = #tpu.core_type<tc>, window_params = [{pipeline_mode = #tpu.pipeline_mode<synchronous>, transform_indices = @transform_0, window_bounds = array<i64: 2, 768>}, {pipeline_mode = #tpu.pipeline_mode<synchronous>, transform_indices = @transform_1, window_bounds = array<i64: 8, 768>}, {pipeline_mode = #tpu.pipeline_mode<synchronous>, transform_indices = @transform_2, window_bounds = array<i64: 2, 8, 72>}, {pipeline_mode = #tpu.pipeline_mode<synchronous>, transform_indices = @transform_3, window_bounds = array<i64: 2, 8, 1>}, {pipeline_mode = #tpu.pipeline_mode<synchronous>, transform_indices = @transform_4, window_bounds = array<i64: 2, 8, 72>}, {pipeline_mode = #tpu.pipeline_mode<synchronous>, transform_indices = @transform_5, window_bounds = array<i64: 2, 8, 1>}, {pipeline_mode = #tpu.pipeline_mode<synchronous>, transform_indices = @transform_6, window_bounds = array<i64: 2, 32, 8>}, {pipeline_mode = #tpu.pipeline_mode<synchronous>, transform_indices = @transform_7, window_bounds = array<i64: 2, 32, 1>}, {pipeline_mode = #tpu.pipeline_mode<synchronous>, transform_indices = @transform_8, window_bounds = array<i64: 2, 8, 32>}, {pipeline_mode = #tpu.pipeline_mode<synchronous>, transform_indices = @transform_9, window_bounds = array<i64: 2, 8, 1>}, {pipeline_mode = #tpu.pipeline_mode<synchronous>, transform_indices = @transform_10, window_bounds = array<i64: 8, 768>}]} {
    %c0 = arith.constant 0 : index
    %c0_0 = arith.constant 0 : index
    %0 = vector.load %arg1[%c0, %c0_0] : memref<2x768xi32, #tpu.memory_space<vmem>>, vector<1x768xi32>
    %1 = vector.shape_cast %0 : vector<1x768xi32> to vector<1x768xi32>
    %2 = vector.broadcast %1 : vector<1x768xi32> to vector<8x768xi32>
    %c1 = arith.constant 1 : index
    %c0_1 = arith.constant 0 : index
    %3 = vector.load %arg1[%c1, %c0_1] : memref<2x768xi32, #tpu.memory_space<vmem>>, vector<1x768xi32>
    %4 = vector.shape_cast %3 : vector<1x768xi32> to vector<1x768xi32>
    %5 = vector.broadcast %4 : vector<1x768xi32> to vector<8x768xi32>
    %c0_i32 = arith.constant 0 : i32
    %6 = vector.broadcast %c0_i32 : i32 to vector<8x768xi32>
    %7 = arith.cmpi eq, %2, %6 : vector<8x768xi32>
    %c17_i32 = arith.constant 17 : i32
    %8 = vector.broadcast %c17_i32 : i32 to vector<8x768xi32>
    %9 = arith.cmpi eq, %2, %8 : vector<8x768xi32>
    %c0_i32_2 = arith.constant 0 : i32
    %10 = vector.broadcast %c0_i32_2 : i32 to vector<8x768xi32>
    %11 = arith.cmpi eq, %5, %10 : vector<8x768xi32>
    %c17_i32_3 = arith.constant 17 : i32
    %12 = vector.broadcast %c17_i32_3 : i32 to vector<8x768xi32>
    %13 = arith.cmpi eq, %5, %12 : vector<8x768xi32>
    %c0_4 = arith.constant 0 : index
    %c0_5 = arith.constant 0 : index
    %14 = vector.load %arg2[%c0_4, %c0_5] : memref<8x768xf32, #tpu.memory_space<vmem>>, vector<8x768xf32>
    %c732_i32 = arith.constant 732 : i32
    %15 = tpu.dynamic_rotate %14 by %c732_i32 dim 1 : vector<8x768xf32>, i32 -> vector<8x768xf32>
    %c36_i32 = arith.constant 36 : i32
    %16 = tpu.dynamic_rotate %14 by %c36_i32 dim 1 : vector<8x768xf32>, i32 -> vector<8x768xf32>
    %17 = arith.select %9, %16, %14 : vector<8x768xi1>, vector<8x768xf32>
    %18 = arith.select %7, %15, %17 : vector<8x768xi1>, vector<8x768xf32>
    %c766_i32 = arith.constant 766 : i32
    %19 = tpu.dynamic_rotate %18 by %c766_i32 dim 1 : vector<8x768xf32>, i32 -> vector<8x768xf32>
    %c2_i32 = arith.constant 2 : i32
    %20 = tpu.dynamic_rotate %18 by %c2_i32 dim 1 : vector<8x768xf32>, i32 -> vector<8x768xf32>
    %21 = arith.select %13, %20, %18 : vector<8x768xi1>, vector<8x768xf32>
    %22 = arith.select %11, %19, %21 : vector<8x768xi1>, vector<8x768xf32>
    %c18_i32 = arith.constant 18 : i32
    %23 = tpu.dynamic_rotate %22 by %c18_i32 dim 1 : vector<8x768xf32>, i32 -> vector<8x768xf32>
    %c1_i32 = arith.constant 1 : i32
    %24 = tpu.dynamic_rotate %23 by %c1_i32 dim 1 : vector<8x768xf32>, i32 -> vector<8x768xf32>
    %c767_i32 = arith.constant 767 : i32
    %25 = tpu.dynamic_rotate %23 by %c767_i32 dim 1 : vector<8x768xf32>, i32 -> vector<8x768xf32>
    %c1_i32_6 = arith.constant 1 : i32
    %26 = tpu.dynamic_rotate %22 by %c1_i32_6 dim 1 : vector<8x768xf32>, i32 -> vector<8x768xf32>
    %c767_i32_7 = arith.constant 767 : i32
    %27 = tpu.dynamic_rotate %22 by %c767_i32_7 dim 1 : vector<8x768xf32>, i32 -> vector<8x768xf32>
    %c750_i32 = arith.constant 750 : i32
    %28 = tpu.dynamic_rotate %22 by %c750_i32 dim 1 : vector<8x768xf32>, i32 -> vector<8x768xf32>
    %c1_i32_8 = arith.constant 1 : i32
    %29 = tpu.dynamic_rotate %28 by %c1_i32_8 dim 1 : vector<8x768xf32>, i32 -> vector<8x768xf32>
    %c767_i32_9 = arith.constant 767 : i32
    %30 = tpu.dynamic_rotate %28 by %c767_i32_9 dim 1 : vector<8x768xf32>, i32 -> vector<8x768xf32>
    %31 = tpu.concatenate %24, %23, %25, %26, %22, %27, %29, %28, %30 in 0 : vector<8x768xf32>, vector<8x768xf32>, vector<8x768xf32>, vector<8x768xf32>, vector<8x768xf32>, vector<8x768xf32>, vector<8x768xf32>, vector<8x768xf32>, vector<8x768xf32> -> vector<72x768xf32>
    %32 = arith.truncf %31 : vector<72x768xf32> to vector<72x768xbf16>
    %c0_10 = arith.constant 0 : index
    %c0_11 = arith.constant 0 : index
    %c0_12 = arith.constant 0 : index
    %33 = vector.load %arg3[%c0_10, %c0_11, %c0_12] : memref<2x8x72xbf16, #tpu.memory_space<vmem>>, vector<1x8x72xbf16>
    %34 = vector.shape_cast %33 : vector<1x8x72xbf16> to vector<8x72xbf16>
    %cst = arith.constant dense<0.000000e+00> : vector<8x768xf32>
    %35 = tpu.matmul %34, %32, %cst {dimension_numbers = #tpu.dot_dimension_numbers<[1], [0], [0], [1], [0, 0, 1, 1], [], []>} : vector<8x72xbf16>, vector<72x768xbf16>, vector<8x768xf32> -> vector<8x768xf32>
    %c0_13 = arith.constant 0 : index
    %c0_14 = arith.constant 0 : index
    %c0_15 = arith.constant 0 : index
    %36 = vector.load %arg4[%c0_13, %c0_14, %c0_15] : memref<2x8x1xf32, #tpu.memory_space<vmem>>, vector<1x8x1xf32>
    %37 = vector.shape_cast %36 : vector<1x8x1xf32> to vector<8x1xf32>
    %38 = vector.broadcast %37 : vector<8x1xf32> to vector<8x768xf32>
    %39 = arith.addf %35, %38 : vector<8x768xf32>
    %cst_16 = arith.constant 5.000000e-01 : f32
    %40 = vector.broadcast %cst_16 : f32 to vector<8x768xf32>
    %41 = arith.mulf %39, %40 : vector<8x768xf32>
    %42 = arith.mulf %39, %39 : vector<8x768xf32>
    %cst_17 = arith.constant 1.000000e+00 : f32
    %43 = vector.broadcast %cst_17 : f32 to vector<8x768xf32>
    %44 = arith.addf %42, %43 : vector<8x768xf32>
    %45 = math.sqrt %44 : vector<8x768xf32>
    %cst_18 = arith.constant 5.000000e-01 : f32
    %46 = vector.broadcast %cst_18 : f32 to vector<8x768xf32>
    %47 = arith.mulf %45, %46 : vector<8x768xf32>
    %48 = arith.addf %41, %47 : vector<8x768xf32>
    %cst_19 = arith.constant 5.000000e-01 : f32
    %49 = vector.broadcast %cst_19 : f32 to vector<8x768xf32>
    %50 = arith.subf %48, %49 : vector<8x768xf32>
    %c732_i32_20 = arith.constant 732 : i32
    %51 = tpu.dynamic_rotate %50 by %c732_i32_20 dim 1 : vector<8x768xf32>, i32 -> vector<8x768xf32>
    %c36_i32_21 = arith.constant 36 : i32
    %52 = tpu.dynamic_rotate %50 by %c36_i32_21 dim 1 : vector<8x768xf32>, i32 -> vector<8x768xf32>
    %53 = arith.select %9, %52, %50 : vector<8x768xi1>, vector<8x768xf32>
    %54 = arith.select %7, %51, %53 : vector<8x768xi1>, vector<8x768xf32>
    %c766_i32_22 = arith.constant 766 : i32
    %55 = tpu.dynamic_rotate %54 by %c766_i32_22 dim 1 : vector<8x768xf32>, i32 -> vector<8x768xf32>
    %c2_i32_23 = arith.constant 2 : i32
    %56 = tpu.dynamic_rotate %54 by %c2_i32_23 dim 1 : vector<8x768xf32>, i32 -> vector<8x768xf32>
    %57 = arith.select %13, %56, %54 : vector<8x768xi1>, vector<8x768xf32>
    %58 = arith.select %11, %55, %57 : vector<8x768xi1>, vector<8x768xf32>
    %c18_i32_24 = arith.constant 18 : i32
    %59 = tpu.dynamic_rotate %58 by %c18_i32_24 dim 1 : vector<8x768xf32>, i32 -> vector<8x768xf32>
    %c1_i32_25 = arith.constant 1 : i32
    %60 = tpu.dynamic_rotate %59 by %c1_i32_25 dim 1 : vector<8x768xf32>, i32 -> vector<8x768xf32>
    %c767_i32_26 = arith.constant 767 : i32
    %61 = tpu.dynamic_rotate %59 by %c767_i32_26 dim 1 : vector<8x768xf32>, i32 -> vector<8x768xf32>
    %c1_i32_27 = arith.constant 1 : i32
    %62 = tpu.dynamic_rotate %58 by %c1_i32_27 dim 1 : vector<8x768xf32>, i32 -> vector<8x768xf32>
    %c767_i32_28 = arith.constant 767 : i32
    %63 = tpu.dynamic_rotate %58 by %c767_i32_28 dim 1 : vector<8x768xf32>, i32 -> vector<8x768xf32>
    %c750_i32_29 = arith.constant 750 : i32
    %64 = tpu.dynamic_rotate %58 by %c750_i32_29 dim 1 : vector<8x768xf32>, i32 -> vector<8x768xf32>
    %c1_i32_30 = arith.constant 1 : i32
    %65 = tpu.dynamic_rotate %64 by %c1_i32_30 dim 1 : vector<8x768xf32>, i32 -> vector<8x768xf32>
    %c767_i32_31 = arith.constant 767 : i32
    %66 = tpu.dynamic_rotate %64 by %c767_i32_31 dim 1 : vector<8x768xf32>, i32 -> vector<8x768xf32>
    %67 = tpu.concatenate %60, %59, %61, %62, %58, %63, %65, %64, %66 in 0 : vector<8x768xf32>, vector<8x768xf32>, vector<8x768xf32>, vector<8x768xf32>, vector<8x768xf32>, vector<8x768xf32>, vector<8x768xf32>, vector<8x768xf32>, vector<8x768xf32> -> vector<72x768xf32>
    %68 = arith.truncf %67 : vector<72x768xf32> to vector<72x768xbf16>
    %c0_32 = arith.constant 0 : index
    %c0_33 = arith.constant 0 : index
    %c0_34 = arith.constant 0 : index
    %69 = vector.load %arg5[%c0_32, %c0_33, %c0_34] : memref<2x8x72xbf16, #tpu.memory_space<vmem>>, vector<1x8x72xbf16>
    %70 = vector.shape_cast %69 : vector<1x8x72xbf16> to vector<8x72xbf16>
    %cst_35 = arith.constant dense<0.000000e+00> : vector<8x768xf32>
    %71 = tpu.matmul %70, %68, %cst_35 {dimension_numbers = #tpu.dot_dimension_numbers<[1], [0], [0], [1], [0, 0, 1, 1], [], []>} : vector<8x72xbf16>, vector<72x768xbf16>, vector<8x768xf32> -> vector<8x768xf32>
    %c0_36 = arith.constant 0 : index
    %c0_37 = arith.constant 0 : index
    %c0_38 = arith.constant 0 : index
    %72 = vector.load %arg6[%c0_36, %c0_37, %c0_38] : memref<2x8x1xf32, #tpu.memory_space<vmem>>, vector<1x8x1xf32>
    %73 = vector.shape_cast %72 : vector<1x8x1xf32> to vector<8x1xf32>
    %74 = vector.broadcast %73 : vector<8x1xf32> to vector<8x768xf32>
    %75 = arith.addf %71, %74 : vector<8x768xf32>
    %76 = arith.addf %22, %75 : vector<8x768xf32>
    %c0_39 = arith.constant 0 : index
    %c0_40 = arith.constant 0 : index
    %c0_41 = arith.constant 0 : index
    %77 = vector.load %arg7[%c0_39, %c0_40, %c0_41] : memref<2x32x8xbf16, #tpu.memory_space<vmem>>, vector<1x32x8xbf16>
    %78 = vector.shape_cast %77 : vector<1x32x8xbf16> to vector<32x8xbf16>
    %79 = arith.truncf %76 : vector<8x768xf32> to vector<8x768xbf16>
    %cst_42 = arith.constant dense<0.000000e+00> : vector<32x768xf32>
    %80 = tpu.matmul %78, %79, %cst_42 {dimension_numbers = #tpu.dot_dimension_numbers<[1], [0], [0], [1], [0, 0, 1, 1], [], []>} : vector<32x8xbf16>, vector<8x768xbf16>, vector<32x768xf32> -> vector<32x768xf32>
    %c0_43 = arith.constant 0 : index
    %c0_44 = arith.constant 0 : index
    %c0_45 = arith.constant 0 : index
    %81 = vector.load %arg8[%c0_43, %c0_44, %c0_45] : memref<2x32x1xf32, #tpu.memory_space<vmem>>, vector<1x32x1xf32>
    %82 = vector.shape_cast %81 : vector<1x32x1xf32> to vector<32x1xf32>
    %83 = vector.broadcast %82 : vector<32x1xf32> to vector<32x768xf32>
    %84 = arith.addf %80, %83 : vector<32x768xf32>
    %cst_46 = arith.constant 5.000000e-01 : f32
    %85 = vector.broadcast %cst_46 : f32 to vector<32x768xf32>
    %86 = arith.mulf %84, %85 : vector<32x768xf32>
    %87 = arith.mulf %84, %84 : vector<32x768xf32>
    %cst_47 = arith.constant 1.000000e+00 : f32
    %88 = vector.broadcast %cst_47 : f32 to vector<32x768xf32>
    %89 = arith.addf %87, %88 : vector<32x768xf32>
    %90 = math.sqrt %89 : vector<32x768xf32>
    %cst_48 = arith.constant 5.000000e-01 : f32
    %91 = vector.broadcast %cst_48 : f32 to vector<32x768xf32>
    %92 = arith.mulf %90, %91 : vector<32x768xf32>
    %93 = arith.addf %86, %92 : vector<32x768xf32>
    %cst_49 = arith.constant 5.000000e-01 : f32
    %94 = vector.broadcast %cst_49 : f32 to vector<32x768xf32>
    %95 = arith.subf %93, %94 : vector<32x768xf32>
    %c0_50 = arith.constant 0 : index
    %c0_51 = arith.constant 0 : index
    %c0_52 = arith.constant 0 : index
    %96 = vector.load %arg9[%c0_50, %c0_51, %c0_52] : memref<2x8x32xbf16, #tpu.memory_space<vmem>>, vector<1x8x32xbf16>
    %97 = vector.shape_cast %96 : vector<1x8x32xbf16> to vector<8x32xbf16>
    %98 = arith.truncf %95 : vector<32x768xf32> to vector<32x768xbf16>
    %cst_53 = arith.constant dense<0.000000e+00> : vector<8x768xf32>
    %99 = tpu.matmul %97, %98, %cst_53 {dimension_numbers = #tpu.dot_dimension_numbers<[1], [0], [0], [1], [0, 0, 1, 1], [], []>} : vector<8x32xbf16>, vector<32x768xbf16>, vector<8x768xf32> -> vector<8x768xf32>
    %100 = arith.addf %76, %99 : vector<8x768xf32>
    %c0_54 = arith.constant 0 : index
    %c0_55 = arith.constant 0 : index
    %c0_56 = arith.constant 0 : index
    %101 = vector.load %arg10[%c0_54, %c0_55, %c0_56] : memref<2x8x1xf32, #tpu.memory_space<vmem>>, vector<1x8x1xf32>
    %102 = vector.shape_cast %101 : vector<1x8x1xf32> to vector<8x1xf32>
    %103 = vector.broadcast %102 : vector<8x1xf32> to vector<8x768xf32>
    %104 = arith.addf %100, %103 : vector<8x768xf32>
    %c732_i32_57 = arith.constant 732 : i32
    %105 = tpu.dynamic_rotate %104 by %c732_i32_57 dim 1 : vector<8x768xf32>, i32 -> vector<8x768xf32>
    %c36_i32_58 = arith.constant 36 : i32
    %106 = tpu.dynamic_rotate %104 by %c36_i32_58 dim 1 : vector<8x768xf32>, i32 -> vector<8x768xf32>
    %107 = arith.select %9, %106, %104 : vector<8x768xi1>, vector<8x768xf32>
    %108 = arith.select %7, %105, %107 : vector<8x768xi1>, vector<8x768xf32>
    %c766_i32_59 = arith.constant 766 : i32
    %109 = tpu.dynamic_rotate %108 by %c766_i32_59 dim 1 : vector<8x768xf32>, i32 -> vector<8x768xf32>
    %c2_i32_60 = arith.constant 2 : i32
    %110 = tpu.dynamic_rotate %108 by %c2_i32_60 dim 1 : vector<8x768xf32>, i32 -> vector<8x768xf32>
    %111 = arith.select %13, %110, %108 : vector<8x768xi1>, vector<8x768xf32>
    %112 = arith.select %11, %109, %111 : vector<8x768xi1>, vector<8x768xf32>
    %c18_i32_61 = arith.constant 18 : i32
    %113 = tpu.dynamic_rotate %112 by %c18_i32_61 dim 1 : vector<8x768xf32>, i32 -> vector<8x768xf32>
    %c1_i32_62 = arith.constant 1 : i32
    %114 = tpu.dynamic_rotate %113 by %c1_i32_62 dim 1 : vector<8x768xf32>, i32 -> vector<8x768xf32>
    %c767_i32_63 = arith.constant 767 : i32
    %115 = tpu.dynamic_rotate %113 by %c767_i32_63 dim 1 : vector<8x768xf32>, i32 -> vector<8x768xf32>
    %c1_i32_64 = arith.constant 1 : i32
    %116 = tpu.dynamic_rotate %112 by %c1_i32_64 dim 1 : vector<8x768xf32>, i32 -> vector<8x768xf32>
    %c767_i32_65 = arith.constant 767 : i32
    %117 = tpu.dynamic_rotate %112 by %c767_i32_65 dim 1 : vector<8x768xf32>, i32 -> vector<8x768xf32>
    %c750_i32_66 = arith.constant 750 : i32
    %118 = tpu.dynamic_rotate %112 by %c750_i32_66 dim 1 : vector<8x768xf32>, i32 -> vector<8x768xf32>
    %c1_i32_67 = arith.constant 1 : i32
    %119 = tpu.dynamic_rotate %118 by %c1_i32_67 dim 1 : vector<8x768xf32>, i32 -> vector<8x768xf32>
    %c767_i32_68 = arith.constant 767 : i32
    %120 = tpu.dynamic_rotate %118 by %c767_i32_68 dim 1 : vector<8x768xf32>, i32 -> vector<8x768xf32>
    %121 = tpu.concatenate %114, %113, %115, %116, %112, %117, %119, %118, %120 in 0 : vector<8x768xf32>, vector<8x768xf32>, vector<8x768xf32>, vector<8x768xf32>, vector<8x768xf32>, vector<8x768xf32>, vector<8x768xf32>, vector<8x768xf32>, vector<8x768xf32> -> vector<72x768xf32>
    %122 = arith.truncf %121 : vector<72x768xf32> to vector<72x768xbf16>
    %c1_69 = arith.constant 1 : index
    %c0_70 = arith.constant 0 : index
    %c0_71 = arith.constant 0 : index
    %123 = vector.load %arg3[%c1_69, %c0_70, %c0_71] : memref<2x8x72xbf16, #tpu.memory_space<vmem>>, vector<1x8x72xbf16>
    %124 = vector.shape_cast %123 : vector<1x8x72xbf16> to vector<8x72xbf16>
    %cst_72 = arith.constant dense<0.000000e+00> : vector<8x768xf32>
    %125 = tpu.matmul %124, %122, %cst_72 {dimension_numbers = #tpu.dot_dimension_numbers<[1], [0], [0], [1], [0, 0, 1, 1], [], []>} : vector<8x72xbf16>, vector<72x768xbf16>, vector<8x768xf32> -> vector<8x768xf32>
    %c1_73 = arith.constant 1 : index
    %c0_74 = arith.constant 0 : index
    %c0_75 = arith.constant 0 : index
    %126 = vector.load %arg4[%c1_73, %c0_74, %c0_75] : memref<2x8x1xf32, #tpu.memory_space<vmem>>, vector<1x8x1xf32>
    %127 = vector.shape_cast %126 : vector<1x8x1xf32> to vector<8x1xf32>
    %128 = vector.broadcast %127 : vector<8x1xf32> to vector<8x768xf32>
    %129 = arith.addf %125, %128 : vector<8x768xf32>
    %cst_76 = arith.constant 5.000000e-01 : f32
    %130 = vector.broadcast %cst_76 : f32 to vector<8x768xf32>
    %131 = arith.mulf %129, %130 : vector<8x768xf32>
    %132 = arith.mulf %129, %129 : vector<8x768xf32>
    %cst_77 = arith.constant 1.000000e+00 : f32
    %133 = vector.broadcast %cst_77 : f32 to vector<8x768xf32>
    %134 = arith.addf %132, %133 : vector<8x768xf32>
    %135 = math.sqrt %134 : vector<8x768xf32>
    %cst_78 = arith.constant 5.000000e-01 : f32
    %136 = vector.broadcast %cst_78 : f32 to vector<8x768xf32>
    %137 = arith.mulf %135, %136 : vector<8x768xf32>
    %138 = arith.addf %131, %137 : vector<8x768xf32>
    %cst_79 = arith.constant 5.000000e-01 : f32
    %139 = vector.broadcast %cst_79 : f32 to vector<8x768xf32>
    %140 = arith.subf %138, %139 : vector<8x768xf32>
    %c732_i32_80 = arith.constant 732 : i32
    %141 = tpu.dynamic_rotate %140 by %c732_i32_80 dim 1 : vector<8x768xf32>, i32 -> vector<8x768xf32>
    %c36_i32_81 = arith.constant 36 : i32
    %142 = tpu.dynamic_rotate %140 by %c36_i32_81 dim 1 : vector<8x768xf32>, i32 -> vector<8x768xf32>
    %143 = arith.select %9, %142, %140 : vector<8x768xi1>, vector<8x768xf32>
    %144 = arith.select %7, %141, %143 : vector<8x768xi1>, vector<8x768xf32>
    %c766_i32_82 = arith.constant 766 : i32
    %145 = tpu.dynamic_rotate %144 by %c766_i32_82 dim 1 : vector<8x768xf32>, i32 -> vector<8x768xf32>
    %c2_i32_83 = arith.constant 2 : i32
    %146 = tpu.dynamic_rotate %144 by %c2_i32_83 dim 1 : vector<8x768xf32>, i32 -> vector<8x768xf32>
    %147 = arith.select %13, %146, %144 : vector<8x768xi1>, vector<8x768xf32>
    %148 = arith.select %11, %145, %147 : vector<8x768xi1>, vector<8x768xf32>
    %c18_i32_84 = arith.constant 18 : i32
    %149 = tpu.dynamic_rotate %148 by %c18_i32_84 dim 1 : vector<8x768xf32>, i32 -> vector<8x768xf32>
    %c1_i32_85 = arith.constant 1 : i32
    %150 = tpu.dynamic_rotate %149 by %c1_i32_85 dim 1 : vector<8x768xf32>, i32 -> vector<8x768xf32>
    %c767_i32_86 = arith.constant 767 : i32
    %151 = tpu.dynamic_rotate %149 by %c767_i32_86 dim 1 : vector<8x768xf32>, i32 -> vector<8x768xf32>
    %c1_i32_87 = arith.constant 1 : i32
    %152 = tpu.dynamic_rotate %148 by %c1_i32_87 dim 1 : vector<8x768xf32>, i32 -> vector<8x768xf32>
    %c767_i32_88 = arith.constant 767 : i32
    %153 = tpu.dynamic_rotate %148 by %c767_i32_88 dim 1 : vector<8x768xf32>, i32 -> vector<8x768xf32>
    %c750_i32_89 = arith.constant 750 : i32
    %154 = tpu.dynamic_rotate %148 by %c750_i32_89 dim 1 : vector<8x768xf32>, i32 -> vector<8x768xf32>
    %c1_i32_90 = arith.constant 1 : i32
    %155 = tpu.dynamic_rotate %154 by %c1_i32_90 dim 1 : vector<8x768xf32>, i32 -> vector<8x768xf32>
    %c767_i32_91 = arith.constant 767 : i32
    %156 = tpu.dynamic_rotate %154 by %c767_i32_91 dim 1 : vector<8x768xf32>, i32 -> vector<8x768xf32>
    %157 = tpu.concatenate %150, %149, %151, %152, %148, %153, %155, %154, %156 in 0 : vector<8x768xf32>, vector<8x768xf32>, vector<8x768xf32>, vector<8x768xf32>, vector<8x768xf32>, vector<8x768xf32>, vector<8x768xf32>, vector<8x768xf32>, vector<8x768xf32> -> vector<72x768xf32>
    %158 = arith.truncf %157 : vector<72x768xf32> to vector<72x768xbf16>
    %c1_92 = arith.constant 1 : index
    %c0_93 = arith.constant 0 : index
    %c0_94 = arith.constant 0 : index
    %159 = vector.load %arg5[%c1_92, %c0_93, %c0_94] : memref<2x8x72xbf16, #tpu.memory_space<vmem>>, vector<1x8x72xbf16>
    %160 = vector.shape_cast %159 : vector<1x8x72xbf16> to vector<8x72xbf16>
    %cst_95 = arith.constant dense<0.000000e+00> : vector<8x768xf32>
    %161 = tpu.matmul %160, %158, %cst_95 {dimension_numbers = #tpu.dot_dimension_numbers<[1], [0], [0], [1], [0, 0, 1, 1], [], []>} : vector<8x72xbf16>, vector<72x768xbf16>, vector<8x768xf32> -> vector<8x768xf32>
    %c1_96 = arith.constant 1 : index
    %c0_97 = arith.constant 0 : index
    %c0_98 = arith.constant 0 : index
    %162 = vector.load %arg6[%c1_96, %c0_97, %c0_98] : memref<2x8x1xf32, #tpu.memory_space<vmem>>, vector<1x8x1xf32>
    %163 = vector.shape_cast %162 : vector<1x8x1xf32> to vector<8x1xf32>
    %164 = vector.broadcast %163 : vector<8x1xf32> to vector<8x768xf32>
    %165 = arith.addf %161, %164 : vector<8x768xf32>
    %166 = arith.addf %112, %165 : vector<8x768xf32>
    %c1_99 = arith.constant 1 : index
    %c0_100 = arith.constant 0 : index
    %c0_101 = arith.constant 0 : index
    %167 = vector.load %arg7[%c1_99, %c0_100, %c0_101] : memref<2x32x8xbf16, #tpu.memory_space<vmem>>, vector<1x32x8xbf16>
    %168 = vector.shape_cast %167 : vector<1x32x8xbf16> to vector<32x8xbf16>
    %169 = arith.truncf %166 : vector<8x768xf32> to vector<8x768xbf16>
    %cst_102 = arith.constant dense<0.000000e+00> : vector<32x768xf32>
    %170 = tpu.matmul %168, %169, %cst_102 {dimension_numbers = #tpu.dot_dimension_numbers<[1], [0], [0], [1], [0, 0, 1, 1], [], []>} : vector<32x8xbf16>, vector<8x768xbf16>, vector<32x768xf32> -> vector<32x768xf32>
    %c1_103 = arith.constant 1 : index
    %c0_104 = arith.constant 0 : index
    %c0_105 = arith.constant 0 : index
    %171 = vector.load %arg8[%c1_103, %c0_104, %c0_105] : memref<2x32x1xf32, #tpu.memory_space<vmem>>, vector<1x32x1xf32>
    %172 = vector.shape_cast %171 : vector<1x32x1xf32> to vector<32x1xf32>
    %173 = vector.broadcast %172 : vector<32x1xf32> to vector<32x768xf32>
    %174 = arith.addf %170, %173 : vector<32x768xf32>
    %cst_106 = arith.constant 5.000000e-01 : f32
    %175 = vector.broadcast %cst_106 : f32 to vector<32x768xf32>
    %176 = arith.mulf %174, %175 : vector<32x768xf32>
    %177 = arith.mulf %174, %174 : vector<32x768xf32>
    %cst_107 = arith.constant 1.000000e+00 : f32
    %178 = vector.broadcast %cst_107 : f32 to vector<32x768xf32>
    %179 = arith.addf %177, %178 : vector<32x768xf32>
    %180 = math.sqrt %179 : vector<32x768xf32>
    %cst_108 = arith.constant 5.000000e-01 : f32
    %181 = vector.broadcast %cst_108 : f32 to vector<32x768xf32>
    %182 = arith.mulf %180, %181 : vector<32x768xf32>
    %183 = arith.addf %176, %182 : vector<32x768xf32>
    %cst_109 = arith.constant 5.000000e-01 : f32
    %184 = vector.broadcast %cst_109 : f32 to vector<32x768xf32>
    %185 = arith.subf %183, %184 : vector<32x768xf32>
    %c1_110 = arith.constant 1 : index
    %c0_111 = arith.constant 0 : index
    %c0_112 = arith.constant 0 : index
    %186 = vector.load %arg9[%c1_110, %c0_111, %c0_112] : memref<2x8x32xbf16, #tpu.memory_space<vmem>>, vector<1x8x32xbf16>
    %187 = vector.shape_cast %186 : vector<1x8x32xbf16> to vector<8x32xbf16>
    %188 = arith.truncf %185 : vector<32x768xf32> to vector<32x768xbf16>
    %cst_113 = arith.constant dense<0.000000e+00> : vector<8x768xf32>
    %189 = tpu.matmul %187, %188, %cst_113 {dimension_numbers = #tpu.dot_dimension_numbers<[1], [0], [0], [1], [0, 0, 1, 1], [], []>} : vector<8x32xbf16>, vector<32x768xbf16>, vector<8x768xf32> -> vector<8x768xf32>
    %190 = arith.addf %166, %189 : vector<8x768xf32>
    %c1_114 = arith.constant 1 : index
    %c0_115 = arith.constant 0 : index
    %c0_116 = arith.constant 0 : index
    %191 = vector.load %arg10[%c1_114, %c0_115, %c0_116] : memref<2x8x1xf32, #tpu.memory_space<vmem>>, vector<1x8x1xf32>
    %192 = vector.shape_cast %191 : vector<1x8x1xf32> to vector<8x1xf32>
    %193 = vector.broadcast %192 : vector<8x1xf32> to vector<8x768xf32>
    %194 = arith.addf %190, %193 : vector<8x768xf32>
    %c0_117 = arith.constant 0 : index
    %c0_118 = arith.constant 0 : index
    %195 = vector.load %arg11[%c0_117, %c0_118] : memref<8x768xf32, #tpu.memory_space<vmem>>, vector<8x768xf32>
    tpu.vector_store %arg11[%c0_117, %c0_118], %194 {strides = array<i32>} : memref<8x768xf32, #tpu.memory_space<vmem>>, vector<8x768xf32>,
    return
  }
  func.func @transform_0(%arg0: i32) -> (i32, i32) {
    %c0_i32 = arith.constant 0 : i32
    %c0_i32_0 = arith.constant 0 : i32
    %c0_i32_1 = arith.constant 0 : i32
    return %c0_i32, %c0_i32_0 : i32, i32
  }
  func.func @transform_1(%arg0: i32) -> (i32, i32) {
    %c0_i32 = arith.constant 0 : i32
    %c0_i32_0 = arith.constant 0 : i32
    %c0_i32_1 = arith.constant 0 : i32
    return %c0_i32, %c0_i32_0 : i32, i32
  }
  func.func @transform_2(%arg0: i32) -> (i32, i32, i32) {
    %c0_i32 = arith.constant 0 : i32
    %c0_i32_0 = arith.constant 0 : i32
    %c0_i32_1 = arith.constant 0 : i32
    %c0_i32_2 = arith.constant 0 : i32
    return %c0_i32, %c0_i32_0, %c0_i32_1 : i32, i32, i32
  }
  func.func @transform_3(%arg0: i32) -> (i32, i32, i32) {
    %c0_i32 = arith.constant 0 : i32
    %c0_i32_0 = arith.constant 0 : i32
    %c0_i32_1 = arith.constant 0 : i32
    %c0_i32_2 = arith.constant 0 : i32
    return %c0_i32, %c0_i32_0, %c0_i32_1 : i32, i32, i32
  }
  func.func @transform_4(%arg0: i32) -> (i32, i32, i32) {
    %c0_i32 = arith.constant 0 : i32
    %c0_i32_0 = arith.constant 0 : i32
    %c0_i32_1 = arith.constant 0 : i32
    %c0_i32_2 = arith.constant 0 : i32
    return %c0_i32, %c0_i32_0, %c0_i32_1 : i32, i32, i32
  }
  func.func @transform_5(%arg0: i32) -> (i32, i32, i32) {
    %c0_i32 = arith.constant 0 : i32
    %c0_i32_0 = arith.constant 0 : i32
    %c0_i32_1 = arith.constant 0 : i32
    %c0_i32_2 = arith.constant 0 : i32
    return %c0_i32, %c0_i32_0, %c0_i32_1 : i32, i32, i32
  }
  func.func @transform_6(%arg0: i32) -> (i32, i32, i32) {
    %c0_i32 = arith.constant 0 : i32
    %c0_i32_0 = arith.constant 0 : i32
    %c0_i32_1 = arith.constant 0 : i32
    %c0_i32_2 = arith.constant 0 : i32
    return %c0_i32, %c0_i32_0, %c0_i32_1 : i32, i32, i32
  }
  func.func @transform_7(%arg0: i32) -> (i32, i32, i32) {
    %c0_i32 = arith.constant 0 : i32
    %c0_i32_0 = arith.constant 0 : i32
    %c0_i32_1 = arith.constant 0 : i32
    %c0_i32_2 = arith.constant 0 : i32
    return %c0_i32, %c0_i32_0, %c0_i32_1 : i32, i32, i32
  }
  func.func @transform_8(%arg0: i32) -> (i32, i32, i32) {
    %c0_i32 = arith.constant 0 : i32
    %c0_i32_0 = arith.constant 0 : i32
    %c0_i32_1 = arith.constant 0 : i32
    %c0_i32_2 = arith.constant 0 : i32
    return %c0_i32, %c0_i32_0, %c0_i32_1 : i32, i32, i32
  }
  func.func @transform_9(%arg0: i32) -> (i32, i32, i32) {
    %c0_i32 = arith.constant 0 : i32
    %c0_i32_0 = arith.constant 0 : i32
    %c0_i32_1 = arith.constant 0 : i32
    %c0_i32_2 = arith.constant 0 : i32
    return %c0_i32, %c0_i32_0, %c0_i32_1 : i32, i32, i32
  }
  func.func @transform_10(%arg0: i32) -> (i32, i32) {
    %c0_i32 = arith.constant 0 : i32
    %c0_i32_0 = arith.constant 0 : i32
    %c0_i32_1 = arith.constant 0 : i32
    return %c0_i32, %c0_i32_0 : i32, i32
  }
}

</mosaic_0001>

<llo_original>
// kernel: dehazeformer_block_forward.1
$region0: #{dehazeformer_block_forward.1}
  #allocation0 [shape = 'u32[]', space=smem, size = 0x4, offset = 0x4, fixed_abs, tag = 'smem constant byte address 0x4 - core index']
  #allocation1 [shape = 'u32[72,128]{1,0:T(1,128)}', space=vmem, size = 0x9000, scoped, tag = 'internal scratch']
  %s0 = inlined_call_operand.vmem [shape: s32[2,768], index: 0, kind: input, shape index: {}]
  %s1 = inlined_call_operand.vmem [shape: f32[8,768], index: 1, kind: input, shape index: {}]
  %s2 = inlined_call_operand.vmem [shape: bf16[2,8,72], index: 2, kind: input, shape index: {}]
  %s3 = inlined_call_operand.vmem [shape: f32[2,8,1], index: 3, kind: input, shape index: {}]
  %s4 = inlined_call_operand.vmem [shape: bf16[2,8,72], index: 4, kind: input, shape index: {}]
  %s5 = inlined_call_operand.vmem [shape: f32[2,8,1], index: 5, kind: input, shape index: {}]
  %s6 = inlined_call_operand.vmem [shape: bf16[2,32,8], index: 6, kind: input, shape index: {}]
  %s7 = inlined_call_operand.vmem [shape: f32[2,32,1], index: 7, kind: input, shape index: {}]
  %s8 = inlined_call_operand.vmem [shape: bf16[2,8,32], index: 8, kind: input, shape index: {}]
  %s9 = inlined_call_operand.vmem [shape: f32[2,8,1], index: 9, kind: input, shape index: {}]
  %s10 = inlined_call_operand.vmem [shape: f32[8,768], index: 10, kind: output, shape index: {}]
  %s11 = sld [smem:[#allocation0]]
  $region50: #{dehazeformer_block_forward.1} parent=0
    _
  %s13 = ssub.s32 1, %s11
  %s14 = scalar_select 0, %s13, %s11
  // Predicated region
  $region2: #{dehazeformer_block_forward.1} parent=0 // pred_check
    _
  $region3: #{dehazeformer_block_forward.1} parent=0 // pred_check_branch
    %16 = sbr.rel (0) target = $region5
  $region4: #{dehazeformer_block_forward.1} parent=0 // pred_region
    _
  $region5: #{dehazeformer_block_forward.1} parent=0 // pred_fallthru
    _
  // Predicated region
  $region6: #{dehazeformer_block_forward.1} parent=0 // pred_check
    _
  $region7: #{dehazeformer_block_forward.1} parent=0 // pred_check_branch
    %18 = sbr.rel (0) target = $region9
  $region8: #{dehazeformer_block_forward.1} parent=0 // pred_region
    _
  $region9: #{dehazeformer_block_forward.1} parent=0 // pred_fallthru
    _
  // Predicated region
  $region10: #{dehazeformer_block_forward.1} parent=0 // pred_check
    _
  $region11: #{dehazeformer_block_forward.1} parent=0 // pred_check_branch
    %20 = sbr.rel (0) target = $region13
  $region12: #{dehazeformer_block_forward.1} parent=0 // pred_region
    _
  $region13: #{dehazeformer_block_forward.1} parent=0 // pred_fallthru
    _
  // Predicated region
  $region14: #{dehazeformer_block_forward.1} parent=0 // pred_check
    _
  $region15: #{dehazeformer_block_forward.1} parent=0 // pred_check_branch
    %22 = sbr.rel (0) target = $region17
  $region16: #{dehazeformer_block_forward.1} parent=0 // pred_region
    _
  $region17: #{dehazeformer_block_forward.1} parent=0 // pred_fallthru
    _
  // Predicated region
  $region18: #{dehazeformer_block_forward.1} parent=0 // pred_check
    _
  $region19: #{dehazeformer_block_forward.1} parent=0 // pred_check_branch
    %24 = sbr.rel (0) target = $region21
  $region20: #{dehazeformer_block_forward.1} parent=0 // pred_region
    _
  $region21: #{dehazeformer_block_forward.1} parent=0 // pred_fallthru
    _
  // Predicated region
  $region22: #{dehazeformer_block_forward.1} parent=0 // pred_check
    _
  $region23: #{dehazeformer_block_forward.1} parent=0 // pred_check_branch
    %26 = sbr.rel (0) target = $region25
  $region24: #{dehazeformer_block_forward.1} parent=0 // pred_region
    _
  $region25: #{dehazeformer_block_forward.1} parent=0 // pred_fallthru
    _
  // Predicated region
  $region26: #{dehazeformer_block_forward.1} parent=0 // pred_check
    _
  $region27: #{dehazeformer_block_forward.1} parent=0 // pred_check_branch
    %28 = sbr.rel (0) target = $region29
  $region28: #{dehazeformer_block_forward.1} parent=0 // pred_region
    _
  $region29: #{dehazeformer_block_forward.1} parent=0 // pred_fallthru
    _
  // Predicated region
  $region30: #{dehazeformer_block_forward.1} parent=0 // pred_check
    _
  $region31: #{dehazeformer_block_forward.1} parent=0 // pred_check_branch
    %30 = sbr.rel (0) target = $region33
  $region32: #{dehazeformer_block_forward.1} parent=0 // pred_region
    _
  $region33: #{dehazeformer_block_forward.1} parent=0 // pred_fallthru
    _
  // Predicated region
  $region34: #{dehazeformer_block_forward.1} parent=0 // pred_check
    _
  $region35: #{dehazeformer_block_forward.1} parent=0 // pred_check_branch
    %32 = sbr.rel (0) target = $region37
  $region36: #{dehazeformer_block_forward.1} parent=0 // pred_region
    _
  $region37: #{dehazeformer_block_forward.1} parent=0 // pred_fallthru
    _
  // Predicated region
  $region38: #{dehazeformer_block_forward.1} parent=0 // pred_check
    _
  $region39: #{dehazeformer_block_forward.1} parent=0 // pred_check_branch
    %34 = sbr.rel (0) target = $region41
  $region40: #{dehazeformer_block_forward.1} parent=0 // pred_region
    _
  $region41: #{dehazeformer_block_forward.1} parent=0 // pred_fallthru
    _
  %v36 = vld [vmem:[%s0] ss:$2 sm:$0x3f]
  %v37 = vperm.slane %v36, 0
  %v38 = vperm.slane %v36, 1
  %v39 = vperm.slane %v36, 2
  %v40 = vperm.slane %v36, 3
  %v41 = vperm.slane %v36, 4
  %v42 = vperm.slane %v36, 5
  %s43 = scalar_lea.vmem %s0, 1
  %v44 = vld [vmem:[%s43] ss:$2 sm:$0x3f]
  %v45 = vperm.slane %v44, 0
  %v46 = vperm.slane %v44, 1
  %v47 = vperm.slane %v44, 2
  %v48 = vperm.slane %v44, 3
  %v49 = vperm.slane %v44, 4
  %v50 = vperm.slane %v44, 5
  %vm51 = vcmp.eq.s32.totalorder %v37, 0
  %vm52 = vcmp.eq.s32.totalorder %v38, 0
  %vm53 = vcmp.eq.s32.totalorder %v39, 0
  %vm54 = vcmp.eq.s32.totalorder %v40, 0
  %vm55 = vcmp.eq.s32.totalorder %v41, 0
  %vm56 = vcmp.eq.s32.totalorder %v42, 0
  %vm57 = vcmp.eq.s32.totalorder %v37, 17
  %vm58 = vcmp.eq.s32.totalorder %v38, 17
  %vm59 = vcmp.eq.s32.totalorder %v39, 17
  %vm60 = vcmp.eq.s32.totalorder %v40, 17
  %vm61 = vcmp.eq.s32.totalorder %v41, 17
  %vm62 = vcmp.eq.s32.totalorder %v42, 17
  %vm63 = vcmp.eq.s32.totalorder %v45, 0
  %vm64 = vcmp.eq.s32.totalorder %v46, 0
  %vm65 = vcmp.eq.s32.totalorder %v47, 0
  %vm66 = vcmp.eq.s32.totalorder %v48, 0
  %vm67 = vcmp.eq.s32.totalorder %v49, 0
  %vm68 = vcmp.eq.s32.totalorder %v50, 0
  %vm69 = vcmp.eq.s32.totalorder %v45, 17
  %vm70 = vcmp.eq.s32.totalorder %v46, 17
  %vm71 = vcmp.eq.s32.totalorder %v47, 17
  %vm72 = vcmp.eq.s32.totalorder %v48, 17
  %vm73 = vcmp.eq.s32.totalorder %v49, 17
  %vm74 = vcmp.eq.s32.totalorder %v50, 17
  %v75 = vld [vmem:[%s1] sm:$0xff]
  %v76 = vld [vmem:[%s1 + $0x8] sm:$0xff]
  %v77 = vld [vmem:[%s1 + $0x10] sm:$0xff]
  %v78 = vld [vmem:[%s1 + $0x18] sm:$0xff]
  %v79 = vld [vmem:[%s1 + $0x20] sm:$0xff]
  %v80 = vld [vmem:[%s1 + $0x28] sm:$0xff]
  %81 = vrot.lane.b32.xlu0 %v75, 92
  %v82 = vpop.permute.xlu0 %81
  %83 = vrot.lane.b32.xlu0 %v76, 92
  %v84 = vpop.permute.xlu0 %83
  %85 = vrot.lane.b32.xlu0 %v77, 92
  %v86 = vpop.permute.xlu0 %85
  %87 = vrot.lane.b32.xlu0 %v78, 92
  %v88 = vpop.permute.xlu0 %87
  %89 = vrot.lane.b32.xlu0 %v79, 92
  %v90 = vpop.permute.xlu0 %89
  %91 = vrot.lane.b32.xlu0 %v80, 92
  %v92 = vpop.permute.xlu0 %91
  %v93 = vlaneseq
  %v94 = vand.u32 %v93, 127
  %vm95 = vcmp.lt.s32.totalorder %v94, 92
  %v96 = vsel %vm95, %v90, %v92
  %v97 = vsel %vm95, %v88, %v90
  %v98 = vsel %vm95, %v86, %v88
  %v99 = vsel %vm95, %v84, %v86
  %v100 = vsel %vm95, %v82, %v84
  %v101 = vsel %vm95, %v92, %v82
  %102 = vrot.lane.b32.xlu0 %v75, 36
  %v103 = vpop.permute.xlu0 %102
  %104 = vrot.lane.b32.xlu0 %v76, 36
  %v105 = vpop.permute.xlu0 %104
  %106 = vrot.lane.b32.xlu0 %v77, 36
  %v107 = vpop.permute.xlu0 %106
  %108 = vrot.lane.b32.xlu0 %v78, 36
  %v109 = vpop.permute.xlu0 %108
  %110 = vrot.lane.b32.xlu0 %v79, 36
  %v111 = vpop.permute.xlu0 %110
  %112 = vrot.lane.b32.xlu0 %v80, 36
  %v113 = vpop.permute.xlu0 %112
  %vm114 = vcmp.lt.s32.totalorder %v94, 36
  %v115 = vsel %vm114, %v111, %v113
  %v116 = vsel %vm114, %v109, %v111
  %v117 = vsel %vm114, %v107, %v109
  %v118 = vsel %vm114, %v105, %v107
  %v119 = vsel %vm114, %v103, %v105
  %v120 = vsel %vm114, %v113, %v103
  %v121 = vsel %vm57, %v120, %v75
  %v122 = vsel %vm58, %v119, %v76
  %v123 = vsel %vm59, %v118, %v77
  %v124 = vsel %vm60, %v117, %v78
  %v125 = vsel %vm61, %v116, %v79
  %v126 = vsel %vm62, %v115, %v80
  %v127 = vsel %vm51, %v100, %v121
  %v128 = vsel %vm52, %v99, %v122
  %v129 = vsel %vm53, %v98, %v123
  %v130 = vsel %vm54, %v97, %v124
  %v131 = vsel %vm55, %v96, %v125
  %v132 = vsel %vm56, %v101, %v126
  %133 = vrot.lane.b32.xlu0 %v127, 126
  %v134 = vpop.permute.xlu0 %133
  %135 = vrot.lane.b32.xlu0 %v128, 126
  %v136 = vpop.permute.xlu0 %135
  %137 = vrot.lane.b32.xlu0 %v129, 126
  %v138 = vpop.permute.xlu0 %137
  %139 = vrot.lane.b32.xlu0 %v130, 126
  %v140 = vpop.permute.xlu0 %139
  %141 = vrot.lane.b32.xlu0 %v131, 126
  %v142 = vpop.permute.xlu0 %141
  %143 = vrot.lane.b32.xlu0 %v132, 126
  %v144 = vpop.permute.xlu0 %143
  %vm145 = vcmp.lt.s32.totalorder %v94, 126
  %v146 = vsel %vm145, %v142, %v144
  %v147 = vsel %vm145, %v140, %v142
  %v148 = vsel %vm145, %v138, %v140
  %v149 = vsel %vm145, %v136, %v138
  %v150 = vsel %vm145, %v134, %v136
  %v151 = vsel %vm145, %v144, %v134
  %152 = vrot.lane.b32.xlu0 %v127, 2
  %v153 = vpop.permute.xlu0 %152
  %154 = vrot.lane.b32.xlu0 %v128, 2
  %v155 = vpop.permute.xlu0 %154
  %156 = vrot.lane.b32.xlu0 %v129, 2
  %v157 = vpop.permute.xlu0 %156
  %158 = vrot.lane.b32.xlu0 %v130, 2
  %v159 = vpop.permute.xlu0 %158
  %160 = vrot.lane.b32.xlu0 %v131, 2
  %v161 = vpop.permute.xlu0 %160
  %162 = vrot.lane.b32.xlu0 %v132, 2
  %v163 = vpop.permute.xlu0 %162
  %vm164 = vcmp.lt.s32.totalorder %v94, 2
  %v165 = vsel %vm164, %v161, %v163
  %v166 = vsel %vm164, %v159, %v161
  %v167 = vsel %vm164, %v157, %v159
  %v168 = vsel %vm164, %v155, %v157
  %v169 = vsel %vm164, %v153, %v155
  %v170 = vsel %vm164, %v163, %v153
  %v171 = vsel %vm69, %v170, %v127
  %v172 = vsel %vm70, %v169, %v128
  %v173 = vsel %vm71, %v168, %v129
  %v174 = vsel %vm72, %v167, %v130
  %v175 = vsel %vm73, %v166, %v131
  %v176 = vsel %vm74, %v165, %v132
  %v177 = vsel %vm63, %v150, %v171
  %v178 = vsel %vm64, %v149, %v172
  %v179 = vsel %vm65, %v148, %v173
  %v180 = vsel %vm66, %v147, %v174
  %v181 = vsel %vm67, %v146, %v175
  %v182 = vsel %vm68, %v151, %v176
  %183 = vrot.lane.b32.xlu0 %v177, 18
  %v184 = vpop.permute.xlu0 %183
  %185 = vrot.lane.b32.xlu0 %v178, 18
  %v186 = vpop.permute.xlu0 %185
  %187 = vrot.lane.b32.xlu0 %v179, 18
  %v188 = vpop.permute.xlu0 %187
  %189 = vrot.lane.b32.xlu0 %v180, 18
  %v190 = vpop.permute.xlu0 %189
  %191 = vrot.lane.b32.xlu0 %v181, 18
  %v192 = vpop.permute.xlu0 %191
  %193 = vrot.lane.b32.xlu0 %v182, 18
  %v194 = vpop.permute.xlu0 %193
  %vm195 = vcmp.lt.s32.totalorder %v94, 18
  %v196 = vsel %vm195, %v192, %v194
  %v197 = vsel %vm195, %v190, %v192
  %v198 = vsel %vm195, %v188, %v190
  %v199 = vsel %vm195, %v186, %v188
  %v200 = vsel %vm195, %v184, %v186
  %v201 = vsel %vm195, %v194, %v184
  %202 = vrot.lane.b32.xlu0 %v201, 1
  %v203 = vpop.permute.xlu0 %202
  %204 = vrot.lane.b32.xlu0 %v200, 1
  %v205 = vpop.permute.xlu0 %204
  %206 = vrot.lane.b32.xlu0 %v199, 1
  %v207 = vpop.permute.xlu0 %206
  %208 = vrot.lane.b32.xlu0 %v198, 1
  %v209 = vpop.permute.xlu0 %208
  %210 = vrot.lane.b32.xlu0 %v197, 1
  %v211 = vpop.permute.xlu0 %210
  %212 = vrot.lane.b32.xlu0 %v196, 1
  %v213 = vpop.permute.xlu0 %212
  %vm214 = vcmp.lt.s32.totalorder %v94, 1
  %v215 = vsel %vm214, %v211, %v213
  %v216 = vsel %vm214, %v209, %v211
  %v217 = vsel %vm214, %v207, %v209
  %v218 = vsel %vm214, %v205, %v207
  %v219 = vsel %vm214, %v203, %v205
  %v220 = vsel %vm214, %v213, %v203
  %221 = vrot.lane.b32.xlu0 %v201, 127
  %v222 = vpop.permute.xlu0 %221
  %223 = vrot.lane.b32.xlu0 %v200, 127
  %v224 = vpop.permute.xlu0 %223
  %225 = vrot.lane.b32.xlu0 %v199, 127
  %v226 = vpop.permute.xlu0 %225
  %227 = vrot.lane.b32.xlu0 %v198, 127
  %v228 = vpop.permute.xlu0 %227
  %229 = vrot.lane.b32.xlu0 %v197, 127
  %v230 = vpop.permute.xlu0 %229
  %231 = vrot.lane.b32.xlu0 %v196, 127
  %v232 = vpop.permute.xlu0 %231
  %vm233 = vcmp.lt.s32.totalorder %v94, 127
  %v234 = vsel %vm233, %v230, %v232
  %v235 = vsel %vm233, %v228, %v230
  %v236 = vsel %vm233, %v226, %v228
  %v237 = vsel %vm233, %v224, %v226
  %v238 = vsel %vm233, %v222, %v224
  %v239 = vsel %vm233, %v232, %v222
  %240 = vrot.lane.b32.xlu0 %v177, 1
  %v241 = vpop.permute.xlu0 %240
  %242 = vrot.lane.b32.xlu0 %v178, 1
  %v243 = vpop.permute.xlu0 %242
  %244 = vrot.lane.b32.xlu0 %v179, 1
  %v245 = vpop.permute.xlu0 %244
  %246 = vrot.lane.b32.xlu0 %v180, 1
  %v247 = vpop.permute.xlu0 %246
  %248 = vrot.lane.b32.xlu0 %v181, 1
  %v249 = vpop.permute.xlu0 %248
  %250 = vrot.lane.b32.xlu0 %v182, 1
  %v251 = vpop.permute.xlu0 %250
  %v252 = vsel %vm214, %v249, %v251
  %v253 = vsel %vm214, %v247, %v249
  %v254 = vsel %vm214, %v245, %v247
  %v255 = vsel %vm214, %v243, %v245
  %v256 = vsel %vm214, %v241, %v243
  %v257 = vsel %vm214, %v251, %v241
  %258 = vrot.lane.b32.xlu0 %v177, 127
  %v259 = vpop.permute.xlu0 %258
  %260 = vrot.lane.b32.xlu0 %v178, 127
  %v261 = vpop.permute.xlu0 %260
  %262 = vrot.lane.b32.xlu0 %v179, 127
  %v263 = vpop.permute.xlu0 %262
  %264 = vrot.lane.b32.xlu0 %v180, 127
  %v265 = vpop.permute.xlu0 %264
  %266 = vrot.lane.b32.xlu0 %v181, 127
  %v267 = vpop.permute.xlu0 %266
  %268 = vrot.lane.b32.xlu0 %v182, 127
  %v269 = vpop.permute.xlu0 %268
  %v270 = vsel %vm233, %v267, %v269
  %v271 = vsel %vm233, %v265, %v267
  %v272 = vsel %vm233, %v263, %v265
  %v273 = vsel %vm233, %v261, %v263
  %v274 = vsel %vm233, %v259, %v261
  %v275 = vsel %vm233, %v269, %v259
  %276 = vrot.lane.b32.xlu0 %v177, 110
  %v277 = vpop.permute.xlu0 %276
  %278 = vrot.lane.b32.xlu0 %v178, 110
  %v279 = vpop.permute.xlu0 %278
  %280 = vrot.lane.b32.xlu0 %v179, 110
  %v281 = vpop.permute.xlu0 %280
  %282 = vrot.lane.b32.xlu0 %v180, 110
  %v283 = vpop.permute.xlu0 %282
  %284 = vrot.lane.b32.xlu0 %v181, 110
  %v285 = vpop.permute.xlu0 %284
  %286 = vrot.lane.b32.xlu0 %v182, 110
  %v287 = vpop.permute.xlu0 %286
  %vm288 = vcmp.lt.s32.totalorder %v94, 110
  %v289 = vsel %vm288, %v285, %v287
  %v290 = vsel %vm288, %v283, %v285
  %v291 = vsel %vm288, %v281, %v283
  %v292 = vsel %vm288, %v279, %v281
  %v293 = vsel %vm288, %v277, %v279
  %v294 = vsel %vm288, %v287, %v277
  %295 = vrot.lane.b32.xlu0 %v293, 1
  %v296 = vpop.permute.xlu0 %295
  %297 = vrot.lane.b32.xlu0 %v292, 1
  %v298 = vpop.permute.xlu0 %297
  %299 = vrot.lane.b32.xlu0 %v291, 1
  %v300 = vpop.permute.xlu0 %299
  %301 = vrot.lane.b32.xlu0 %v290, 1
  %v302 = vpop.permute.xlu0 %301
  %303 = vrot.lane.b32.xlu0 %v289, 1
  %v304 = vpop.permute.xlu0 %303
  %305 = vrot.lane.b32.xlu0 %v294, 1
  %v306 = vpop.permute.xlu0 %305
  %v307 = vsel %vm214, %v304, %v306
  %v308 = vsel %vm214, %v302, %v304
  %v309 = vsel %vm214, %v300, %v302
  %v310 = vsel %vm214, %v298, %v300
  %v311 = vsel %vm214, %v296, %v298
  %v312 = vsel %vm214, %v306, %v296
  %313 = vrot.lane.b32.xlu0 %v293, 127
  %v314 = vpop.permute.xlu0 %313
  %315 = vrot.lane.b32.xlu0 %v292, 127
  %v316 = vpop.permute.xlu0 %315
  %317 = vrot.lane.b32.xlu0 %v291, 127
  %v318 = vpop.permute.xlu0 %317
  %319 = vrot.lane.b32.xlu0 %v290, 127
  %v320 = vpop.permute.xlu0 %319
  %321 = vrot.lane.b32.xlu0 %v289, 127
  %v322 = vpop.permute.xlu0 %321
  %323 = vrot.lane.b32.xlu0 %v294, 127
  %v324 = vpop.permute.xlu0 %323
  %v325 = vsel %vm233, %v322, %v324
  %v326 = vsel %vm233, %v320, %v322
  %v327 = vsel %vm233, %v318, %v320
  %v328 = vsel %vm233, %v316, %v318
  %v329 = vsel %vm233, %v314, %v316
  %v330 = vsel %vm233, %v324, %v314
  %v331 = vpack.c.bf16 %v201, %v220
  %v332 = vpack.c.bf16 %v200, %v219
  %v333 = vpack.c.bf16 %v199, %v218
  %v334 = vpack.c.bf16 %v198, %v217
  %v335 = vpack.c.bf16 %v197, %v216
  %v336 = vpack.c.bf16 %v196, %v215
  %v337 = vpack.c.bf16 %v257, %v238
  %v338 = vpack.c.bf16 %v256, %v237
  %v339 = vpack.c.bf16 %v255, %v236
  %v340 = vpack.c.bf16 %v254, %v235
  %v341 = vpack.c.bf16 %v253, %v234
  %v342 = vpack.c.bf16 %v252, %v239
  %v343 = vpack.c.bf16 %v274, %v177
  %v344 = vpack.c.bf16 %v273, %v178
  %v345 = vpack.c.bf16 %v272, %v179
  %v346 = vpack.c.bf16 %v271, %v180
  %v347 = vpack.c.bf16 %v270, %v181
  %v348 = vpack.c.bf16 %v275, %v182
  %v349 = vpack.c.bf16 %v293, %v312
  %v350 = vpack.c.bf16 %v292, %v311
  %v351 = vpack.c.bf16 %v291, %v310
  %v352 = vpack.c.bf16 %v290, %v309
  %v353 = vpack.c.bf16 %v289, %v308
  %v354 = vpack.c.bf16 %v294, %v307
  %v355 = vpack.c.bf16 %v329, %v329
  %v356 = vpack.c.bf16 %v328, %v328
  %v357 = vpack.c.bf16 %v327, %v327
  %v358 = vpack.c.bf16 %v326, %v326
  %v359 = vpack.c.bf16 %v325, %v325
  %v360 = vpack.c.bf16 %v330, %v330
  %v361 = vld [vmem:[%s2] sm:$0xf]
  %v362 = vld [vmem:[%s3] sm:$0xff]
  %364 = vset.pattern.permute.xlu0 0
  %365 = vperm.xlu0 %364, %v362
  %v366 = vpop.permute.xlu0 %365
  %vm368 = vcmask 588800
  %v370 = vsel %vm368, %v361, 0
  %vm372 = vcmask 1043456
  %v374 = vsel %vm372, %v355, 0
  %v377 = vsel %vm372, %v356, 0
  %v380 = vsel %vm372, %v357, 0
  %v383 = vsel %vm372, %v358, 0
  %v386 = vsel %vm372, %v359, 0
  %v389 = vsel %vm372, %v360, 0
  %391 = vmatpush.bf16.msra.mxu0 0
  %392 = vmatpush.bf16.msra.mxu0 0
  %393 = vmatpush.bf16.msra.mxu0 0
  %394 = vmatpush.bf16.msra.mxu0 %v374
  %395 = vmatpush.bf16.msra.mxu0 %v349
  %396 = vmatpush.bf16.msra.mxu0 %v343
  %397 = vmatpush.bf16.msra.mxu0 %v337
  %398 = vmatpush.bf16.msra.mxu0 %v331
  %399 = vmatmul.bf16.gmra.mxu0 %v370
  %v400 = vpop.f32.mrf.mxu0
  %v401 = vadd.f32 %v366, %v400
  %v402 = vpop.f32.mrf.mxu0
  %403 = vdwg.mxu0
  %404 = vmatpush.bf16.msra.mxu0 0
  %405 = vmatpush.bf16.msra.mxu0 0
  %406 = vmatpush.bf16.msra.mxu0 0
  %407 = vmatpush.bf16.msra.mxu0 %v377
  %408 = vmatpush.bf16.msra.mxu0 %v350
  %409 = vmatpush.bf16.msra.mxu0 %v344
  %410 = vmatpush.bf16.msra.mxu0 %v338
  %411 = vmatpush.bf16.msra.mxu0 %v332
  %412 = vmatmul.bf16.gmra.mxu0 %v370
  %v413 = vpop.f32.mrf.mxu0
  %v414 = vadd.f32 %v366, %v413
  %v415 = vpop.f32.mrf.mxu0
  %416 = vdwg.mxu0
  %417 = vmatpush.bf16.msra.mxu0 0
  %418 = vmatpush.bf16.msra.mxu0 0
  %419 = vmatpush.bf16.msra.mxu0 0
  %420 = vmatpush.bf16.msra.mxu0 %v380
  %421 = vmatpush.bf16.msra.mxu0 %v351
  %422 = vmatpush.bf16.msra.mxu0 %v345
  %423 = vmatpush.bf16.msra.mxu0 %v339
  %424 = vmatpush.bf16.msra.mxu0 %v333
  %425 = vmatmul.bf16.gmra.mxu0 %v370
  %v426 = vpop.f32.mrf.mxu0
  %v427 = vadd.f32 %v366, %v426
  %v428 = vpop.f32.mrf.mxu0
  %429 = vdwg.mxu0
  %430 = vmatpush.bf16.msra.mxu0 0
  %431 = vmatpush.bf16.msra.mxu0 0
  %432 = vmatpush.bf16.msra.mxu0 0
  %433 = vmatpush.bf16.msra.mxu0 %v383
  %434 = vmatpush.bf16.msra.mxu0 %v352
  %435 = vmatpush.bf16.msra.mxu0 %v346
  %436 = vmatpush.bf16.msra.mxu0 %v340
  %437 = vmatpush.bf16.msra.mxu0 %v334
  %438 = vmatmul.bf16.gmra.mxu0 %v370
  %v439 = vpop.f32.mrf.mxu0
  %v440 = vadd.f32 %v366, %v439
  %v441 = vpop.f32.mrf.mxu0
  %442 = vdwg.mxu0
  %443 = vmatpush.bf16.msra.mxu0 0
  %444 = vmatpush.bf16.msra.mxu0 0
  %445 = vmatpush.bf16.msra.mxu0 0
  %446 = vmatpush.bf16.msra.mxu0 %v386
  %447 = vmatpush.bf16.msra.mxu0 %v353
  %448 = vmatpush.bf16.msra.mxu0 %v347
  %449 = vmatpush.bf16.msra.mxu0 %v341
  %450 = vmatpush.bf16.msra.mxu0 %v335
  %451 = vmatmul.bf16.gmra.mxu0 %v370
  %v452 = vpop.f32.mrf.mxu0
  %v453 = vadd.f32 %v366, %v452
  %v454 = vpop.f32.mrf.mxu0
  %455 = vdwg.mxu0
  %456 = vmatpush.bf16.msra.mxu0 0
  %457 = vmatpush.bf16.msra.mxu0 0
  %458 = vmatpush.bf16.msra.mxu0 0
  %459 = vmatpush.bf16.msra.mxu0 %v389
  %460 = vmatpush.bf16.msra.mxu0 %v354
  %461 = vmatpush.bf16.msra.mxu0 %v348
  %462 = vmatpush.bf16.msra.mxu0 %v342
  %463 = vmatpush.bf16.msra.mxu0 %v336
  %464 = vmatmul.bf16.gmra.mxu0 %v370
  %v465 = vpop.f32.mrf.mxu0
  %v466 = vadd.f32 %v366, %v465
  %v467 = vpop.f32.mrf.mxu0
  %468 = vdwg.mxu0
  %v469 = vmul.f32 %v401, 0.5
  %v470 = vmul.f32 %v414, 0.5
  %v471 = vmul.f32 %v427, 0.5
  %v472 = vmul.f32 %v440, 0.5
  %v473 = vmul.f32 %v453, 0.5
  %v474 = vmul.f32 %v466, 0.5
  %v475 = vmul.f32 %v401, %v401
  %v476 = vmul.f32 %v414, %v414
  %v477 = vmul.f32 %v427, %v427
  %v478 = vmul.f32 %v440, %v440
  %v479 = vmul.f32 %v453, %v453
  %v480 = vmul.f32 %v466, %v466
  %v481 = vadd.f32 %v475, 1.0
  %v482 = vadd.f32 %v476, 1.0
  %v483 = vadd.f32 %v477, 1.0
  %v484 = vadd.f32 %v478, 1.0
  %v485 = vadd.f32 %v479, 1.0
  %v486 = vadd.f32 %v480, 1.0
  %v487 = vrsqrt.pop %v481
  %v488 = vmul.f32 %v487, %v481
  %v489 = vmul.f32 %v488, %v487
  %v490 = vmul.f32 0.5, %v489
  %v491 = vsub.f32 1.5, %v490
  %v492 = vmul.f32 %v487, %v491
  %v493 = vmul.f32 %v481, %v492
  %vm494 = vcmp.eq.f32.partialorder %v481, inf
  %v495 = vsel %vm494, %v481, %v493
  %vm496 = vcmp.eq.f32.partialorder %v481, 0.0
  %v497 = vand.u32 %v481, 2147483648
  %v498 = vsel %vm496, %v497, %v495
  %v499 = vrsqrt.pop %v482
  %v500 = vmul.f32 %v499, %v482
  %v501 = vmul.f32 %v500, %v499
  %v502 = vmul.f32 0.5, %v501
  %v503 = vsub.f32 1.5, %v502
  %v504 = vmul.f32 %v499, %v503
  %v505 = vmul.f32 %v482, %v504
  %vm506 = vcmp.eq.f32.partialorder %v482, inf
  %v507 = vsel %vm506, %v482, %v505
  %vm508 = vcmp.eq.f32.partialorder %v482, 0.0
  %v509 = vand.u32 %v482, 2147483648
  %v510 = vsel %vm508, %v509, %v507
  %v511 = vrsqrt.pop %v483
  %v512 = vmul.f32 %v511, %v483
  %v513 = vmul.f32 %v512, %v511
  %v514 = vmul.f32 0.5, %v513
  %v515 = vsub.f32 1.5, %v514
  %v516 = vmul.f32 %v511, %v515
  %v517 = vmul.f32 %v483, %v516
  %vm518 = vcmp.eq.f32.partialorder %v483, inf
  %v519 = vsel %vm518, %v483, %v517
  %vm520 = vcmp.eq.f32.partialorder %v483, 0.0
  %v521 = vand.u32 %v483, 2147483648
  %v522 = vsel %vm520, %v521, %v519
  %v523 = vrsqrt.pop %v484
  %v524 = vmul.f32 %v523, %v484
  %v525 = vmul.f32 %v524, %v523
  %v526 = vmul.f32 0.5, %v525
  %v527 = vsub.f32 1.5, %v526
  %v528 = vmul.f32 %v523, %v527
  %v529 = vmul.f32 %v484, %v528
  %vm530 = vcmp.eq.f32.partialorder %v484, inf
  %v531 = vsel %vm530, %v484, %v529
  %vm532 = vcmp.eq.f32.partialorder %v484, 0.0
  %v533 = vand.u32 %v484, 2147483648
  %v534 = vsel %vm532, %v533, %v531
  %v535 = vrsqrt.pop %v485
  %v536 = vmul.f32 %v535, %v485
  %v537 = vmul.f32 %v536, %v535
  %v538 = vmul.f32 0.5, %v537
  %v539 = vsub.f32 1.5, %v538
  %v540 = vmul.f32 %v535, %v539
  %v541 = vmul.f32 %v485, %v540
  %vm542 = vcmp.eq.f32.partialorder %v485, inf
  %v543 = vsel %vm542, %v485, %v541
  %vm544 = vcmp.eq.f32.partialorder %v485, 0.0
  %v545 = vand.u32 %v485, 2147483648
  %v546 = vsel %vm544, %v545, %v543
  %v547 = vrsqrt.pop %v486
  %v548 = vmul.f32 %v547, %v486
  %v549 = vmul.f32 %v548, %v547
  %v550 = vmul.f32 0.5, %v549
  %v551 = vsub.f32 1.5, %v550
  %v552 = vmul.f32 %v547, %v551
  %v553 = vmul.f32 %v486, %v552
  %vm554 = vcmp.eq.f32.partialorder %v486, inf
  %v555 = vsel %vm554, %v486, %v553
  %vm556 = vcmp.eq.f32.partialorder %v486, 0.0
  %v557 = vand.u32 %v486, 2147483648
  %v558 = vsel %vm556, %v557, %v555
  %v559 = vmul.f32 %v498, 0.5
  %v560 = vmul.f32 %v510, 0.5
  %v561 = vmul.f32 %v522, 0.5
  %v562 = vmul.f32 %v534, 0.5
  %v563 = vmul.f32 %v546, 0.5
  %v564 = vmul.f32 %v558, 0.5
  %v565 = vadd.f32 %v469, %v559
  %v566 = vadd.f32 %v470, %v560
  %v567 = vadd.f32 %v471, %v561
  %v568 = vadd.f32 %v472, %v562
  %v569 = vadd.f32 %v473, %v563
  %v570 = vadd.f32 %v474, %v564
  %v571 = vsub.f32 %v565, 0.5
  %v572 = vsub.f32 %v566, 0.5
  %v573 = vsub.f32 %v567, 0.5
  %v574 = vsub.f32 %v568, 0.5
  %v575 = vsub.f32 %v569, 0.5
  %v576 = vsub.f32 %v570, 0.5
  %577 = vrot.lane.b32.xlu0 %v571, 92
  %v578 = vpop.permute.xlu0 %577
  %579 = vrot.lane.b32.xlu0 %v572, 92
  %v580 = vpop.permute.xlu0 %579
  %581 = vrot.lane.b32.xlu0 %v573, 92
  %v582 = vpop.permute.xlu0 %581
  %583 = vrot.lane.b32.xlu0 %v574, 92
  %v584 = vpop.permute.xlu0 %583
  %585 = vrot.lane.b32.xlu0 %v575, 92
  %v586 = vpop.permute.xlu0 %585
  %587 = vrot.lane.b32.xlu0 %v576, 92
  %v588 = vpop.permute.xlu0 %587
  %v589 = vsel %vm95, %v586, %v588
  %v590 = vsel %vm95, %v584, %v586
  %v591 = vsel %vm95, %v582, %v584
  %v592 = vsel %vm95, %v580, %v582
  %v593 = vsel %vm95, %v578, %v580
  %v594 = vsel %vm95, %v588, %v578
  %595 = vrot.lane.b32.xlu0 %v571, 36
  %v596 = vpop.permute.xlu0 %595
  %597 = vrot.lane.b32.xlu0 %v572, 36
  %v598 = vpop.permute.xlu0 %597
  %599 = vrot.lane.b32.xlu0 %v573, 36
  %v600 = vpop.permute.xlu0 %599
  %601 = vrot.lane.b32.xlu0 %v574, 36
  %v602 = vpop.permute.xlu0 %601
  %603 = vrot.lane.b32.xlu0 %v575, 36
  %v604 = vpop.permute.xlu0 %603
  %605 = vrot.lane.b32.xlu0 %v576, 36
  %v606 = vpop.permute.xlu0 %605
  %v607 = vsel %vm114, %v604, %v606
  %v608 = vsel %vm114, %v602, %v604
  %v609 = vsel %vm114, %v600, %v602
  %v610 = vsel %vm114, %v598, %v600
  %v611 = vsel %vm114, %v596, %v598
  %v612 = vsel %vm114, %v606, %v596
  %v613 = vsel %vm57, %v612, %v571
  %v614 = vsel %vm58, %v611, %v572
  %v615 = vsel %vm59, %v610, %v573
  %v616 = vsel %vm60, %v609, %v574
  %v617 = vsel %vm61, %v608, %v575
  %v618 = vsel %vm62, %v607, %v576
  %v619 = vsel %vm51, %v593, %v613
  %v620 = vsel %vm52, %v592, %v614
  %v621 = vsel %vm53, %v591, %v615
  %v622 = vsel %vm54, %v590, %v616
  %v623 = vsel %vm55, %v589, %v617
  %v624 = vsel %vm56, %v594, %v618
  %625 = vrot.lane.b32.xlu0 %v619, 126
  %v626 = vpop.permute.xlu0 %625
  %627 = vrot.lane.b32.xlu0 %v620, 126
  %v628 = vpop.permute.xlu0 %627
  %629 = vrot.lane.b32.xlu0 %v621, 126
  %v630 = vpop.permute.xlu0 %629
  %631 = vrot.lane.b32.xlu0 %v622, 126
  %v632 = vpop.permute.xlu0 %631
  %633 = vrot.lane.b32.xlu0 %v623, 126
  %v634 = vpop.permute.xlu0 %633
  %635 = vrot.lane.b32.xlu0 %v624, 126
  %v636 = vpop.permute.xlu0 %635
  %v637 = vsel %vm145, %v634, %v636
  %v638 = vsel %vm145, %v632, %v634
  %v639 = vsel %vm145, %v630, %v632
  %v640 = vsel %vm145, %v628, %v630
  %v641 = vsel %vm145, %v626, %v628
  %v642 = vsel %vm145, %v636, %v626
  %643 = vrot.lane.b32.xlu0 %v619, 2
  %v644 = vpop.permute.xlu0 %643
  %645 = vrot.lane.b32.xlu0 %v620, 2
  %v646 = vpop.permute.xlu0 %645
  %647 = vrot.lane.b32.xlu0 %v621, 2
  %v648 = vpop.permute.xlu0 %647
  %649 = vrot.lane.b32.xlu0 %v622, 2
  %v650 = vpop.permute.xlu0 %649
  %651 = vrot.lane.b32.xlu0 %v623, 2
  %v652 = vpop.permute.xlu0 %651
  %653 = vrot.lane.b32.xlu0 %v624, 2
  %v654 = vpop.permute.xlu0 %653
  %v655 = vsel %vm164, %v652, %v654
  %v656 = vsel %vm164, %v650, %v652
  %v657 = vsel %vm164, %v648, %v650
  %v658 = vsel %vm164, %v646, %v648
  %v659 = vsel %vm164, %v644, %v646
  %v660 = vsel %vm164, %v654, %v644
  %v661 = vsel %vm69, %v660, %v619
  %v662 = vsel %vm70, %v659, %v620
  %v663 = vsel %vm71, %v658, %v621
  %v664 = vsel %vm72, %v657, %v622
  %v665 = vsel %vm73, %v656, %v623
  %v666 = vsel %vm74, %v655, %v624
  %v667 = vsel %vm63, %v641, %v661
  %v668 = vsel %vm64, %v640, %v662
  %v669 = vsel %vm65, %v639, %v663
  %v670 = vsel %vm66, %v638, %v664
  %v671 = vsel %vm67, %v637, %v665
  %v672 = vsel %vm68, %v642, %v666
  %673 = vrot.lane.b32.xlu0 %v667, 18
  %v674 = vpop.permute.xlu0 %673
  %675 = vrot.lane.b32.xlu0 %v668, 18
  %v676 = vpop.permute.xlu0 %675
  %677 = vrot.lane.b32.xlu0 %v669, 18
  %v678 = vpop.permute.xlu0 %677
  %679 = vrot.lane.b32.xlu0 %v670, 18
  %v680 = vpop.permute.xlu0 %679
  %681 = vrot.lane.b32.xlu0 %v671, 18
  %v682 = vpop.permute.xlu0 %681
  %683 = vrot.lane.b32.xlu0 %v672, 18
  %v684 = vpop.permute.xlu0 %683
  %v685 = vsel %vm195, %v682, %v684
  %v686 = vsel %vm195, %v680, %v682
  %v687 = vsel %vm195, %v678, %v680
  %v688 = vsel %vm195, %v676, %v678
  %v689 = vsel %vm195, %v674, %v676
  %v690 = vsel %vm195, %v684, %v674
  %691 = vrot.lane.b32.xlu0 %v690, 1
  %v692 = vpop.permute.xlu0 %691
  %693 = vrot.lane.b32.xlu0 %v689, 1
  %v694 = vpop.permute.xlu0 %693
  %695 = vrot.lane.b32.xlu0 %v688, 1
  %v696 = vpop.permute.xlu0 %695
  %697 = vrot.lane.b32.xlu0 %v687, 1
  %v698 = vpop.permute.xlu0 %697
  %699 = vrot.lane.b32.xlu0 %v686, 1
  %v700 = vpop.permute.xlu0 %699
  %701 = vrot.lane.b32.xlu0 %v685, 1
  %v702 = vpop.permute.xlu0 %701
  %v703 = vsel %vm214, %v700, %v702
  %v704 = vsel %vm214, %v698, %v700
  %v705 = vsel %vm214, %v696, %v698
  %v706 = vsel %vm214, %v694, %v696
  %v707 = vsel %vm214, %v692, %v694
  %v708 = vsel %vm214, %v702, %v692
  %709 = vrot.lane.b32.xlu0 %v690, 127
  %v710 = vpop.permute.xlu0 %709
  %711 = vrot.lane.b32.xlu0 %v689, 127
  %v712 = vpop.permute.xlu0 %711
  %713 = vrot.lane.b32.xlu0 %v688, 127
  %v714 = vpop.permute.xlu0 %713
  %715 = vrot.lane.b32.xlu0 %v687, 127
  %v716 = vpop.permute.xlu0 %715
  %717 = vrot.lane.b32.xlu0 %v686, 127
  %v718 = vpop.permute.xlu0 %717
  %719 = vrot.lane.b32.xlu0 %v685, 127
  %v720 = vpop.permute.xlu0 %719
  %v721 = vsel %vm233, %v718, %v720
  %v722 = vsel %vm233, %v716, %v718
  %v723 = vsel %vm233, %v714, %v716
  %v724 = vsel %vm233, %v712, %v714
  %v725 = vsel %vm233, %v710, %v712
  %v726 = vsel %vm233, %v720, %v710
  %727 = vrot.lane.b32.xlu0 %v667, 1
  %v728 = vpop.permute.xlu0 %727
  %729 = vrot.lane.b32.xlu0 %v668, 1
  %v730 = vpop.permute.xlu0 %729
  %731 = vrot.lane.b32.xlu0 %v669, 1
  %v732 = vpop.permute.xlu0 %731
  %733 = vrot.lane.b32.xlu0 %v670, 1
  %v734 = vpop.permute.xlu0 %733
  %735 = vrot.lane.b32.xlu0 %v671, 1
  %v736 = vpop.permute.xlu0 %735
  %737 = vrot.lane.b32.xlu0 %v672, 1
  %v738 = vpop.permute.xlu0 %737
  %v739 = vsel %vm214, %v736, %v738
  %v740 = vsel %vm214, %v734, %v736
  %v741 = vsel %vm214, %v732, %v734
  %v742 = vsel %vm214, %v730, %v732
  %v743 = vsel %vm214, %v728, %v730
  %v744 = vsel %vm214, %v738, %v728
  %745 = vrot.lane.b32.xlu0 %v667, 127
  %v746 = vpop.permute.xlu0 %745
  %747 = vrot.lane.b32.xlu0 %v668, 127
  %v748 = vpop.permute.xlu0 %747
  %749 = vrot.lane.b32.xlu0 %v669, 127
  %v750 = vpop.permute.xlu0 %749
  %751 = vrot.lane.b32.xlu0 %v670, 127
  %v752 = vpop.permute.xlu0 %751
  %753 = vrot.lane.b32.xlu0 %v671, 127
  %v754 = vpop.permute.xlu0 %753
  %755 = vrot.lane.b32.xlu0 %v672, 127
  %v756 = vpop.permute.xlu0 %755
  %v757 = vsel %vm233, %v754, %v756
  %v758 = vsel %vm233, %v752, %v754
  %v759 = vsel %vm233, %v750, %v752
  %v760 = vsel %vm233, %v748, %v750
  %v761 = vsel %vm233, %v746, %v748
  %v762 = vsel %vm233, %v756, %v746
  %763 = vrot.lane.b32.xlu0 %v667, 110
  %v764 = vpop.permute.xlu0 %763
  %765 = vrot.lane.b32.xlu0 %v668, 110
  %v766 = vpop.permute.xlu0 %765
  %767 = vrot.lane.b32.xlu0 %v669, 110
  %v768 = vpop.permute.xlu0 %767
  %769 = vrot.lane.b32.xlu0 %v670, 110
  %v770 = vpop.permute.xlu0 %769
  %771 = vrot.lane.b32.xlu0 %v671, 110
  %v772 = vpop.permute.xlu0 %771
  %773 = vrot.lane.b32.xlu0 %v672, 110
  %v774 = vpop.permute.xlu0 %773
  %v775 = vsel %vm288, %v772, %v774
  %v776 = vsel %vm288, %v770, %v772
  %v777 = vsel %vm288, %v768, %v770
  %v778 = vsel %vm288, %v766, %v768
  %v779 = vsel %vm288, %v764, %v766
  %v780 = vsel %vm288, %v774, %v764
  %781 = vrot.lane.b32.xlu0 %v779, 1
  %v782 = vpop.permute.xlu0 %781
  %783 = vrot.lane.b32.xlu0 %v778, 1
  %v784 = vpop.permute.xlu0 %783
  %785 = vrot.lane.b32.xlu0 %v777, 1
  %v786 = vpop.permute.xlu0 %785
  %787 = vrot.lane.b32.xlu0 %v776, 1
  %v788 = vpop.permute.xlu0 %787
  %789 = vrot.lane.b32.xlu0 %v775, 1
  %v790 = vpop.permute.xlu0 %789
  %791 = vrot.lane.b32.xlu0 %v780, 1
  %v792 = vpop.permute.xlu0 %791
  %v793 = vsel %vm214, %v790, %v792
  %v794 = vsel %vm214, %v788, %v790
  %v795 = vsel %vm214, %v786, %v788
  %v796 = vsel %vm214, %v784, %v786
  %v797 = vsel %vm214, %v782, %v784
  %v798 = vsel %vm214, %v792, %v782
  %799 = vrot.lane.b32.xlu0 %v779, 127
  %v800 = vpop.permute.xlu0 %799
  %801 = vrot.lane.b32.xlu0 %v778, 127
  %v802 = vpop.permute.xlu0 %801
  %803 = vrot.lane.b32.xlu0 %v777, 127
  %v804 = vpop.permute.xlu0 %803
  %805 = vrot.lane.b32.xlu0 %v776, 127
  %v806 = vpop.permute.xlu0 %805
  %807 = vrot.lane.b32.xlu0 %v775, 127
  %v808 = vpop.permute.xlu0 %807
  %809 = vrot.lane.b32.xlu0 %v780, 127
  %v810 = vpop.permute.xlu0 %809
  %v811 = vsel %vm233, %v808, %v810
  %v812 = vsel %vm233, %v806, %v808
  %v813 = vsel %vm233, %v804, %v806
  %v814 = vsel %vm233, %v802, %v804
  %v815 = vsel %vm233, %v800, %v802
  %v816 = vsel %vm233, %v810, %v800
  %v817 = vpack.c.bf16 %v690, %v708
  %v818 = vpack.c.bf16 %v689, %v707
  %v819 = vpack.c.bf16 %v688, %v706
  %v820 = vpack.c.bf16 %v687, %v705
  %v821 = vpack.c.bf16 %v686, %v704
  %v822 = vpack.c.bf16 %v685, %v703
  %v823 = vpack.c.bf16 %v744, %v725
  %v824 = vpack.c.bf16 %v743, %v724
  %v825 = vpack.c.bf16 %v742, %v723
  %v826 = vpack.c.bf16 %v741, %v722
  %v827 = vpack.c.bf16 %v740, %v721
  %v828 = vpack.c.bf16 %v739, %v726
  %v829 = vpack.c.bf16 %v761, %v667
  %v830 = vpack.c.bf16 %v760, %v668
  %v831 = vpack.c.bf16 %v759, %v669
  %v832 = vpack.c.bf16 %v758, %v670
  %v833 = vpack.c.bf16 %v757, %v671
  %v834 = vpack.c.bf16 %v762, %v672
  %v835 = vpack.c.bf16 %v779, %v798
  %v836 = vpack.c.bf16 %v778, %v797
  %v837 = vpack.c.bf16 %v777, %v796
  %v838 = vpack.c.bf16 %v776, %v795
  %v839 = vpack.c.bf16 %v775, %v794
  %v840 = vpack.c.bf16 %v780, %v793
  %v841 = vpack.c.bf16 %v815, %v815
  %v842 = vpack.c.bf16 %v814, %v814
  %v843 = vpack.c.bf16 %v813, %v813
  %v844 = vpack.c.bf16 %v812, %v812
  %v845 = vpack.c.bf16 %v811, %v811
  %v846 = vpack.c.bf16 %v816, %v816
  %v847 = vld [vmem:[%s4] sm:$0xf]
  %v848 = vld [vmem:[%s5] sm:$0xff]
  %850 = vset.pattern.permute.xlu0 0
  %851 = vperm.xlu0 %850, %v848
  %v852 = vpop.permute.xlu0 %851
  %v855 = vsel %vm368, %v847, 0
  %v858 = vsel %vm372, %v841, 0
  %v861 = vsel %vm372, %v842, 0
  %v864 = vsel %vm372, %v843, 0
  %v867 = vsel %vm372, %v844, 0
  %v870 = vsel %vm372, %v845, 0
  %v873 = vsel %vm372, %v846, 0
  %875 = vmatpush.bf16.msra.mxu0 0
  %876 = vmatpush.bf16.msra.mxu0 0
  %877 = vmatpush.bf16.msra.mxu0 0
  %878 = vmatpush.bf16.msra.mxu0 %v858
  %879 = vmatpush.bf16.msra.mxu0 %v835
  %880 = vmatpush.bf16.msra.mxu0 %v829
  %881 = vmatpush.bf16.msra.mxu0 %v823
  %882 = vmatpush.bf16.msra.mxu0 %v817
  %883 = vmatmul.bf16.gmra.mxu0 %v855
  %v884 = vpop.f32.mrf.mxu0
  %v885 = vadd.f32 %v852, %v884
  %v886 = vpop.f32.mrf.mxu0
  %887 = vdwg.mxu0
  %888 = vmatpush.bf16.msra.mxu0 0
  %889 = vmatpush.bf16.msra.mxu0 0
  %890 = vmatpush.bf16.msra.mxu0 0
  %891 = vmatpush.bf16.msra.mxu0 %v861
  %892 = vmatpush.bf16.msra.mxu0 %v836
  %893 = vmatpush.bf16.msra.mxu0 %v830
  %894 = vmatpush.bf16.msra.mxu0 %v824
  %895 = vmatpush.bf16.msra.mxu0 %v818
  %896 = vmatmul.bf16.gmra.mxu0 %v855
  %v897 = vpop.f32.mrf.mxu0
  %v898 = vadd.f32 %v852, %v897
  %v899 = vpop.f32.mrf.mxu0
  %900 = vdwg.mxu0
  %901 = vmatpush.bf16.msra.mxu0 0
  %902 = vmatpush.bf16.msra.mxu0 0
  %903 = vmatpush.bf16.msra.mxu0 0
  %904 = vmatpush.bf16.msra.mxu0 %v864
  %905 = vmatpush.bf16.msra.mxu0 %v837
  %906 = vmatpush.bf16.msra.mxu0 %v831
  %907 = vmatpush.bf16.msra.mxu0 %v825
  %908 = vmatpush.bf16.msra.mxu0 %v819
  %909 = vmatmul.bf16.gmra.mxu0 %v855
  %v910 = vpop.f32.mrf.mxu0
  %v911 = vadd.f32 %v852, %v910
  %v912 = vpop.f32.mrf.mxu0
  %913 = vdwg.mxu0
  %914 = vmatpush.bf16.msra.mxu0 0
  %915 = vmatpush.bf16.msra.mxu0 0
  %916 = vmatpush.bf16.msra.mxu0 0
  %917 = vmatpush.bf16.msra.mxu0 %v867
  %918 = vmatpush.bf16.msra.mxu0 %v838
  %919 = vmatpush.bf16.msra.mxu0 %v832
  %920 = vmatpush.bf16.msra.mxu0 %v826
  %921 = vmatpush.bf16.msra.mxu0 %v820
  %922 = vmatmul.bf16.gmra.mxu0 %v855
  %v923 = vpop.f32.mrf.mxu0
  %v924 = vadd.f32 %v852, %v923
  %v925 = vpop.f32.mrf.mxu0
  %926 = vdwg.mxu0
  %927 = vmatpush.bf16.msra.mxu0 0
  %928 = vmatpush.bf16.msra.mxu0 0
  %929 = vmatpush.bf16.msra.mxu0 0
  %930 = vmatpush.bf16.msra.mxu0 %v870
  %931 = vmatpush.bf16.msra.mxu0 %v839
  %932 = vmatpush.bf16.msra.mxu0 %v833
  %933 = vmatpush.bf16.msra.mxu0 %v827
  %934 = vmatpush.bf16.msra.mxu0 %v821
  %935 = vmatmul.bf16.gmra.mxu0 %v855
  %v936 = vpop.f32.mrf.mxu0
  %v937 = vadd.f32 %v852, %v936
  %v938 = vpop.f32.mrf.mxu0
  %939 = vdwg.mxu0
  %940 = vmatpush.bf16.msra.mxu0 0
  %941 = vmatpush.bf16.msra.mxu0 0
  %942 = vmatpush.bf16.msra.mxu0 0
  %943 = vmatpush.bf16.msra.mxu0 %v873
  %944 = vmatpush.bf16.msra.mxu0 %v840
  %945 = vmatpush.bf16.msra.mxu0 %v834
  %946 = vmatpush.bf16.msra.mxu0 %v828
  %947 = vmatpush.bf16.msra.mxu0 %v822
  %948 = vmatmul.bf16.gmra.mxu0 %v855
  %v949 = vpop.f32.mrf.mxu0
  %v950 = vadd.f32 %v852, %v949
  %v951 = vpop.f32.mrf.mxu0
  %952 = vdwg.mxu0
  %v953 = vadd.f32 %v177, %v885
  %v954 = vadd.f32 %v178, %v898
  %v955 = vadd.f32 %v179, %v911
  %v956 = vadd.f32 %v180, %v924
  %v957 = vadd.f32 %v181, %v937
  %v958 = vadd.f32 %v182, %v950
  %v959 = vld [vmem:[%s6] sm:$0xf]
  %v960 = vld [vmem:[%s6 + $0x4] sm:$0xf]
  %v961 = vld [vmem:[%s6 + $0x8] sm:$0xf]
  %v962 = vld [vmem:[%s6 + $0xc] sm:$0xf]
  %v963 = vpack.c.bf16 %v953, %v953
  %v964 = vpack.c.bf16 %v954, %v954
  %v965 = vpack.c.bf16 %v955, %v955
  %v966 = vpack.c.bf16 %v956, %v956
  %v967 = vpack.c.bf16 %v957, %v957
  %v968 = vpack.c.bf16 %v958, %v958
  %v969 = vld [vmem:[%s7] sm:$0xff]
  %v970 = vld [vmem:[%s7 + $0x8] sm:$0xff]
  %v971 = vld [vmem:[%s7 + $0x10] sm:$0xff]
  %v972 = vld [vmem:[%s7 + $0x18] sm:$0xff]
  %974 = vset.pattern.permute.xlu0 0
  %975 = vperm.xlu0 %974, %v969
  %v976 = vpop.permute.xlu0 %975
  %979 = vset.pattern.permute.xlu0 0
  %980 = vperm.xlu0 %979, %v970
  %v981 = vpop.permute.xlu0 %980
  %984 = vset.pattern.permute.xlu0 0
  %985 = vperm.xlu0 %984, %v971
  %v986 = vpop.permute.xlu0 %985
  %989 = vset.pattern.permute.xlu0 0
  %990 = vperm.xlu0 %989, %v972
  %v991 = vpop.permute.xlu0 %990
  %v997 = vunpack.c.l.b16 %v959
  %v998 = vunpack.c.l.b16 %v960
  %v999 = vunpack.c.l.b16 %v961
  %v1000 = vunpack.c.l.b16 %v962
  %v1001 = vpack.c.b16 %v998, %v997
  %v1002 = vpack.c.b16 %v1000, %v999
  %vm1003 = vcmask 64512
  %v1005 = vsel %vm1003, %v1001, 0
  %v1008 = vsel %vm1003, %v1002, 0
  %v1011 = vsel %vm372, %v963, 0
  %v1014 = vsel %vm372, %v964, 0
  %v1017 = vsel %vm372, %v965, 0
  %v1020 = vsel %vm372, %v966, 0
  %v1023 = vsel %vm372, %v967, 0
  %v1026 = vsel %vm372, %v968, 0
  %1028 = vmatpush.bf16.msra.mxu0 0
  %1029 = vmatpush.bf16.msra.mxu0 0
  %1030 = vmatpush.bf16.msra.mxu0 0
  %1031 = vmatpush.bf16.msra.mxu0 0
  %1032 = vmatpush.bf16.msra.mxu0 0
  %1033 = vmatpush.bf16.msra.mxu0 0
  %1034 = vmatpush.bf16.msra.mxu0 0
  %1035 = vmatpush.bf16.msra.mxu0 %v1011
  %1036 = vmatmul.bf16.gmra.mxu0 %v1005
  %v1037 = vpop.f32.mrf.mxu0
  %v1038 = vadd.f32 %v976, %v1037
  %v1039 = vpop.f32.mrf.mxu0
  %v1040 = vadd.f32 %v981, %v1039
  %1041 = vmatmul.bf16.gmra.mxu0 %v1008
  %v1042 = vpop.f32.mrf.mxu0
  %v1043 = vadd.f32 %v986, %v1042
  %v1044 = vpop.f32.mrf.mxu0
  %v1045 = vadd.f32 %v991, %v1044
  %1046 = vdwg.mxu0
  %1047 = vmatpush.bf16.msra.mxu0 0
  %1048 = vmatpush.bf16.msra.mxu0 0
  %1049 = vmatpush.bf16.msra.mxu0 0
  %1050 = vmatpush.bf16.msra.mxu0 0
  %1051 = vmatpush.bf16.msra.mxu0 0
  %1052 = vmatpush.bf16.msra.mxu0 0
  %1053 = vmatpush.bf16.msra.mxu0 0
  %1054 = vmatpush.bf16.msra.mxu0 %v1014
  %1055 = vmatmul.bf16.gmra.mxu0 %v1005
  %v1056 = vpop.f32.mrf.mxu0
  %v1057 = vadd.f32 %v976, %v1056
  %v1058 = vpop.f32.mrf.mxu0
  %v1059 = vadd.f32 %v981, %v1058
  %1060 = vmatmul.bf16.gmra.mxu0 %v1008
  %v1061 = vpop.f32.mrf.mxu0
  %v1062 = vadd.f32 %v986, %v1061
  %v1063 = vpop.f32.mrf.mxu0
  %v1064 = vadd.f32 %v991, %v1063
  %1065 = vdwg.mxu0
  %1066 = vmatpush.bf16.msra.mxu0 0
  %1067 = vmatpush.bf16.msra.mxu0 0
  %1068 = vmatpush.bf16.msra.mxu0 0
  %1069 = vmatpush.bf16.msra.mxu0 0
  %1070 = vmatpush.bf16.msra.mxu0 0
  %1071 = vmatpush.bf16.msra.mxu0 0
  %1072 = vmatpush.bf16.msra.mxu0 0
  %1073 = vmatpush.bf16.msra.mxu0 %v1017
  %1074 = vmatmul.bf16.gmra.mxu0 %v1005
  %v1075 = vpop.f32.mrf.mxu0
  %v1076 = vadd.f32 %v976, %v1075
  %v1077 = vpop.f32.mrf.mxu0
  %v1078 = vadd.f32 %v981, %v1077
  %1079 = vmatmul.bf16.gmra.mxu0 %v1008
  %v1080 = vpop.f32.mrf.mxu0
  %v1081 = vadd.f32 %v986, %v1080
  %v1082 = vpop.f32.mrf.mxu0
  %v1083 = vadd.f32 %v991, %v1082
  %1084 = vdwg.mxu0
  %1085 = vmatpush.bf16.msra.mxu0 0
  %1086 = vmatpush.bf16.msra.mxu0 0
  %1087 = vmatpush.bf16.msra.mxu0 0
  %1088 = vmatpush.bf16.msra.mxu0 0
  %1089 = vmatpush.bf16.msra.mxu0 0
  %1090 = vmatpush.bf16.msra.mxu0 0
  %1091 = vmatpush.bf16.msra.mxu0 0
  %1092 = vmatpush.bf16.msra.mxu0 %v1020
  %1093 = vmatmul.bf16.gmra.mxu0 %v1005
  %v1094 = vpop.f32.mrf.mxu0
  %v1095 = vadd.f32 %v976, %v1094
  %v1096 = vpop.f32.mrf.mxu0
  %v1097 = vadd.f32 %v981, %v1096
  %1098 = vmatmul.bf16.gmra.mxu0 %v1008
  %v1099 = vpop.f32.mrf.mxu0
  %v1100 = vadd.f32 %v986, %v1099
  %v1101 = vpop.f32.mrf.mxu0
  %v1102 = vadd.f32 %v991, %v1101
  %1103 = vdwg.mxu0
  %1104 = vmatpush.bf16.msra.mxu0 0
  %1105 = vmatpush.bf16.msra.mxu0 0
  %1106 = vmatpush.bf16.msra.mxu0 0
  %1107 = vmatpush.bf16.msra.mxu0 0
  %1108 = vmatpush.bf16.msra.mxu0 0
  %1109 = vmatpush.bf16.msra.mxu0 0
  %1110 = vmatpush.bf16.msra.mxu0 0
  %1111 = vmatpush.bf16.msra.mxu0 %v1023
  %1112 = vmatmul.bf16.gmra.mxu0 %v1005
  %v1113 = vpop.f32.mrf.mxu0
  %v1114 = vadd.f32 %v976, %v1113
  %v1115 = vpop.f32.mrf.mxu0
  %v1116 = vadd.f32 %v981, %v1115
  %1117 = vmatmul.bf16.gmra.mxu0 %v1008
  %v1118 = vpop.f32.mrf.mxu0
  %v1119 = vadd.f32 %v986, %v1118
  %v1120 = vpop.f32.mrf.mxu0
  %v1121 = vadd.f32 %v991, %v1120
  %1122 = vdwg.mxu0
  %1123 = vmatpush.bf16.msra.mxu0 0
  %1124 = vmatpush.bf16.msra.mxu0 0
  %1125 = vmatpush.bf16.msra.mxu0 0
  %1126 = vmatpush.bf16.msra.mxu0 0
  %1127 = vmatpush.bf16.msra.mxu0 0
  %1128 = vmatpush.bf16.msra.mxu0 0
  %1129 = vmatpush.bf16.msra.mxu0 0
  %1130 = vmatpush.bf16.msra.mxu0 %v1026
  %1131 = vmatmul.bf16.gmra.mxu0 %v1005
  %v1132 = vpop.f32.mrf.mxu0
  %v1133 = vadd.f32 %v976, %v1132
  %v1134 = vpop.f32.mrf.mxu0
  %v1135 = vadd.f32 %v981, %v1134
  %1136 = vmatmul.bf16.gmra.mxu0 %v1008
  %v1137 = vpop.f32.mrf.mxu0
  %v1138 = vadd.f32 %v986, %v1137
  %v1139 = vpop.f32.mrf.mxu0
  %v1140 = vadd.f32 %v991, %v1139
  %1141 = vdwg.mxu0
  %v1142 = vmul.f32 %v1038, 0.5
  %v1143 = vmul.f32 %v1057, 0.5
  %v1144 = vmul.f32 %v1076, 0.5
  %v1145 = vmul.f32 %v1095, 0.5
  %v1146 = vmul.f32 %v1114, 0.5
  %v1147 = vmul.f32 %v1133, 0.5
  %v1148 = vmul.f32 %v1040, 0.5
  %v1149 = vmul.f32 %v1059, 0.5
  %v1150 = vmul.f32 %v1078, 0.5
  %v1151 = vmul.f32 %v1097, 0.5
  %v1152 = vmul.f32 %v1116, 0.5
  %v1153 = vmul.f32 %v1135, 0.5
  %v1154 = vmul.f32 %v1043, 0.5
  %v1155 = vmul.f32 %v1062, 0.5
  %v1156 = vmul.f32 %v1081, 0.5
  %v1157 = vmul.f32 %v1100, 0.5
  %v1158 = vmul.f32 %v1119, 0.5
  %v1159 = vmul.f32 %v1138, 0.5
  %v1160 = vmul.f32 %v1045, 0.5
  %v1161 = vmul.f32 %v1064, 0.5
  %v1162 = vmul.f32 %v1083, 0.5
  %v1163 = vmul.f32 %v1102, 0.5
  %v1164 = vmul.f32 %v1121, 0.5
  %v1165 = vmul.f32 %v1140, 0.5
  %v1166 = vmul.f32 %v1038, %v1038
  %v1167 = vmul.f32 %v1057, %v1057
  %v1168 = vmul.f32 %v1076, %v1076
  %v1169 = vmul.f32 %v1095, %v1095
  %v1170 = vmul.f32 %v1114, %v1114
  %v1171 = vmul.f32 %v1133, %v1133
  %v1172 = vmul.f32 %v1040, %v1040
  %v1173 = vmul.f32 %v1059, %v1059
  %v1174 = vmul.f32 %v1078, %v1078
  %v1175 = vmul.f32 %v1097, %v1097
  %v1176 = vmul.f32 %v1116, %v1116
  %v1177 = vmul.f32 %v1135, %v1135
  %v1178 = vmul.f32 %v1043, %v1043
  %v1179 = vmul.f32 %v1062, %v1062
  %v1180 = vmul.f32 %v1081, %v1081
  %v1181 = vmul.f32 %v1100, %v1100
  %v1182 = vmul.f32 %v1119, %v1119
  %v1183 = vmul.f32 %v1138, %v1138
  %v1184 = vmul.f32 %v1045, %v1045
  %v1185 = vmul.f32 %v1064, %v1064
  %v1186 = vmul.f32 %v1083, %v1083
  %v1187 = vmul.f32 %v1102, %v1102
  %v1188 = vmul.f32 %v1121, %v1121
  %v1189 = vmul.f32 %v1140, %v1140
  %v1190 = vadd.f32 %v1166, 1.0
  %v1191 = vadd.f32 %v1167, 1.0
  %v1192 = vadd.f32 %v1168, 1.0
  %v1193 = vadd.f32 %v1169, 1.0
  %v1194 = vadd.f32 %v1170, 1.0
  %v1195 = vadd.f32 %v1171, 1.0
  %v1196 = vadd.f32 %v1172, 1.0
  %v1197 = vadd.f32 %v1173, 1.0
  %v1198 = vadd.f32 %v1174, 1.0
  %v1199 = vadd.f32 %v1175, 1.0
  %v1200 = vadd.f32 %v1176, 1.0
  %v1201 = vadd.f32 %v1177, 1.0
  %v1202 = vadd.f32 %v1178, 1.0
  %v1203 = vadd.f32 %v1179, 1.0
  %v1204 = vadd.f32 %v1180, 1.0
  %v1205 = vadd.f32 %v1181, 1.0
  %v1206 = vadd.f32 %v1182, 1.0
  %v1207 = vadd.f32 %v1183, 1.0
  %v1208 = vadd.f32 %v1184, 1.0
  %v1209 = vadd.f32 %v1185, 1.0
  %v1210 = vadd.f32 %v1186, 1.0
  %v1211 = vadd.f32 %v1187, 1.0
  %v1212 = vadd.f32 %v1188, 1.0
  %v1213 = vadd.f32 %v1189, 1.0
  %v1214 = vrsqrt.pop %v1190
  %v1215 = vmul.f32 %v1214, %v1190
  %v1216 = vmul.f32 %v1215, %v1214
  %v1217 = vmul.f32 0.5, %v1216
  %v1218 = vsub.f32 1.5, %v1217
  %v1219 = vmul.f32 %v1214, %v1218
  %v1220 = vmul.f32 %v1190, %v1219
  %vm1221 = vcmp.eq.f32.partialorder %v1190, inf
  %v1222 = vsel %vm1221, %v1190, %v1220
  %vm1223 = vcmp.eq.f32.partialorder %v1190, 0.0
  %v1224 = vand.u32 %v1190, 2147483648
  %v1225 = vsel %vm1223, %v1224, %v1222
  %v1226 = vrsqrt.pop %v1191
  %v1227 = vmul.f32 %v1226, %v1191
  %v1228 = vmul.f32 %v1227, %v1226
  %v1229 = vmul.f32 0.5, %v1228
  %v1230 = vsub.f32 1.5, %v1229
  %v1231 = vmul.f32 %v1226, %v1230
  %v1232 = vmul.f32 %v1191, %v1231
  %vm1233 = vcmp.eq.f32.partialorder %v1191, inf
  %v1234 = vsel %vm1233, %v1191, %v1232
  %vm1235 = vcmp.eq.f32.partialorder %v1191, 0.0
  %v1236 = vand.u32 %v1191, 2147483648
  %v1237 = vsel %vm1235, %v1236, %v1234
  %v1238 = vrsqrt.pop %v1192
  %v1239 = vmul.f32 %v1238, %v1192
  %v1240 = vmul.f32 %v1239, %v1238
  %v1241 = vmul.f32 0.5, %v1240
  %v1242 = vsub.f32 1.5, %v1241
  %v1243 = vmul.f32 %v1238, %v1242
  %v1244 = vmul.f32 %v1192, %v1243
  %vm1245 = vcmp.eq.f32.partialorder %v1192, inf
  %v1246 = vsel %vm1245, %v1192, %v1244
  %vm1247 = vcmp.eq.f32.partialorder %v1192, 0.0
  %v1248 = vand.u32 %v1192, 2147483648
  %v1249 = vsel %vm1247, %v1248, %v1246
  %v1250 = vrsqrt.pop %v1193
  %v1251 = vmul.f32 %v1250, %v1193
  %v1252 = vmul.f32 %v1251, %v1250
  %v1253 = vmul.f32 0.5, %v1252
  %v1254 = vsub.f32 1.5, %v1253
  %v1255 = vmul.f32 %v1250, %v1254
  %v1256 = vmul.f32 %v1193, %v1255
  %vm1257 = vcmp.eq.f32.partialorder %v1193, inf
  %v1258 = vsel %vm1257, %v1193, %v1256
  %vm1259 = vcmp.eq.f32.partialorder %v1193, 0.0
  %v1260 = vand.u32 %v1193, 2147483648
  %v1261 = vsel %vm1259, %v1260, %v1258
  %v1262 = vrsqrt.pop %v1194
  %v1263 = vmul.f32 %v1262, %v1194
  %v1264 = vmul.f32 %v1263, %v1262
  %v1265 = vmul.f32 0.5, %v1264
  %v1266 = vsub.f32 1.5, %v1265
  %v1267 = vmul.f32 %v1262, %v1266
  %v1268 = vmul.f32 %v1194, %v1267
  %vm1269 = vcmp.eq.f32.partialorder %v1194, inf
  %v1270 = vsel %vm1269, %v1194, %v1268
  %vm1271 = vcmp.eq.f32.partialorder %v1194, 0.0
  %v1272 = vand.u32 %v1194, 2147483648
  %v1273 = vsel %vm1271, %v1272, %v1270
  %v1274 = vrsqrt.pop %v1195
  %v1275 = vmul.f32 %v1274, %v1195
  %v1276 = vmul.f32 %v1275, %v1274
  %v1277 = vmul.f32 0.5, %v1276
  %v1278 = vsub.f32 1.5, %v1277
  %v1279 = vmul.f32 %v1274, %v1278
  %v1280 = vmul.f32 %v1195, %v1279
  %vm1281 = vcmp.eq.f32.partialorder %v1195, inf
  %v1282 = vsel %vm1281, %v1195, %v1280
  %vm1283 = vcmp.eq.f32.partialorder %v1195, 0.0
  %v1284 = vand.u32 %v1195, 2147483648
  %v1285 = vsel %vm1283, %v1284, %v1282
  %v1286 = vrsqrt.pop %v1196
  %v1287 = vmul.f32 %v1286, %v1196
  %v1288 = vmul.f32 %v1287, %v1286
  %v1289 = vmul.f32 0.5, %v1288
  %v1290 = vsub.f32 1.5, %v1289
  %v1291 = vmul.f32 %v1286, %v1290
  %v1292 = vmul.f32 %v1196, %v1291
  %vm1293 = vcmp.eq.f32.partialorder %v1196, inf
  %v1294 = vsel %vm1293, %v1196, %v1292
  %vm1295 = vcmp.eq.f32.partialorder %v1196, 0.0
  %v1296 = vand.u32 %v1196, 2147483648
  %v1297 = vsel %vm1295, %v1296, %v1294
  %v1298 = vrsqrt.pop %v1197
  %v1299 = vmul.f32 %v1298, %v1197
  %v1300 = vmul.f32 %v1299, %v1298
  %v1301 = vmul.f32 0.5, %v1300
  %v1302 = vsub.f32 1.5, %v1301
  %v1303 = vmul.f32 %v1298, %v1302
  %v1304 = vmul.f32 %v1197, %v1303
  %vm1305 = vcmp.eq.f32.partialorder %v1197, inf
  %v1306 = vsel %vm1305, %v1197, %v1304
  %vm1307 = vcmp.eq.f32.partialorder %v1197, 0.0
  %v1308 = vand.u32 %v1197, 2147483648
  %v1309 = vsel %vm1307, %v1308, %v1306
  %v1310 = vrsqrt.pop %v1198
  %v1311 = vmul.f32 %v1310, %v1198
  %v1312 = vmul.f32 %v1311, %v1310
  %v1313 = vmul.f32 0.5, %v1312
  %v1314 = vsub.f32 1.5, %v1313
  %v1315 = vmul.f32 %v1310, %v1314
  %v1316 = vmul.f32 %v1198, %v1315
  %vm1317 = vcmp.eq.f32.partialorder %v1198, inf
  %v1318 = vsel %vm1317, %v1198, %v1316
  %vm1319 = vcmp.eq.f32.partialorder %v1198, 0.0
  %v1320 = vand.u32 %v1198, 2147483648
  %v1321 = vsel %vm1319, %v1320, %v1318
  %v1322 = vrsqrt.pop %v1199
  %v1323 = vmul.f32 %v1322, %v1199
  %v1324 = vmul.f32 %v1323, %v1322
  %v1325 = vmul.f32 0.5, %v1324
  %v1326 = vsub.f32 1.5, %v1325
  %v1327 = vmul.f32 %v1322, %v1326
  %v1328 = vmul.f32 %v1199, %v1327
  %vm1329 = vcmp.eq.f32.partialorder %v1199, inf
  %v1330 = vsel %vm1329, %v1199, %v1328
  %vm1331 = vcmp.eq.f32.partialorder %v1199, 0.0
  %v1332 = vand.u32 %v1199, 2147483648
  %v1333 = vsel %vm1331, %v1332, %v1330
  %v1334 = vrsqrt.pop %v1200
  %v1335 = vmul.f32 %v1334, %v1200
  %v1336 = vmul.f32 %v1335, %v1334
  %v1337 = vmul.f32 0.5, %v1336
  %v1338 = vsub.f32 1.5, %v1337
  %v1339 = vmul.f32 %v1334, %v1338
  %v1340 = vmul.f32 %v1200, %v1339
  %vm1341 = vcmp.eq.f32.partialorder %v1200, inf
  %v1342 = vsel %vm1341, %v1200, %v1340
  %vm1343 = vcmp.eq.f32.partialorder %v1200, 0.0
  %v1344 = vand.u32 %v1200, 2147483648
  %v1345 = vsel %vm1343, %v1344, %v1342
  %v1346 = vrsqrt.pop %v1201
  %v1347 = vmul.f32 %v1346, %v1201
  %v1348 = vmul.f32 %v1347, %v1346
  %v1349 = vmul.f32 0.5, %v1348
  %v1350 = vsub.f32 1.5, %v1349
  %v1351 = vmul.f32 %v1346, %v1350
  %v1352 = vmul.f32 %v1201, %v1351
  %vm1353 = vcmp.eq.f32.partialorder %v1201, inf
  %v1354 = vsel %vm1353, %v1201, %v1352
  %vm1355 = vcmp.eq.f32.partialorder %v1201, 0.0
  %v1356 = vand.u32 %v1201, 2147483648
  %v1357 = vsel %vm1355, %v1356, %v1354
  %v1358 = vrsqrt.pop %v1202
  %v1359 = vmul.f32 %v1358, %v1202
  %v1360 = vmul.f32 %v1359, %v1358
  %v1361 = vmul.f32 0.5, %v1360
  %v1362 = vsub.f32 1.5, %v1361
  %v1363 = vmul.f32 %v1358, %v1362
  %v1364 = vmul.f32 %v1202, %v1363
  %vm1365 = vcmp.eq.f32.partialorder %v1202, inf
  %v1366 = vsel %vm1365, %v1202, %v1364
  %vm1367 = vcmp.eq.f32.partialorder %v1202, 0.0
  %v1368 = vand.u32 %v1202, 2147483648
  %v1369 = vsel %vm1367, %v1368, %v1366
  %v1370 = vrsqrt.pop %v1203
  %v1371 = vmul.f32 %v1370, %v1203
  %v1372 = vmul.f32 %v1371, %v1370
  %v1373 = vmul.f32 0.5, %v1372
  %v1374 = vsub.f32 1.5, %v1373
  %v1375 = vmul.f32 %v1370, %v1374
  %v1376 = vmul.f32 %v1203, %v1375
  %vm1377 = vcmp.eq.f32.partialorder %v1203, inf
  %v1378 = vsel %vm1377, %v1203, %v1376
  %vm1379 = vcmp.eq.f32.partialorder %v1203, 0.0
  %v1380 = vand.u32 %v1203, 2147483648
  %v1381 = vsel %vm1379, %v1380, %v1378
  %v1382 = vrsqrt.pop %v1204
  %v1383 = vmul.f32 %v1382, %v1204
  %v1384 = vmul.f32 %v1383, %v1382
  %v1385 = vmul.f32 0.5, %v1384
  %v1386 = vsub.f32 1.5, %v1385
  %v1387 = vmul.f32 %v1382, %v1386
  %v1388 = vmul.f32 %v1204, %v1387
  %vm1389 = vcmp.eq.f32.partialorder %v1204, inf
  %v1390 = vsel %vm1389, %v1204, %v1388
  %vm1391 = vcmp.eq.f32.partialorder %v1204, 0.0
  %v1392 = vand.u32 %v1204, 2147483648
  %v1393 = vsel %vm1391, %v1392, %v1390
  %v1394 = vrsqrt.pop %v1205
  %v1395 = vmul.f32 %v1394, %v1205
  %v1396 = vmul.f32 %v1395, %v1394
  %v1397 = vmul.f32 0.5, %v1396
  %v1398 = vsub.f32 1.5, %v1397
  %v1399 = vmul.f32 %v1394, %v1398
  %v1400 = vmul.f32 %v1205, %v1399
  %vm1401 = vcmp.eq.f32.partialorder %v1205, inf
  %v1402 = vsel %vm1401, %v1205, %v1400
  %vm1403 = vcmp.eq.f32.partialorder %v1205, 0.0
  %v1404 = vand.u32 %v1205, 2147483648
  %v1405 = vsel %vm1403, %v1404, %v1402
  %v1406 = vrsqrt.pop %v1206
  %v1407 = vmul.f32 %v1406, %v1206
  %v1408 = vmul.f32 %v1407, %v1406
  %v1409 = vmul.f32 0.5, %v1408
  %v1410 = vsub.f32 1.5, %v1409
  %v1411 = vmul.f32 %v1406, %v1410
  %v1412 = vmul.f32 %v1206, %v1411
  %vm1413 = vcmp.eq.f32.partialorder %v1206, inf
  %v1414 = vsel %vm1413, %v1206, %v1412
  %vm1415 = vcmp.eq.f32.partialorder %v1206, 0.0
  %v1416 = vand.u32 %v1206, 2147483648
  %v1417 = vsel %vm1415, %v1416, %v1414
  %v1418 = vrsqrt.pop %v1207
  %v1419 = vmul.f32 %v1418, %v1207
  %v1420 = vmul.f32 %v1419, %v1418
  %v1421 = vmul.f32 0.5, %v1420
  %v1422 = vsub.f32 1.5, %v1421
  %v1423 = vmul.f32 %v1418, %v1422
  %v1424 = vmul.f32 %v1207, %v1423
  %vm1425 = vcmp.eq.f32.partialorder %v1207, inf
  %v1426 = vsel %vm1425, %v1207, %v1424
  %vm1427 = vcmp.eq.f32.partialorder %v1207, 0.0
  %v1428 = vand.u32 %v1207, 2147483648
  %v1429 = vsel %vm1427, %v1428, %v1426
  %v1430 = vrsqrt.pop %v1208
  %v1431 = vmul.f32 %v1430, %v1208
  %v1432 = vmul.f32 %v1431, %v1430
  %v1433 = vmul.f32 0.5, %v1432
  %v1434 = vsub.f32 1.5, %v1433
  %v1435 = vmul.f32 %v1430, %v1434
  %v1436 = vmul.f32 %v1208, %v1435
  %vm1437 = vcmp.eq.f32.partialorder %v1208, inf
  %v1438 = vsel %vm1437, %v1208, %v1436
  %vm1439 = vcmp.eq.f32.partialorder %v1208, 0.0
  %v1440 = vand.u32 %v1208, 2147483648
  %v1441 = vsel %vm1439, %v1440, %v1438
  %v1442 = vrsqrt.pop %v1209
  %v1443 = vmul.f32 %v1442, %v1209
  %v1444 = vmul.f32 %v1443, %v1442
  %v1445 = vmul.f32 0.5, %v1444
  %v1446 = vsub.f32 1.5, %v1445
  %v1447 = vmul.f32 %v1442, %v1446
  %v1448 = vmul.f32 %v1209, %v1447
  %vm1449 = vcmp.eq.f32.partialorder %v1209, inf
  %v1450 = vsel %vm1449, %v1209, %v1448
  %vm1451 = vcmp.eq.f32.partialorder %v1209, 0.0
  %v1452 = vand.u32 %v1209, 2147483648
  %v1453 = vsel %vm1451, %v1452, %v1450
  %v1454 = vrsqrt.pop %v1210
  %v1455 = vmul.f32 %v1454, %v1210
  %v1456 = vmul.f32 %v1455, %v1454
  %v1457 = vmul.f32 0.5, %v1456
  %v1458 = vsub.f32 1.5, %v1457
  %v1459 = vmul.f32 %v1454, %v1458
  %v1460 = vmul.f32 %v1210, %v1459
  %vm1461 = vcmp.eq.f32.partialorder %v1210, inf
  %v1462 = vsel %vm1461, %v1210, %v1460
  %vm1463 = vcmp.eq.f32.partialorder %v1210, 0.0
  %v1464 = vand.u32 %v1210, 2147483648
  %v1465 = vsel %vm1463, %v1464, %v1462
  %v1466 = vrsqrt.pop %v1211
  %v1467 = vmul.f32 %v1466, %v1211
  %v1468 = vmul.f32 %v1467, %v1466
  %v1469 = vmul.f32 0.5, %v1468
  %v1470 = vsub.f32 1.5, %v1469
  %v1471 = vmul.f32 %v1466, %v1470
  %v1472 = vmul.f32 %v1211, %v1471
  %vm1473 = vcmp.eq.f32.partialorder %v1211, inf
  %v1474 = vsel %vm1473, %v1211, %v1472
  %vm1475 = vcmp.eq.f32.partialorder %v1211, 0.0
  %v1476 = vand.u32 %v1211, 2147483648
  %v1477 = vsel %vm1475, %v1476, %v1474
  %v1478 = vrsqrt.pop %v1212
  %v1479 = vmul.f32 %v1478, %v1212
  %v1480 = vmul.f32 %v1479, %v1478
  %v1481 = vmul.f32 0.5, %v1480
  %v1482 = vsub.f32 1.5, %v1481
  %v1483 = vmul.f32 %v1478, %v1482
  %v1484 = vmul.f32 %v1212, %v1483
  %vm1485 = vcmp.eq.f32.partialorder %v1212, inf
  %v1486 = vsel %vm1485, %v1212, %v1484
  %vm1487 = vcmp.eq.f32.partialorder %v1212, 0.0
  %v1488 = vand.u32 %v1212, 2147483648
  %v1489 = vsel %vm1487, %v1488, %v1486
  %v1490 = vrsqrt.pop %v1213
  %v1491 = vmul.f32 %v1490, %v1213
  %v1492 = vmul.f32 %v1491, %v1490
  %v1493 = vmul.f32 0.5, %v1492
  %v1494 = vsub.f32 1.5, %v1493
  %v1495 = vmul.f32 %v1490, %v1494
  %v1496 = vmul.f32 %v1213, %v1495
  %vm1497 = vcmp.eq.f32.partialorder %v1213, inf
  %v1498 = vsel %vm1497, %v1213, %v1496
  %vm1499 = vcmp.eq.f32.partialorder %v1213, 0.0
  %v1500 = vand.u32 %v1213, 2147483648
  %v1501 = vsel %vm1499, %v1500, %v1498
  %v1502 = vmul.f32 %v1225, 0.5
  %v1503 = vmul.f32 %v1237, 0.5
  %v1504 = vmul.f32 %v1249, 0.5
  %v1505 = vmul.f32 %v1261, 0.5
  %v1506 = vmul.f32 %v1273, 0.5
  %v1507 = vmul.f32 %v1285, 0.5
  %v1508 = vmul.f32 %v1297, 0.5
  %v1509 = vmul.f32 %v1309, 0.5
  %v1510 = vmul.f32 %v1321, 0.5
  %v1511 = vmul.f32 %v1333, 0.5
  %v1512 = vmul.f32 %v1345, 0.5
  %v1513 = vmul.f32 %v1357, 0.5
  %v1514 = vmul.f32 %v1369, 0.5
  %v1515 = vmul.f32 %v1381, 0.5
  %v1516 = vmul.f32 %v1393, 0.5
  %v1517 = vmul.f32 %v1405, 0.5
  %v1518 = vmul.f32 %v1417, 0.5
  %v1519 = vmul.f32 %v1429, 0.5
  %v1520 = vmul.f32 %v1441, 0.5
  %v1521 = vmul.f32 %v1453, 0.5
  %v1522 = vmul.f32 %v1465, 0.5
  %v1523 = vmul.f32 %v1477, 0.5
  %v1524 = vmul.f32 %v1489, 0.5
  %v1525 = vmul.f32 %v1501, 0.5
  %v1526 = vadd.f32 %v1142, %v1502
  %v1527 = vadd.f32 %v1143, %v1503
  %v1528 = vadd.f32 %v1144, %v1504
  %v1529 = vadd.f32 %v1145, %v1505
  %v1530 = vadd.f32 %v1146, %v1506
  %v1531 = vadd.f32 %v1147, %v1507
  %v1532 = vadd.f32 %v1148, %v1508
  %v1533 = vadd.f32 %v1149, %v1509
  %v1534 = vadd.f32 %v1150, %v1510
  %v1535 = vadd.f32 %v1151, %v1511
  %v1536 = vadd.f32 %v1152, %v1512
  %v1537 = vadd.f32 %v1153, %v1513
  %v1538 = vadd.f32 %v1154, %v1514
  %v1539 = vadd.f32 %v1155, %v1515
  %v1540 = vadd.f32 %v1156, %v1516
  %v1541 = vadd.f32 %v1157, %v1517
  %v1542 = vadd.f32 %v1158, %v1518
  %v1543 = vadd.f32 %v1159, %v1519
  %v1544 = vadd.f32 %v1160, %v1520
  %v1545 = vadd.f32 %v1161, %v1521
  %v1546 = vadd.f32 %v1162, %v1522
  %v1547 = vadd.f32 %v1163, %v1523
  %v1548 = vadd.f32 %v1164, %v1524
  %v1549 = vadd.f32 %v1165, %v1525
  %v1550 = vsub.f32 %v1526, 0.5
  %v1551 = vsub.f32 %v1527, 0.5
  %v1552 = vsub.f32 %v1528, 0.5
  %v1553 = vsub.f32 %v1529, 0.5
  %v1554 = vsub.f32 %v1530, 0.5
  %v1555 = vsub.f32 %v1531, 0.5
  %v1556 = vsub.f32 %v1532, 0.5
  %v1557 = vsub.f32 %v1533, 0.5
  %v1558 = vsub.f32 %v1534, 0.5
  %v1559 = vsub.f32 %v1535, 0.5
  %v1560 = vsub.f32 %v1536, 0.5
  %v1561 = vsub.f32 %v1537, 0.5
  %v1562 = vsub.f32 %v1538, 0.5
  %v1563 = vsub.f32 %v1539, 0.5
  %v1564 = vsub.f32 %v1540, 0.5
  %v1565 = vsub.f32 %v1541, 0.5
  %v1566 = vsub.f32 %v1542, 0.5
  %v1567 = vsub.f32 %v1543, 0.5
  %v1568 = vsub.f32 %v1544, 0.5
  %v1569 = vsub.f32 %v1545, 0.5
  %v1570 = vsub.f32 %v1546, 0.5
  %v1571 = vsub.f32 %v1547, 0.5
  %v1572 = vsub.f32 %v1548, 0.5
  %v1573 = vsub.f32 %v1549, 0.5
  %v1574 = vld [vmem:[%s8] sm:$0xf]
  %v1575 = vpack.c.bf16 %v1556, %v1550
  %v1576 = vpack.c.bf16 %v1557, %v1551
  %v1577 = vpack.c.bf16 %v1558, %v1552
  %v1578 = vpack.c.bf16 %v1559, %v1553
  %v1579 = vpack.c.bf16 %v1560, %v1554
  %v1580 = vpack.c.bf16 %v1561, %v1555
  %v1581 = vpack.c.bf16 %v1568, %v1562
  %v1582 = vpack.c.bf16 %v1569, %v1563
  %v1583 = vpack.c.bf16 %v1570, %v1564
  %v1584 = vpack.c.bf16 %v1571, %v1565
  %v1585 = vpack.c.bf16 %v1572, %v1566
  %v1586 = vpack.c.bf16 %v1573, %v1567
  %vm1587 = vcmask 261120
  %v1589 = vsel %vm1587, %v1574, 0
  %1591 = vmatpush.bf16.msra.mxu0 0
  %1592 = vmatpush.bf16.msra.mxu0 0
  %1593 = vmatpush.bf16.msra.mxu0 0
  %1594 = vmatpush.bf16.msra.mxu0 0
  %1595 = vmatpush.bf16.msra.mxu0 0
  %1596 = vmatpush.bf16.msra.mxu0 0
  %1597 = vmatpush.bf16.msra.mxu0 %v1581
  %1598 = vmatpush.bf16.msra.mxu0 %v1575
  %1599 = vmatmul.bf16.gmra.mxu0 %v1589
  %v1600 = vpop.f32.mrf.mxu0
  %v1601 = vadd.f32 0.0, %v1600
  %v1602 = vpop.f32.mrf.mxu0
  %1603 = vdwg.mxu0
  %1604 = vmatpush.bf16.msra.mxu0 0
  %1605 = vmatpush.bf16.msra.mxu0 0
  %1606 = vmatpush.bf16.msra.mxu0 0
  %1607 = vmatpush.bf16.msra.mxu0 0
  %1608 = vmatpush.bf16.msra.mxu0 0
  %1609 = vmatpush.bf16.msra.mxu0 0
  %1610 = vmatpush.bf16.msra.mxu0 %v1582
  %1611 = vmatpush.bf16.msra.mxu0 %v1576
  %1612 = vmatmul.bf16.gmra.mxu0 %v1589
  %v1613 = vpop.f32.mrf.mxu0
  %v1614 = vadd.f32 0.0, %v1613
  %v1615 = vpop.f32.mrf.mxu0
  %1616 = vdwg.mxu0
  %1617 = vmatpush.bf16.msra.mxu0 0
  %1618 = vmatpush.bf16.msra.mxu0 0
  %1619 = vmatpush.bf16.msra.mxu0 0
  %1620 = vmatpush.bf16.msra.mxu0 0
  %1621 = vmatpush.bf16.msra.mxu0 0
  %1622 = vmatpush.bf16.msra.mxu0 0
  %1623 = vmatpush.bf16.msra.mxu0 %v1583
  %1624 = vmatpush.bf16.msra.mxu0 %v1577
  %1625 = vmatmul.bf16.gmra.mxu0 %v1589
  %v1626 = vpop.f32.mrf.mxu0
  %v1627 = vadd.f32 0.0, %v1626
  %v1628 = vpop.f32.mrf.mxu0
  %1629 = vdwg.mxu0
  %1630 = vmatpush.bf16.msra.mxu0 0
  %1631 = vmatpush.bf16.msra.mxu0 0
  %1632 = vmatpush.bf16.msra.mxu0 0
  %1633 = vmatpush.bf16.msra.mxu0 0
  %1634 = vmatpush.bf16.msra.mxu0 0
  %1635 = vmatpush.bf16.msra.mxu0 0
  %1636 = vmatpush.bf16.msra.mxu0 %v1584
  %1637 = vmatpush.bf16.msra.mxu0 %v1578
  %1638 = vmatmul.bf16.gmra.mxu0 %v1589
  %v1639 = vpop.f32.mrf.mxu0
  %v1640 = vadd.f32 0.0, %v1639
  %v1641 = vpop.f32.mrf.mxu0
  %1642 = vdwg.mxu0
  %1643 = vmatpush.bf16.msra.mxu0 0
  %1644 = vmatpush.bf16.msra.mxu0 0
  %1645 = vmatpush.bf16.msra.mxu0 0
  %1646 = vmatpush.bf16.msra.mxu0 0
  %1647 = vmatpush.bf16.msra.mxu0 0
  %1648 = vmatpush.bf16.msra.mxu0 0
  %1649 = vmatpush.bf16.msra.mxu0 %v1585
  %1650 = vmatpush.bf16.msra.mxu0 %v1579
  %1651 = vmatmul.bf16.gmra.mxu0 %v1589
  %v1652 = vpop.f32.mrf.mxu0
  %v1653 = vadd.f32 0.0, %v1652
  %v1654 = vpop.f32.mrf.mxu0
  %1655 = vdwg.mxu0
  %1656 = vmatpush.bf16.msra.mxu0 0
  %1657 = vmatpush.bf16.msra.mxu0 0
  %1658 = vmatpush.bf16.msra.mxu0 0
  %1659 = vmatpush.bf16.msra.mxu0 0
  %1660 = vmatpush.bf16.msra.mxu0 0
  %1661 = vmatpush.bf16.msra.mxu0 0
  %1662 = vmatpush.bf16.msra.mxu0 %v1586
  %1663 = vmatpush.bf16.msra.mxu0 %v1580
  %1664 = vmatmul.bf16.gmra.mxu0 %v1589
  %v1665 = vpop.f32.mrf.mxu0
  %v1666 = vadd.f32 0.0, %v1665
  %v1667 = vpop.f32.mrf.mxu0
  %1668 = vdwg.mxu0
  %v1669 = vadd.f32 %v953, %v1601
  %v1670 = vadd.f32 %v954, %v1614
  %v1671 = vadd.f32 %v955, %v1627
  %v1672 = vadd.f32 %v956, %v1640
  %v1673 = vadd.f32 %v957, %v1653
  %v1674 = vadd.f32 %v958, %v1666
  %v1675 = vld [vmem:[%s9] sm:$0xff]
  %1677 = vset.pattern.permute.xlu0 0
  %1678 = vperm.xlu0 %1677, %v1675
  %v1679 = vpop.permute.xlu0 %1678
  %v1681 = vadd.f32 %v1669, %v1679
  %v1682 = vadd.f32 %v1670, %v1679
  %v1683 = vadd.f32 %v1671, %v1679
  %v1684 = vadd.f32 %v1672, %v1679
  %v1685 = vadd.f32 %v1673, %v1679
  %v1686 = vadd.f32 %v1674, %v1679
  %1687 = vrot.lane.b32.xlu0 %v1681, 92
  %v1688 = vpop.permute.xlu0 %1687
  %1689 = vrot.lane.b32.xlu0 %v1682, 92
  %v1690 = vpop.permute.xlu0 %1689
  %1691 = vrot.lane.b32.xlu0 %v1683, 92
  %v1692 = vpop.permute.xlu0 %1691
  %1693 = vrot.lane.b32.xlu0 %v1684, 92
  %v1694 = vpop.permute.xlu0 %1693
  %1695 = vrot.lane.b32.xlu0 %v1685, 92
  %v1696 = vpop.permute.xlu0 %1695
  %1697 = vrot.lane.b32.xlu0 %v1686, 92
  %v1698 = vpop.permute.xlu0 %1697
  %v1699 = vsel %vm95, %v1696, %v1698
  %v1700 = vsel %vm95, %v1694, %v1696
  %v1701 = vsel %vm95, %v1692, %v1694
  %v1702 = vsel %vm95, %v1690, %v1692
  %v1703 = vsel %vm95, %v1688, %v1690
  %v1704 = vsel %vm95, %v1698, %v1688
  %1705 = vrot.lane.b32.xlu0 %v1681, 36
  %v1706 = vpop.permute.xlu0 %1705
  %1707 = vrot.lane.b32.xlu0 %v1682, 36
  %v1708 = vpop.permute.xlu0 %1707
  %1709 = vrot.lane.b32.xlu0 %v1683, 36
  %v1710 = vpop.permute.xlu0 %1709
  %1711 = vrot.lane.b32.xlu0 %v1684, 36
  %v1712 = vpop.permute.xlu0 %1711
  %1713 = vrot.lane.b32.xlu0 %v1685, 36
  %v1714 = vpop.permute.xlu0 %1713
  %1715 = vrot.lane.b32.xlu0 %v1686, 36
  %v1716 = vpop.permute.xlu0 %1715
  %v1717 = vsel %vm114, %v1714, %v1716
  %v1718 = vsel %vm114, %v1712, %v1714
  %v1719 = vsel %vm114, %v1710, %v1712
  %v1720 = vsel %vm114, %v1708, %v1710
  %v1721 = vsel %vm114, %v1706, %v1708
  %v1722 = vsel %vm114, %v1716, %v1706
  %v1723 = vsel %vm57, %v1722, %v1681
  %v1724 = vsel %vm58, %v1721, %v1682
  %v1725 = vsel %vm59, %v1720, %v1683
  %v1726 = vsel %vm60, %v1719, %v1684
  %v1727 = vsel %vm61, %v1718, %v1685
  %v1728 = vsel %vm62, %v1717, %v1686
  %v1729 = vsel %vm51, %v1703, %v1723
  %v1730 = vsel %vm52, %v1702, %v1724
  %v1731 = vsel %vm53, %v1701, %v1725
  %v1732 = vsel %vm54, %v1700, %v1726
  %v1733 = vsel %vm55, %v1699, %v1727
  %v1734 = vsel %vm56, %v1704, %v1728
  %1735 = vrot.lane.b32.xlu0 %v1729, 126
  %v1736 = vpop.permute.xlu0 %1735
  %1737 = vrot.lane.b32.xlu0 %v1730, 126
  %v1738 = vpop.permute.xlu0 %1737
  %1739 = vrot.lane.b32.xlu0 %v1731, 126
  %v1740 = vpop.permute.xlu0 %1739
  %1741 = vrot.lane.b32.xlu0 %v1732, 126
  %v1742 = vpop.permute.xlu0 %1741
  %1743 = vrot.lane.b32.xlu0 %v1733, 126
  %v1744 = vpop.permute.xlu0 %1743
  %1745 = vrot.lane.b32.xlu0 %v1734, 126
  %v1746 = vpop.permute.xlu0 %1745
  %v1747 = vsel %vm145, %v1744, %v1746
  %v1748 = vsel %vm145, %v1742, %v1744
  %v1749 = vsel %vm145, %v1740, %v1742
  %v1750 = vsel %vm145, %v1738, %v1740
  %v1751 = vsel %vm145, %v1736, %v1738
  %v1752 = vsel %vm145, %v1746, %v1736
  %1753 = vrot.lane.b32.xlu0 %v1729, 2
  %v1754 = vpop.permute.xlu0 %1753
  %1755 = vrot.lane.b32.xlu0 %v1730, 2
  %v1756 = vpop.permute.xlu0 %1755
  %1757 = vrot.lane.b32.xlu0 %v1731, 2
  %v1758 = vpop.permute.xlu0 %1757
  %1759 = vrot.lane.b32.xlu0 %v1732, 2
  %v1760 = vpop.permute.xlu0 %1759
  %1761 = vrot.lane.b32.xlu0 %v1733, 2
  %v1762 = vpop.permute.xlu0 %1761
  %1763 = vrot.lane.b32.xlu0 %v1734, 2
  %v1764 = vpop.permute.xlu0 %1763
  %v1765 = vsel %vm164, %v1762, %v1764
  %v1766 = vsel %vm164, %v1760, %v1762
  %v1767 = vsel %vm164, %v1758, %v1760
  %v1768 = vsel %vm164, %v1756, %v1758
  %v1769 = vsel %vm164, %v1754, %v1756
  %v1770 = vsel %vm164, %v1764, %v1754
  %v1771 = vsel %vm69, %v1770, %v1729
  %v1772 = vsel %vm70, %v1769, %v1730
  %v1773 = vsel %vm71, %v1768, %v1731
  %v1774 = vsel %vm72, %v1767, %v1732
  %v1775 = vsel %vm73, %v1766, %v1733
  %v1776 = vsel %vm74, %v1765, %v1734
  %v1777 = vsel %vm63, %v1751, %v1771
  %v1778 = vsel %vm64, %v1750, %v1772
  %v1779 = vsel %vm65, %v1749, %v1773
  %v1780 = vsel %vm66, %v1748, %v1774
  %v1781 = vsel %vm67, %v1747, %v1775
  %v1782 = vsel %vm68, %v1752, %v1776
  %1783 = vrot.lane.b32.xlu0 %v1777, 18
  %v1784 = vpop.permute.xlu0 %1783
  %1785 = vrot.lane.b32.xlu0 %v1778, 18
  %v1786 = vpop.permute.xlu0 %1785
  %1787 = vrot.lane.b32.xlu0 %v1779, 18
  %v1788 = vpop.permute.xlu0 %1787
  %1789 = vrot.lane.b32.xlu0 %v1780, 18
  %v1790 = vpop.permute.xlu0 %1789
  %1791 = vrot.lane.b32.xlu0 %v1781, 18
  %v1792 = vpop.permute.xlu0 %1791
  %1793 = vrot.lane.b32.xlu0 %v1782, 18
  %v1794 = vpop.permute.xlu0 %1793
  %v1795 = vsel %vm195, %v1792, %v1794
  %v1796 = vsel %vm195, %v1790, %v1792
  %v1797 = vsel %vm195, %v1788, %v1790
  %v1798 = vsel %vm195, %v1786, %v1788
  %v1799 = vsel %vm195, %v1784, %v1786
  %v1800 = vsel %vm195, %v1794, %v1784
  %1801 = vrot.lane.b32.xlu0 %v1800, 1
  %v1802 = vpop.permute.xlu0 %1801
  %1803 = vrot.lane.b32.xlu0 %v1799, 1
  %v1804 = vpop.permute.xlu0 %1803
  %1805 = vrot.lane.b32.xlu0 %v1798, 1
  %v1806 = vpop.permute.xlu0 %1805
  %1807 = vrot.lane.b32.xlu0 %v1797, 1
  %v1808 = vpop.permute.xlu0 %1807
  %1809 = vrot.lane.b32.xlu0 %v1796, 1
  %v1810 = vpop.permute.xlu0 %1809
  %1811 = vrot.lane.b32.xlu0 %v1795, 1
  %v1812 = vpop.permute.xlu0 %1811
  %v1813 = vsel %vm214, %v1810, %v1812
  %v1814 = vsel %vm214, %v1808, %v1810
  %v1815 = vsel %vm214, %v1806, %v1808
  %v1816 = vsel %vm214, %v1804, %v1806
  %v1817 = vsel %vm214, %v1802, %v1804
  %v1818 = vsel %vm214, %v1812, %v1802
  %1819 = vrot.lane.b32.xlu0 %v1800, 127
  %v1820 = vpop.permute.xlu0 %1819
  %1821 = vrot.lane.b32.xlu0 %v1799, 127
  %v1822 = vpop.permute.xlu0 %1821
  %1823 = vrot.lane.b32.xlu0 %v1798, 127
  %v1824 = vpop.permute.xlu0 %1823
  %1825 = vrot.lane.b32.xlu0 %v1797, 127
  %v1826 = vpop.permute.xlu0 %1825
  %1827 = vrot.lane.b32.xlu0 %v1796, 127
  %v1828 = vpop.permute.xlu0 %1827
  %1829 = vrot.lane.b32.xlu0 %v1795, 127
  %v1830 = vpop.permute.xlu0 %1829
  %v1831 = vsel %vm233, %v1828, %v1830
  %v1832 = vsel %vm233, %v1826, %v1828
  %v1833 = vsel %vm233, %v1824, %v1826
  %v1834 = vsel %vm233, %v1822, %v1824
  %v1835 = vsel %vm233, %v1820, %v1822
  %v1836 = vsel %vm233, %v1830, %v1820
  %1837 = vrot.lane.b32.xlu0 %v1777, 1
  %v1838 = vpop.permute.xlu0 %1837
  %1839 = vrot.lane.b32.xlu0 %v1778, 1
  %v1840 = vpop.permute.xlu0 %1839
  %1841 = vrot.lane.b32.xlu0 %v1779, 1
  %v1842 = vpop.permute.xlu0 %1841
  %1843 = vrot.lane.b32.xlu0 %v1780, 1
  %v1844 = vpop.permute.xlu0 %1843
  %1845 = vrot.lane.b32.xlu0 %v1781, 1
  %v1846 = vpop.permute.xlu0 %1845
  %1847 = vrot.lane.b32.xlu0 %v1782, 1
  %v1848 = vpop.permute.xlu0 %1847
  %v1849 = vsel %vm214, %v1846, %v1848
  %v1850 = vsel %vm214, %v1844, %v1846
  %v1851 = vsel %vm214, %v1842, %v1844
  %v1852 = vsel %vm214, %v1840, %v1842
  %v1853 = vsel %vm214, %v1838, %v1840
  %v1854 = vsel %vm214, %v1848, %v1838
  %1855 = vrot.lane.b32.xlu0 %v1777, 127
  %v1856 = vpop.permute.xlu0 %1855
  %1857 = vrot.lane.b32.xlu0 %v1778, 127
  %v1858 = vpop.permute.xlu0 %1857
  %1859 = vrot.lane.b32.xlu0 %v1779, 127
  %v1860 = vpop.permute.xlu0 %1859
  %1861 = vrot.lane.b32.xlu0 %v1780, 127
  %v1862 = vpop.permute.xlu0 %1861
  %1863 = vrot.lane.b32.xlu0 %v1781, 127
  %v1864 = vpop.permute.xlu0 %1863
  %1865 = vrot.lane.b32.xlu0 %v1782, 127
  %v1866 = vpop.permute.xlu0 %1865
  %v1867 = vsel %vm233, %v1864, %v1866
  %v1868 = vsel %vm233, %v1862, %v1864
  %v1869 = vsel %vm233, %v1860, %v1862
  %v1870 = vsel %vm233, %v1858, %v1860
  %v1871 = vsel %vm233, %v1856, %v1858
  %v1872 = vsel %vm233, %v1866, %v1856
  %1873 = vrot.lane.b32.xlu0 %v1777, 110
  %v1874 = vpop.permute.xlu0 %1873
  %1875 = vrot.lane.b32.xlu0 %v1778, 110
  %v1876 = vpop.permute.xlu0 %1875
  %1877 = vrot.lane.b32.xlu0 %v1779, 110
  %v1878 = vpop.permute.xlu0 %1877
  %1879 = vrot.lane.b32.xlu0 %v1780, 110
  %v1880 = vpop.permute.xlu0 %1879
  %1881 = vrot.lane.b32.xlu0 %v1781, 110
  %v1882 = vpop.permute.xlu0 %1881
  %1883 = vrot.lane.b32.xlu0 %v1782, 110
  %v1884 = vpop.permute.xlu0 %1883
  %v1885 = vsel %vm288, %v1882, %v1884
  %v1886 = vsel %vm288, %v1880, %v1882
  %v1887 = vsel %vm288, %v1878, %v1880
  %v1888 = vsel %vm288, %v1876, %v1878
  %v1889 = vsel %vm288, %v1874, %v1876
  %v1890 = vsel %vm288, %v1884, %v1874
  %1891 = vrot.lane.b32.xlu0 %v1889, 1
  %v1892 = vpop.permute.xlu0 %1891
  %1893 = vrot.lane.b32.xlu0 %v1888, 1
  %v1894 = vpop.permute.xlu0 %1893
  %1895 = vrot.lane.b32.xlu0 %v1887, 1
  %v1896 = vpop.permute.xlu0 %1895
  %1897 = vrot.lane.b32.xlu0 %v1886, 1
  %v1898 = vpop.permute.xlu0 %1897
  %1899 = vrot.lane.b32.xlu0 %v1885, 1
  %v1900 = vpop.permute.xlu0 %1899
  %1901 = vrot.lane.b32.xlu0 %v1890, 1
  %v1902 = vpop.permute.xlu0 %1901
  %v1903 = vsel %vm214, %v1900, %v1902
  %v1904 = vsel %vm214, %v1898, %v1900
  %v1905 = vsel %vm214, %v1896, %v1898
  %v1906 = vsel %vm214, %v1894, %v1896
  %v1907 = vsel %vm214, %v1892, %v1894
  %v1908 = vsel %vm214, %v1902, %v1892
  %1909 = vrot.lane.b32.xlu0 %v1889, 127
  %v1910 = vpop.permute.xlu0 %1909
  %1911 = vrot.lane.b32.xlu0 %v1888, 127
  %v1912 = vpop.permute.xlu0 %1911
  %1913 = vrot.lane.b32.xlu0 %v1887, 127
  %v1914 = vpop.permute.xlu0 %1913
  %1915 = vrot.lane.b32.xlu0 %v1886, 127
  %v1916 = vpop.permute.xlu0 %1915
  %1917 = vrot.lane.b32.xlu0 %v1885, 127
  %v1918 = vpop.permute.xlu0 %1917
  %1919 = vrot.lane.b32.xlu0 %v1890, 127
  %v1920 = vpop.permute.xlu0 %1919
  %v1921 = vsel %vm233, %v1918, %v1920
  %v1922 = vsel %vm233, %v1916, %v1918
  %v1923 = vsel %vm233, %v1914, %v1916
  %v1924 = vsel %vm233, %v1912, %v1914
  %v1925 = vsel %vm233, %v1910, %v1912
  %v1926 = vsel %vm233, %v1920, %v1910
  %v1927 = vpack.c.bf16 %v1800, %v1818
  %v1928 = vpack.c.bf16 %v1799, %v1817
  %v1929 = vpack.c.bf16 %v1798, %v1816
  %v1930 = vpack.c.bf16 %v1797, %v1815
  %v1931 = vpack.c.bf16 %v1796, %v1814
  %v1932 = vpack.c.bf16 %v1795, %v1813
  %v1933 = vpack.c.bf16 %v1854, %v1835
  %v1934 = vpack.c.bf16 %v1853, %v1834
  %v1935 = vpack.c.bf16 %v1852, %v1833
  %v1936 = vpack.c.bf16 %v1851, %v1832
  %v1937 = vpack.c.bf16 %v1850, %v1831
  %v1938 = vpack.c.bf16 %v1849, %v1836
  %v1939 = vpack.c.bf16 %v1871, %v1777
  %v1940 = vpack.c.bf16 %v1870, %v1778
  %v1941 = vpack.c.bf16 %v1869, %v1779
  %v1942 = vpack.c.bf16 %v1868, %v1780
  %v1943 = vpack.c.bf16 %v1867, %v1781
  %v1944 = vpack.c.bf16 %v1872, %v1782
  %v1945 = vpack.c.bf16 %v1889, %v1908
  %v1946 = vpack.c.bf16 %v1888, %v1907
  %v1947 = vpack.c.bf16 %v1887, %v1906
  %v1948 = vpack.c.bf16 %v1886, %v1905
  %v1949 = vpack.c.bf16 %v1885, %v1904
  %v1950 = vpack.c.bf16 %v1890, %v1903
  %v1951 = vpack.c.bf16 %v1925, %v1925
  %v1952 = vpack.c.bf16 %v1924, %v1924
  %v1953 = vpack.c.bf16 %v1923, %v1923
  %v1954 = vpack.c.bf16 %v1922, %v1922
  %v1955 = vpack.c.bf16 %v1921, %v1921
  %v1956 = vpack.c.bf16 %v1926, %v1926
  %s1957 = scalar_lea.vmem %s2, 4
  %v1958 = vld [vmem:[%s1957] sm:$0xf]
  %s1959 = scalar_lea.vmem %s3, 8
  %v1960 = vld [vmem:[%s1959] sm:$0xff]
  %1962 = vset.pattern.permute.xlu0 0
  %1963 = vperm.xlu0 %1962, %v1960
  %v1964 = vpop.permute.xlu0 %1963
  %v1967 = vsel %vm368, %v1958, 0
  %v1970 = vsel %vm372, %v1951, 0
  %v1973 = vsel %vm372, %v1952, 0
  %v1976 = vsel %vm372, %v1953, 0
  %v1979 = vsel %vm372, %v1954, 0
  %v1982 = vsel %vm372, %v1955, 0
  %v1985 = vsel %vm372, %v1956, 0
  %1987 = vmatpush.bf16.msra.mxu0 0
  %1988 = vmatpush.bf16.msra.mxu0 0
  %1989 = vmatpush.bf16.msra.mxu0 0
  %1990 = vmatpush.bf16.msra.mxu0 %v1970
  %1991 = vmatpush.bf16.msra.mxu0 %v1945
  %1992 = vmatpush.bf16.msra.mxu0 %v1939
  %1993 = vmatpush.bf16.msra.mxu0 %v1933
  %1994 = vmatpush.bf16.msra.mxu0 %v1927
  %1995 = vmatmul.bf16.gmra.mxu0 %v1967
  %v1996 = vpop.f32.mrf.mxu0
  %v1997 = vadd.f32 %v1964, %v1996
  %v1998 = vpop.f32.mrf.mxu0
  %1999 = vdwg.mxu0
  %2000 = vmatpush.bf16.msra.mxu0 0
  %2001 = vmatpush.bf16.msra.mxu0 0
  %2002 = vmatpush.bf16.msra.mxu0 0
  %2003 = vmatpush.bf16.msra.mxu0 %v1973
  %2004 = vmatpush.bf16.msra.mxu0 %v1946
  %2005 = vmatpush.bf16.msra.mxu0 %v1940
  %2006 = vmatpush.bf16.msra.mxu0 %v1934
  %2007 = vmatpush.bf16.msra.mxu0 %v1928
  %2008 = vmatmul.bf16.gmra.mxu0 %v1967
  %v2009 = vpop.f32.mrf.mxu0
  %v2010 = vadd.f32 %v1964, %v2009
  %v2011 = vpop.f32.mrf.mxu0
  %2012 = vdwg.mxu0
  %2013 = vmatpush.bf16.msra.mxu0 0
  %2014 = vmatpush.bf16.msra.mxu0 0
  %2015 = vmatpush.bf16.msra.mxu0 0
  %2016 = vmatpush.bf16.msra.mxu0 %v1976
  %2017 = vmatpush.bf16.msra.mxu0 %v1947
  %2018 = vmatpush.bf16.msra.mxu0 %v1941
  %2019 = vmatpush.bf16.msra.mxu0 %v1935
  %2020 = vmatpush.bf16.msra.mxu0 %v1929
  %2021 = vmatmul.bf16.gmra.mxu0 %v1967
  %v2022 = vpop.f32.mrf.mxu0
  %v2023 = vadd.f32 %v1964, %v2022
  %v2024 = vpop.f32.mrf.mxu0
  %2025 = vdwg.mxu0
  %2026 = vmatpush.bf16.msra.mxu0 0
  %2027 = vmatpush.bf16.msra.mxu0 0
  %2028 = vmatpush.bf16.msra.mxu0 0
  %2029 = vmatpush.bf16.msra.mxu0 %v1979
  %2030 = vmatpush.bf16.msra.mxu0 %v1948
  %2031 = vmatpush.bf16.msra.mxu0 %v1942
  %2032 = vmatpush.bf16.msra.mxu0 %v1936
  %2033 = vmatpush.bf16.msra.mxu0 %v1930
  %2034 = vmatmul.bf16.gmra.mxu0 %v1967
  %v2035 = vpop.f32.mrf.mxu0
  %v2036 = vadd.f32 %v1964, %v2035
  %v2037 = vpop.f32.mrf.mxu0
  %2038 = vdwg.mxu0
  %2039 = vmatpush.bf16.msra.mxu0 0
  %2040 = vmatpush.bf16.msra.mxu0 0
  %2041 = vmatpush.bf16.msra.mxu0 0
  %2042 = vmatpush.bf16.msra.mxu0 %v1982
  %2043 = vmatpush.bf16.msra.mxu0 %v1949
  %2044 = vmatpush.bf16.msra.mxu0 %v1943
  %2045 = vmatpush.bf16.msra.mxu0 %v1937
  %2046 = vmatpush.bf16.msra.mxu0 %v1931
  %2047 = vmatmul.bf16.gmra.mxu0 %v1967
  %v2048 = vpop.f32.mrf.mxu0
  %v2049 = vadd.f32 %v1964, %v2048
  %v2050 = vpop.f32.mrf.mxu0
  %2051 = vdwg.mxu0
  %2052 = vmatpush.bf16.msra.mxu0 0
  %2053 = vmatpush.bf16.msra.mxu0 0
  %2054 = vmatpush.bf16.msra.mxu0 0
  %2055 = vmatpush.bf16.msra.mxu0 %v1985
  %2056 = vmatpush.bf16.msra.mxu0 %v1950
  %2057 = vmatpush.bf16.msra.mxu0 %v1944
  %2058 = vmatpush.bf16.msra.mxu0 %v1938
  %2059 = vmatpush.bf16.msra.mxu0 %v1932
  %2060 = vmatmul.bf16.gmra.mxu0 %v1967
  %v2061 = vpop.f32.mrf.mxu0
  %v2062 = vadd.f32 %v1964, %v2061
  %v2063 = vpop.f32.mrf.mxu0
  %2064 = vdwg.mxu0
  %v2065 = vmul.f32 %v1997, 0.5
  %v2066 = vmul.f32 %v2010, 0.5
  %v2067 = vmul.f32 %v2023, 0.5
  %v2068 = vmul.f32 %v2036, 0.5
  %v2069 = vmul.f32 %v2049, 0.5
  %v2070 = vmul.f32 %v2062, 0.5
  %v2071 = vmul.f32 %v1997, %v1997
  %v2072 = vmul.f32 %v2010, %v2010
  %v2073 = vmul.f32 %v2023, %v2023
  %v2074 = vmul.f32 %v2036, %v2036
  %v2075 = vmul.f32 %v2049, %v2049
  %v2076 = vmul.f32 %v2062, %v2062
  %v2077 = vadd.f32 %v2071, 1.0
  %v2078 = vadd.f32 %v2072, 1.0
  %v2079 = vadd.f32 %v2073, 1.0
  %v2080 = vadd.f32 %v2074, 1.0
  %v2081 = vadd.f32 %v2075, 1.0
  %v2082 = vadd.f32 %v2076, 1.0
  %v2083 = vrsqrt.pop %v2077
  %v2084 = vmul.f32 %v2083, %v2077
  %v2085 = vmul.f32 %v2084, %v2083
  %v2086 = vmul.f32 0.5, %v2085
  %v2087 = vsub.f32 1.5, %v2086
  %v2088 = vmul.f32 %v2083, %v2087
  %v2089 = vmul.f32 %v2077, %v2088
  %vm2090 = vcmp.eq.f32.partialorder %v2077, inf
  %v2091 = vsel %vm2090, %v2077, %v2089
  %vm2092 = vcmp.eq.f32.partialorder %v2077, 0.0
  %v2093 = vand.u32 %v2077, 2147483648
  %v2094 = vsel %vm2092, %v2093, %v2091
  %v2095 = vrsqrt.pop %v2078
  %v2096 = vmul.f32 %v2095, %v2078
  %v2097 = vmul.f32 %v2096, %v2095
  %v2098 = vmul.f32 0.5, %v2097
  %v2099 = vsub.f32 1.5, %v2098
  %v2100 = vmul.f32 %v2095, %v2099
  %v2101 = vmul.f32 %v2078, %v2100
  %vm2102 = vcmp.eq.f32.partialorder %v2078, inf
  %v2103 = vsel %vm2102, %v2078, %v2101
  %vm2104 = vcmp.eq.f32.partialorder %v2078, 0.0
  %v2105 = vand.u32 %v2078, 2147483648
  %v2106 = vsel %vm2104, %v2105, %v2103
  %v2107 = vrsqrt.pop %v2079
  %v2108 = vmul.f32 %v2107, %v2079
  %v2109 = vmul.f32 %v2108, %v2107
  %v2110 = vmul.f32 0.5, %v2109
  %v2111 = vsub.f32 1.5, %v2110
  %v2112 = vmul.f32 %v2107, %v2111
  %v2113 = vmul.f32 %v2079, %v2112
  %vm2114 = vcmp.eq.f32.partialorder %v2079, inf
  %v2115 = vsel %vm2114, %v2079, %v2113
  %vm2116 = vcmp.eq.f32.partialorder %v2079, 0.0
  %v2117 = vand.u32 %v2079, 2147483648
  %v2118 = vsel %vm2116, %v2117, %v2115
  %v2119 = vrsqrt.pop %v2080
  %v2120 = vmul.f32 %v2119, %v2080
  %v2121 = vmul.f32 %v2120, %v2119
  %v2122 = vmul.f32 0.5, %v2121
  %v2123 = vsub.f32 1.5, %v2122
  %v2124 = vmul.f32 %v2119, %v2123
  %v2125 = vmul.f32 %v2080, %v2124
  %vm2126 = vcmp.eq.f32.partialorder %v2080, inf
  %v2127 = vsel %vm2126, %v2080, %v2125
  %vm2128 = vcmp.eq.f32.partialorder %v2080, 0.0
  %v2129 = vand.u32 %v2080, 2147483648
  %v2130 = vsel %vm2128, %v2129, %v2127
  %v2131 = vrsqrt.pop %v2081
  %v2132 = vmul.f32 %v2131, %v2081
  %v2133 = vmul.f32 %v2132, %v2131
  %v2134 = vmul.f32 0.5, %v2133
  %v2135 = vsub.f32 1.5, %v2134
  %v2136 = vmul.f32 %v2131, %v2135
  %v2137 = vmul.f32 %v2081, %v2136
  %vm2138 = vcmp.eq.f32.partialorder %v2081, inf
  %v2139 = vsel %vm2138, %v2081, %v2137
  %vm2140 = vcmp.eq.f32.partialorder %v2081, 0.0
  %v2141 = vand.u32 %v2081, 2147483648
  %v2142 = vsel %vm2140, %v2141, %v2139
  %v2143 = vrsqrt.pop %v2082
  %v2144 = vmul.f32 %v2143, %v2082
  %v2145 = vmul.f32 %v2144, %v2143
  %v2146 = vmul.f32 0.5, %v2145
  %v2147 = vsub.f32 1.5, %v2146
  %v2148 = vmul.f32 %v2143, %v2147
  %v2149 = vmul.f32 %v2082, %v2148
  %vm2150 = vcmp.eq.f32.partialorder %v2082, inf
  %v2151 = vsel %vm2150, %v2082, %v2149
  %vm2152 = vcmp.eq.f32.partialorder %v2082, 0.0
  %v2153 = vand.u32 %v2082, 2147483648
  %v2154 = vsel %vm2152, %v2153, %v2151
  %v2155 = vmul.f32 %v2094, 0.5
  %v2156 = vmul.f32 %v2106, 0.5
  %v2157 = vmul.f32 %v2118, 0.5
  %v2158 = vmul.f32 %v2130, 0.5
  %v2159 = vmul.f32 %v2142, 0.5
  %v2160 = vmul.f32 %v2154, 0.5
  %v2161 = vadd.f32 %v2065, %v2155
  %v2162 = vadd.f32 %v2066, %v2156
  %v2163 = vadd.f32 %v2067, %v2157
  %v2164 = vadd.f32 %v2068, %v2158
  %v2165 = vadd.f32 %v2069, %v2159
  %v2166 = vadd.f32 %v2070, %v2160
  %v2167 = vsub.f32 %v2161, 0.5
  %v2168 = vsub.f32 %v2162, 0.5
  %v2169 = vsub.f32 %v2163, 0.5
  %v2170 = vsub.f32 %v2164, 0.5
  %v2171 = vsub.f32 %v2165, 0.5
  %v2172 = vsub.f32 %v2166, 0.5
  %2173 = vrot.lane.b32.xlu0 %v2167, 92
  %v2174 = vpop.permute.xlu0 %2173
  %2175 = vrot.lane.b32.xlu0 %v2168, 92
  %v2176 = vpop.permute.xlu0 %2175
  %2177 = vrot.lane.b32.xlu0 %v2169, 92
  %v2178 = vpop.permute.xlu0 %2177
  %2179 = vrot.lane.b32.xlu0 %v2170, 92
  %v2180 = vpop.permute.xlu0 %2179
  %2181 = vrot.lane.b32.xlu0 %v2171, 92
  %v2182 = vpop.permute.xlu0 %2181
  %2183 = vrot.lane.b32.xlu0 %v2172, 92
  %v2184 = vpop.permute.xlu0 %2183
  %v2185 = vsel %vm95, %v2182, %v2184
  %v2186 = vsel %vm95, %v2180, %v2182
  %v2187 = vsel %vm95, %v2178, %v2180
  %v2188 = vsel %vm95, %v2176, %v2178
  %v2189 = vsel %vm95, %v2174, %v2176
  %v2190 = vsel %vm95, %v2184, %v2174
  %2191 = vrot.lane.b32.xlu0 %v2167, 36
  %v2192 = vpop.permute.xlu0 %2191
  %2193 = vrot.lane.b32.xlu0 %v2168, 36
  %v2194 = vpop.permute.xlu0 %2193
  %2195 = vrot.lane.b32.xlu0 %v2169, 36
  %v2196 = vpop.permute.xlu0 %2195
  %2197 = vrot.lane.b32.xlu0 %v2170, 36
  %v2198 = vpop.permute.xlu0 %2197
  %2199 = vrot.lane.b32.xlu0 %v2171, 36
  %v2200 = vpop.permute.xlu0 %2199
  %2201 = vrot.lane.b32.xlu0 %v2172, 36
  %v2202 = vpop.permute.xlu0 %2201
  %v2203 = vsel %vm114, %v2200, %v2202
  %v2204 = vsel %vm114, %v2198, %v2200
  %v2205 = vsel %vm114, %v2196, %v2198
  %v2206 = vsel %vm114, %v2194, %v2196
  %v2207 = vsel %vm114, %v2192, %v2194
  %v2208 = vsel %vm114, %v2202, %v2192
  %v2209 = vsel %vm57, %v2208, %v2167
  %v2210 = vsel %vm58, %v2207, %v2168
  %v2211 = vsel %vm59, %v2206, %v2169
  %v2212 = vsel %vm60, %v2205, %v2170
  %v2213 = vsel %vm61, %v2204, %v2171
  %v2214 = vsel %vm62, %v2203, %v2172
  %v2215 = vsel %vm51, %v2189, %v2209
  %v2216 = vsel %vm52, %v2188, %v2210
  %v2217 = vsel %vm53, %v2187, %v2211
  %v2218 = vsel %vm54, %v2186, %v2212
  %v2219 = vsel %vm55, %v2185, %v2213
  %v2220 = vsel %vm56, %v2190, %v2214
  %2221 = vrot.lane.b32.xlu0 %v2215, 126
  %v2222 = vpop.permute.xlu0 %2221
  %2223 = vrot.lane.b32.xlu0 %v2216, 126
  %v2224 = vpop.permute.xlu0 %2223
  %2225 = vrot.lane.b32.xlu0 %v2217, 126
  %v2226 = vpop.permute.xlu0 %2225
  %2227 = vrot.lane.b32.xlu0 %v2218, 126
  %v2228 = vpop.permute.xlu0 %2227
  %2229 = vrot.lane.b32.xlu0 %v2219, 126
  %v2230 = vpop.permute.xlu0 %2229
  %2231 = vrot.lane.b32.xlu0 %v2220, 126
  %v2232 = vpop.permute.xlu0 %2231
  %v2233 = vsel %vm145, %v2230, %v2232
  %v2234 = vsel %vm145, %v2228, %v2230
  %v2235 = vsel %vm145, %v2226, %v2228
  %v2236 = vsel %vm145, %v2224, %v2226
  %v2237 = vsel %vm145, %v2222, %v2224
  %v2238 = vsel %vm145, %v2232, %v2222
  %2239 = vrot.lane.b32.xlu0 %v2215, 2
  %v2240 = vpop.permute.xlu0 %2239
  %2241 = vrot.lane.b32.xlu0 %v2216, 2
  %v2242 = vpop.permute.xlu0 %2241
  %2243 = vrot.lane.b32.xlu0 %v2217, 2
  %v2244 = vpop.permute.xlu0 %2243
  %2245 = vrot.lane.b32.xlu0 %v2218, 2
  %v2246 = vpop.permute.xlu0 %2245
  %2247 = vrot.lane.b32.xlu0 %v2219, 2
  %v2248 = vpop.permute.xlu0 %2247
  %2249 = vrot.lane.b32.xlu0 %v2220, 2
  %v2250 = vpop.permute.xlu0 %2249
  %v2251 = vsel %vm164, %v2248, %v2250
  %v2252 = vsel %vm164, %v2246, %v2248
  %v2253 = vsel %vm164, %v2244, %v2246
  %v2254 = vsel %vm164, %v2242, %v2244
  %v2255 = vsel %vm164, %v2240, %v2242
  %v2256 = vsel %vm164, %v2250, %v2240
  %v2257 = vsel %vm69, %v2256, %v2215
  %v2258 = vsel %vm70, %v2255, %v2216
  %v2259 = vsel %vm71, %v2254, %v2217
  %v2260 = vsel %vm72, %v2253, %v2218
  %v2261 = vsel %vm73, %v2252, %v2219
  %v2262 = vsel %vm74, %v2251, %v2220
  %v2263 = vsel %vm63, %v2237, %v2257
  %v2264 = vsel %vm64, %v2236, %v2258
  %v2265 = vsel %vm65, %v2235, %v2259
  %v2266 = vsel %vm66, %v2234, %v2260
  %v2267 = vsel %vm67, %v2233, %v2261
  %v2268 = vsel %vm68, %v2238, %v2262
  %2269 = vrot.lane.b32.xlu0 %v2263, 18
  %v2270 = vpop.permute.xlu0 %2269
  %2271 = vrot.lane.b32.xlu0 %v2264, 18
  %v2272 = vpop.permute.xlu0 %2271
  %2273 = vrot.lane.b32.xlu0 %v2265, 18
  %v2274 = vpop.permute.xlu0 %2273
  %2275 = vrot.lane.b32.xlu0 %v2266, 18
  %v2276 = vpop.permute.xlu0 %2275
  %2277 = vrot.lane.b32.xlu0 %v2267, 18
  %v2278 = vpop.permute.xlu0 %2277
  %2279 = vrot.lane.b32.xlu0 %v2268, 18
  %v2280 = vpop.permute.xlu0 %2279
  %v2281 = vsel %vm195, %v2278, %v2280
  %v2282 = vsel %vm195, %v2276, %v2278
  %v2283 = vsel %vm195, %v2274, %v2276
  %v2284 = vsel %vm195, %v2272, %v2274
  %v2285 = vsel %vm195, %v2270, %v2272
  %v2286 = vsel %vm195, %v2280, %v2270
  %2287 = vrot.lane.b32.xlu0 %v2286, 1
  %v2288 = vpop.permute.xlu0 %2287
  %2289 = vrot.lane.b32.xlu0 %v2285, 1
  %v2290 = vpop.permute.xlu0 %2289
  %2291 = vrot.lane.b32.xlu0 %v2284, 1
  %v2292 = vpop.permute.xlu0 %2291
  %2293 = vrot.lane.b32.xlu0 %v2283, 1
  %v2294 = vpop.permute.xlu0 %2293
  %2295 = vrot.lane.b32.xlu0 %v2282, 1
  %v2296 = vpop.permute.xlu0 %2295
  %2297 = vrot.lane.b32.xlu0 %v2281, 1
  %v2298 = vpop.permute.xlu0 %2297
  %v2299 = vsel %vm214, %v2296, %v2298
  %v2300 = vsel %vm214, %v2294, %v2296
  %v2301 = vsel %vm214, %v2292, %v2294
  %v2302 = vsel %vm214, %v2290, %v2292
  %v2303 = vsel %vm214, %v2288, %v2290
  %v2304 = vsel %vm214, %v2298, %v2288
  %2305 = vrot.lane.b32.xlu0 %v2286, 127
  %v2306 = vpop.permute.xlu0 %2305
  %2307 = vrot.lane.b32.xlu0 %v2285, 127
  %v2308 = vpop.permute.xlu0 %2307
  %2309 = vrot.lane.b32.xlu0 %v2284, 127
  %v2310 = vpop.permute.xlu0 %2309
  %2311 = vrot.lane.b32.xlu0 %v2283, 127
  %v2312 = vpop.permute.xlu0 %2311
  %2313 = vrot.lane.b32.xlu0 %v2282, 127
  %v2314 = vpop.permute.xlu0 %2313
  %2315 = vrot.lane.b32.xlu0 %v2281, 127
  %v2316 = vpop.permute.xlu0 %2315
  %v2317 = vsel %vm233, %v2314, %v2316
  %v2318 = vsel %vm233, %v2312, %v2314
  %v2319 = vsel %vm233, %v2310, %v2312
  %v2320 = vsel %vm233, %v2308, %v2310
  %v2321 = vsel %vm233, %v2306, %v2308
  %v2322 = vsel %vm233, %v2316, %v2306
  %2323 = vrot.lane.b32.xlu0 %v2263, 1
  %v2324 = vpop.permute.xlu0 %2323
  %2325 = vrot.lane.b32.xlu0 %v2264, 1
  %v2326 = vpop.permute.xlu0 %2325
  %2327 = vrot.lane.b32.xlu0 %v2265, 1
  %v2328 = vpop.permute.xlu0 %2327
  %2329 = vrot.lane.b32.xlu0 %v2266, 1
  %v2330 = vpop.permute.xlu0 %2329
  %2331 = vrot.lane.b32.xlu0 %v2267, 1
  %v2332 = vpop.permute.xlu0 %2331
  %2333 = vrot.lane.b32.xlu0 %v2268, 1
  %v2334 = vpop.permute.xlu0 %2333
  %v2335 = vsel %vm214, %v2332, %v2334
  %v2336 = vsel %vm214, %v2330, %v2332
  %v2337 = vsel %vm214, %v2328, %v2330
  %v2338 = vsel %vm214, %v2326, %v2328
  %v2339 = vsel %vm214, %v2324, %v2326
  %v2340 = vsel %vm214, %v2334, %v2324
  %2341 = vrot.lane.b32.xlu0 %v2263, 127
  %v2342 = vpop.permute.xlu0 %2341
  %2343 = vrot.lane.b32.xlu0 %v2264, 127
  %v2344 = vpop.permute.xlu0 %2343
  %2345 = vrot.lane.b32.xlu0 %v2265, 127
  %v2346 = vpop.permute.xlu0 %2345
  %2347 = vrot.lane.b32.xlu0 %v2266, 127
  %v2348 = vpop.permute.xlu0 %2347
  %2349 = vrot.lane.b32.xlu0 %v2267, 127
  %v2350 = vpop.permute.xlu0 %2349
  %2351 = vrot.lane.b32.xlu0 %v2268, 127
  %v2352 = vpop.permute.xlu0 %2351
  %v2353 = vsel %vm233, %v2350, %v2352
  %v2354 = vsel %vm233, %v2348, %v2350
  %v2355 = vsel %vm233, %v2346, %v2348
  %v2356 = vsel %vm233, %v2344, %v2346
  %v2357 = vsel %vm233, %v2342, %v2344
  %v2358 = vsel %vm233, %v2352, %v2342
  %2359 = vrot.lane.b32.xlu0 %v2263, 110
  %v2360 = vpop.permute.xlu0 %2359
  %2361 = vrot.lane.b32.xlu0 %v2264, 110
  %v2362 = vpop.permute.xlu0 %2361
  %2363 = vrot.lane.b32.xlu0 %v2265, 110
  %v2364 = vpop.permute.xlu0 %2363
  %2365 = vrot.lane.b32.xlu0 %v2266, 110
  %v2366 = vpop.permute.xlu0 %2365
  %2367 = vrot.lane.b32.xlu0 %v2267, 110
  %v2368 = vpop.permute.xlu0 %2367
  %2369 = vrot.lane.b32.xlu0 %v2268, 110
  %v2370 = vpop.permute.xlu0 %2369
  %v2371 = vsel %vm288, %v2368, %v2370
  %v2372 = vsel %vm288, %v2366, %v2368
  %v2373 = vsel %vm288, %v2364, %v2366
  %v2374 = vsel %vm288, %v2362, %v2364
  %v2375 = vsel %vm288, %v2360, %v2362
  %v2376 = vsel %vm288, %v2370, %v2360
  %2377 = vrot.lane.b32.xlu0 %v2375, 1
  %v2378 = vpop.permute.xlu0 %2377
  %2379 = vrot.lane.b32.xlu0 %v2374, 1
  %v2380 = vpop.permute.xlu0 %2379
  %2381 = vrot.lane.b32.xlu0 %v2373, 1
  %v2382 = vpop.permute.xlu0 %2381
  %2383 = vrot.lane.b32.xlu0 %v2372, 1
  %v2384 = vpop.permute.xlu0 %2383
  %2385 = vrot.lane.b32.xlu0 %v2371, 1
  %v2386 = vpop.permute.xlu0 %2385
  %2387 = vrot.lane.b32.xlu0 %v2376, 1
  %v2388 = vpop.permute.xlu0 %2387
  %v2389 = vsel %vm214, %v2386, %v2388
  %v2390 = vsel %vm214, %v2384, %v2386
  %v2391 = vsel %vm214, %v2382, %v2384
  %v2392 = vsel %vm214, %v2380, %v2382
  %v2393 = vsel %vm214, %v2378, %v2380
  %v2394 = vsel %vm214, %v2388, %v2378
  %2395 = vrot.lane.b32.xlu0 %v2375, 127
  %v2396 = vpop.permute.xlu0 %2395
  %2397 = vrot.lane.b32.xlu0 %v2374, 127
  %v2398 = vpop.permute.xlu0 %2397
  %2399 = vrot.lane.b32.xlu0 %v2373, 127
  %v2400 = vpop.permute.xlu0 %2399
  %2401 = vrot.lane.b32.xlu0 %v2372, 127
  %v2402 = vpop.permute.xlu0 %2401
  %2403 = vrot.lane.b32.xlu0 %v2371, 127
  %v2404 = vpop.permute.xlu0 %2403
  %2405 = vrot.lane.b32.xlu0 %v2376, 127
  %v2406 = vpop.permute.xlu0 %2405
  %v2407 = vsel %vm233, %v2404, %v2406
  %v2408 = vsel %vm233, %v2402, %v2404
  %v2409 = vsel %vm233, %v2400, %v2402
  %v2410 = vsel %vm233, %v2398, %v2400
  %v2411 = vsel %vm233, %v2396, %v2398
  %v2412 = vsel %vm233, %v2406, %v2396
  %v2413 = vpack.c.bf16 %v2286, %v2304
  %v2414 = vpack.c.bf16 %v2285, %v2303
  %v2415 = vpack.c.bf16 %v2284, %v2302
  %v2416 = vpack.c.bf16 %v2283, %v2301
  %v2417 = vpack.c.bf16 %v2282, %v2300
  %v2418 = vpack.c.bf16 %v2281, %v2299
  %v2419 = vpack.c.bf16 %v2340, %v2321
  %v2420 = vpack.c.bf16 %v2339, %v2320
  %v2421 = vpack.c.bf16 %v2338, %v2319
  %v2422 = vpack.c.bf16 %v2337, %v2318
  %v2423 = vpack.c.bf16 %v2336, %v2317
  %v2424 = vpack.c.bf16 %v2335, %v2322
  %v2425 = vpack.c.bf16 %v2357, %v2263
  %v2426 = vpack.c.bf16 %v2356, %v2264
  %v2427 = vpack.c.bf16 %v2355, %v2265
  %v2428 = vpack.c.bf16 %v2354, %v2266
  %v2429 = vpack.c.bf16 %v2353, %v2267
  %v2430 = vpack.c.bf16 %v2358, %v2268
  %v2431 = vpack.c.bf16 %v2375, %v2394
  %v2432 = vpack.c.bf16 %v2374, %v2393
  %v2433 = vpack.c.bf16 %v2373, %v2392
  %v2434 = vpack.c.bf16 %v2372, %v2391
  %v2435 = vpack.c.bf16 %v2371, %v2390
  %v2436 = vpack.c.bf16 %v2376, %v2389
  %v2437 = vpack.c.bf16 %v2411, %v2411
  %v2438 = vpack.c.bf16 %v2410, %v2410
  %v2439 = vpack.c.bf16 %v2409, %v2409
  %v2440 = vpack.c.bf16 %v2408, %v2408
  %v2441 = vpack.c.bf16 %v2407, %v2407
  %v2442 = vpack.c.bf16 %v2412, %v2412
  %s2443 = scalar_lea.vmem %s4, 4
  %v2444 = vld [vmem:[%s2443] sm:$0xf]
  %s2445 = scalar_lea.vmem %s5, 8
  %v2446 = vld [vmem:[%s2445] sm:$0xff]
  %2448 = vset.pattern.permute.xlu0 0
  %2449 = vperm.xlu0 %2448, %v2446
  %v2450 = vpop.permute.xlu0 %2449
  %v2453 = vsel %vm368, %v2444, 0
  %v2456 = vsel %vm372, %v2437, 0
  %v2459 = vsel %vm372, %v2438, 0
  %v2462 = vsel %vm372, %v2439, 0
  %v2465 = vsel %vm372, %v2440, 0
  %v2468 = vsel %vm372, %v2441, 0
  %v2471 = vsel %vm372, %v2442, 0
  %2473 = vmatpush.bf16.msra.mxu0 0
  %2474 = vmatpush.bf16.msra.mxu0 0
  %2475 = vmatpush.bf16.msra.mxu0 0
  %2476 = vmatpush.bf16.msra.mxu0 %v2456
  %2477 = vmatpush.bf16.msra.mxu0 %v2431
  %2478 = vmatpush.bf16.msra.mxu0 %v2425
  %2479 = vmatpush.bf16.msra.mxu0 %v2419
  %2480 = vmatpush.bf16.msra.mxu0 %v2413
  %2481 = vmatmul.bf16.gmra.mxu0 %v2453
  %v2482 = vpop.f32.mrf.mxu0
  %v2483 = vadd.f32 %v2450, %v2482
  %v2484 = vpop.f32.mrf.mxu0
  %2485 = vdwg.mxu0
  %2486 = vmatpush.bf16.msra.mxu0 0
  %2487 = vmatpush.bf16.msra.mxu0 0
  %2488 = vmatpush.bf16.msra.mxu0 0
  %2489 = vmatpush.bf16.msra.mxu0 %v2459
  %2490 = vmatpush.bf16.msra.mxu0 %v2432
  %2491 = vmatpush.bf16.msra.mxu0 %v2426
  %2492 = vmatpush.bf16.msra.mxu0 %v2420
  %2493 = vmatpush.bf16.msra.mxu0 %v2414
  %2494 = vmatmul.bf16.gmra.mxu0 %v2453
  %v2495 = vpop.f32.mrf.mxu0
  %v2496 = vadd.f32 %v2450, %v2495
  %v2497 = vpop.f32.mrf.mxu0
  %2498 = vdwg.mxu0
  %2499 = vmatpush.bf16.msra.mxu0 0
  %2500 = vmatpush.bf16.msra.mxu0 0
  %2501 = vmatpush.bf16.msra.mxu0 0
  %2502 = vmatpush.bf16.msra.mxu0 %v2462
  %2503 = vmatpush.bf16.msra.mxu0 %v2433
  %2504 = vmatpush.bf16.msra.mxu0 %v2427
  %2505 = vmatpush.bf16.msra.mxu0 %v2421
  %2506 = vmatpush.bf16.msra.mxu0 %v2415
  %2507 = vmatmul.bf16.gmra.mxu0 %v2453
  %v2508 = vpop.f32.mrf.mxu0
  %v2509 = vadd.f32 %v2450, %v2508
  %v2510 = vpop.f32.mrf.mxu0
  %2511 = vdwg.mxu0
  %2512 = vmatpush.bf16.msra.mxu0 0
  %2513 = vmatpush.bf16.msra.mxu0 0
  %2514 = vmatpush.bf16.msra.mxu0 0
  %2515 = vmatpush.bf16.msra.mxu0 %v2465
  %2516 = vmatpush.bf16.msra.mxu0 %v2434
  %2517 = vmatpush.bf16.msra.mxu0 %v2428
  %2518 = vmatpush.bf16.msra.mxu0 %v2422
  %2519 = vmatpush.bf16.msra.mxu0 %v2416
  %2520 = vmatmul.bf16.gmra.mxu0 %v2453
  %v2521 = vpop.f32.mrf.mxu0
  %v2522 = vadd.f32 %v2450, %v2521
  %v2523 = vpop.f32.mrf.mxu0
  %2524 = vdwg.mxu0
  %2525 = vmatpush.bf16.msra.mxu0 0
  %2526 = vmatpush.bf16.msra.mxu0 0
  %2527 = vmatpush.bf16.msra.mxu0 0
  %2528 = vmatpush.bf16.msra.mxu0 %v2468
  %2529 = vmatpush.bf16.msra.mxu0 %v2435
  %2530 = vmatpush.bf16.msra.mxu0 %v2429
  %2531 = vmatpush.bf16.msra.mxu0 %v2423
  %2532 = vmatpush.bf16.msra.mxu0 %v2417
  %2533 = vmatmul.bf16.gmra.mxu0 %v2453
  %v2534 = vpop.f32.mrf.mxu0
  %v2535 = vadd.f32 %v2450, %v2534
  %v2536 = vpop.f32.mrf.mxu0
  %2537 = vdwg.mxu0
  %2538 = vmatpush.bf16.msra.mxu0 0
  %2539 = vmatpush.bf16.msra.mxu0 0
  %2540 = vmatpush.bf16.msra.mxu0 0
  %2541 = vmatpush.bf16.msra.mxu0 %v2471
  %2542 = vmatpush.bf16.msra.mxu0 %v2436
  %2543 = vmatpush.bf16.msra.mxu0 %v2430
  %2544 = vmatpush.bf16.msra.mxu0 %v2424
  %2545 = vmatpush.bf16.msra.mxu0 %v2418
  %2546 = vmatmul.bf16.gmra.mxu0 %v2453
  %v2547 = vpop.f32.mrf.mxu0
  %v2548 = vadd.f32 %v2450, %v2547
  %v2549 = vpop.f32.mrf.mxu0
  %2550 = vdwg.mxu0
  %v2551 = vadd.f32 %v1777, %v2483
  %v2552 = vadd.f32 %v1778, %v2496
  %v2553 = vadd.f32 %v1779, %v2509
  %v2554 = vadd.f32 %v1780, %v2522
  %v2555 = vadd.f32 %v1781, %v2535
  %v2556 = vadd.f32 %v1782, %v2548
  %s2557 = scalar_lea.vmem %s6, 16
  %v2558 = vld [vmem:[%s2557] sm:$0xf]
  %v2559 = vld [vmem:[%s2557 + $0x4] sm:$0xf]
  %v2560 = vld [vmem:[%s2557 + $0x8] sm:$0xf]
  %v2561 = vld [vmem:[%s2557 + $0xc] sm:$0xf]
  %v2562 = vpack.c.bf16 %v2551, %v2551
  %v2563 = vpack.c.bf16 %v2552, %v2552
  %v2564 = vpack.c.bf16 %v2553, %v2553
  %v2565 = vpack.c.bf16 %v2554, %v2554
  %v2566 = vpack.c.bf16 %v2555, %v2555
  %v2567 = vpack.c.bf16 %v2556, %v2556
  %s2568 = scalar_lea.vmem %s7, 32
  %v2569 = vld [vmem:[%s2568] sm:$0xff]
  %v2570 = vld [vmem:[%s2568 + $0x8] sm:$0xff]
  %v2571 = vld [vmem:[%s2568 + $0x10] sm:$0xff]
  %v2572 = vld [vmem:[%s2568 + $0x18] sm:$0xff]
  %2574 = vset.pattern.permute.xlu0 0
  %2575 = vperm.xlu0 %2574, %v2569
  %v2576 = vpop.permute.xlu0 %2575
  %2579 = vset.pattern.permute.xlu0 0
  %2580 = vperm.xlu0 %2579, %v2570
  %v2581 = vpop.permute.xlu0 %2580
  %2584 = vset.pattern.permute.xlu0 0
  %2585 = vperm.xlu0 %2584, %v2571
  %v2586 = vpop.permute.xlu0 %2585
  %2589 = vset.pattern.permute.xlu0 0
  %2590 = vperm.xlu0 %2589, %v2572
  %v2591 = vpop.permute.xlu0 %2590
  %v2597 = vunpack.c.l.b16 %v2558
  %v2598 = vunpack.c.l.b16 %v2559
  %v2599 = vunpack.c.l.b16 %v2560
  %v2600 = vunpack.c.l.b16 %v2561
  %v2601 = vpack.c.b16 %v2598, %v2597
  %v2602 = vpack.c.b16 %v2600, %v2599
  %v2604 = vsel %vm1003, %v2601, 0
  %v2607 = vsel %vm1003, %v2602, 0
  %v2610 = vsel %vm372, %v2562, 0
  %v2613 = vsel %vm372, %v2563, 0
  %v2616 = vsel %vm372, %v2564, 0
  %v2619 = vsel %vm372, %v2565, 0
  %v2622 = vsel %vm372, %v2566, 0
  %v2625 = vsel %vm372, %v2567, 0
  %2627 = vmatpush.bf16.msra.mxu0 0
  %2628 = vmatpush.bf16.msra.mxu0 0
  %2629 = vmatpush.bf16.msra.mxu0 0
  %2630 = vmatpush.bf16.msra.mxu0 0
  %2631 = vmatpush.bf16.msra.mxu0 0
  %2632 = vmatpush.bf16.msra.mxu0 0
  %2633 = vmatpush.bf16.msra.mxu0 0
  %2634 = vmatpush.bf16.msra.mxu0 %v2610
  %2635 = vmatmul.bf16.gmra.mxu0 %v2604
  %v2636 = vpop.f32.mrf.mxu0
  %v2637 = vadd.f32 %v2576, %v2636
  %v2638 = vpop.f32.mrf.mxu0
  %v2639 = vadd.f32 %v2581, %v2638
  %2640 = vmatmul.bf16.gmra.mxu0 %v2607
  %v2641 = vpop.f32.mrf.mxu0
  %v2642 = vadd.f32 %v2586, %v2641
  %v2643 = vpop.f32.mrf.mxu0
  %v2644 = vadd.f32 %v2591, %v2643
  %2645 = vdwg.mxu0
  %2646 = vmatpush.bf16.msra.mxu0 0
  %2647 = vmatpush.bf16.msra.mxu0 0
  %2648 = vmatpush.bf16.msra.mxu0 0
  %2649 = vmatpush.bf16.msra.mxu0 0
  %2650 = vmatpush.bf16.msra.mxu0 0
  %2651 = vmatpush.bf16.msra.mxu0 0
  %2652 = vmatpush.bf16.msra.mxu0 0
  %2653 = vmatpush.bf16.msra.mxu0 %v2613
  %2654 = vmatmul.bf16.gmra.mxu0 %v2604
  %v2655 = vpop.f32.mrf.mxu0
  %v2656 = vadd.f32 %v2576, %v2655
  %v2657 = vpop.f32.mrf.mxu0
  %v2658 = vadd.f32 %v2581, %v2657
  %2659 = vmatmul.bf16.gmra.mxu0 %v2607
  %v2660 = vpop.f32.mrf.mxu0
  %v2661 = vadd.f32 %v2586, %v2660
  %v2662 = vpop.f32.mrf.mxu0
  %v2663 = vadd.f32 %v2591, %v2662
  %2664 = vdwg.mxu0
  %2665 = vmatpush.bf16.msra.mxu0 0
  %2666 = vmatpush.bf16.msra.mxu0 0
  %2667 = vmatpush.bf16.msra.mxu0 0
  %2668 = vmatpush.bf16.msra.mxu0 0
  %2669 = vmatpush.bf16.msra.mxu0 0
  %2670 = vmatpush.bf16.msra.mxu0 0
  %2671 = vmatpush.bf16.msra.mxu0 0
  %2672 = vmatpush.bf16.msra.mxu0 %v2616
  %2673 = vmatmul.bf16.gmra.mxu0 %v2604
  %v2674 = vpop.f32.mrf.mxu0
  %v2675 = vadd.f32 %v2576, %v2674
  %v2676 = vpop.f32.mrf.mxu0
  %v2677 = vadd.f32 %v2581, %v2676
  %2678 = vmatmul.bf16.gmra.mxu0 %v2607
  %v2679 = vpop.f32.mrf.mxu0
  %v2680 = vadd.f32 %v2586, %v2679
  %v2681 = vpop.f32.mrf.mxu0
  %v2682 = vadd.f32 %v2591, %v2681
  %2683 = vdwg.mxu0
  %2684 = vmatpush.bf16.msra.mxu0 0
  %2685 = vmatpush.bf16.msra.mxu0 0
  %2686 = vmatpush.bf16.msra.mxu0 0
  %2687 = vmatpush.bf16.msra.mxu0 0
  %2688 = vmatpush.bf16.msra.mxu0 0
  %2689 = vmatpush.bf16.msra.mxu0 0
  %2690 = vmatpush.bf16.msra.mxu0 0
  %2691 = vmatpush.bf16.msra.mxu0 %v2619
  %2692 = vmatmul.bf16.gmra.mxu0 %v2604
  %v2693 = vpop.f32.mrf.mxu0
  %v2694 = vadd.f32 %v2576, %v2693
  %v2695 = vpop.f32.mrf.mxu0
  %v2696 = vadd.f32 %v2581, %v2695
  %2697 = vmatmul.bf16.gmra.mxu0 %v2607
  %v2698 = vpop.f32.mrf.mxu0
  %v2699 = vadd.f32 %v2586, %v2698
  %v2700 = vpop.f32.mrf.mxu0
  %v2701 = vadd.f32 %v2591, %v2700
  %2702 = vdwg.mxu0
  %2703 = vmatpush.bf16.msra.mxu0 0
  %2704 = vmatpush.bf16.msra.mxu0 0
  %2705 = vmatpush.bf16.msra.mxu0 0
  %2706 = vmatpush.bf16.msra.mxu0 0
  %2707 = vmatpush.bf16.msra.mxu0 0
  %2708 = vmatpush.bf16.msra.mxu0 0
  %2709 = vmatpush.bf16.msra.mxu0 0
  %2710 = vmatpush.bf16.msra.mxu0 %v2622
  %2711 = vmatmul.bf16.gmra.mxu0 %v2604
  %v2712 = vpop.f32.mrf.mxu0
  %v2713 = vadd.f32 %v2576, %v2712
  %v2714 = vpop.f32.mrf.mxu0
  %v2715 = vadd.f32 %v2581, %v2714
  %2716 = vmatmul.bf16.gmra.mxu0 %v2607
  %v2717 = vpop.f32.mrf.mxu0
  %v2718 = vadd.f32 %v2586, %v2717
  %v2719 = vpop.f32.mrf.mxu0
  %v2720 = vadd.f32 %v2591, %v2719
  %2721 = vdwg.mxu0
  %2722 = vmatpush.bf16.msra.mxu0 0
  %2723 = vmatpush.bf16.msra.mxu0 0
  %2724 = vmatpush.bf16.msra.mxu0 0
  %2725 = vmatpush.bf16.msra.mxu0 0
  %2726 = vmatpush.bf16.msra.mxu0 0
  %2727 = vmatpush.bf16.msra.mxu0 0
  %2728 = vmatpush.bf16.msra.mxu0 0
  %2729 = vmatpush.bf16.msra.mxu0 %v2625
  %2730 = vmatmul.bf16.gmra.mxu0 %v2604
  %v2731 = vpop.f32.mrf.mxu0
  %v2732 = vadd.f32 %v2576, %v2731
  %v2733 = vpop.f32.mrf.mxu0
  %v2734 = vadd.f32 %v2581, %v2733
  %2735 = vmatmul.bf16.gmra.mxu0 %v2607
  %v2736 = vpop.f32.mrf.mxu0
  %v2737 = vadd.f32 %v2586, %v2736
  %v2738 = vpop.f32.mrf.mxu0
  %v2739 = vadd.f32 %v2591, %v2738
  %2740 = vdwg.mxu0
  %v2741 = vmul.f32 %v2637, 0.5
  %v2742 = vmul.f32 %v2656, 0.5
  %v2743 = vmul.f32 %v2675, 0.5
  %v2744 = vmul.f32 %v2694, 0.5
  %v2745 = vmul.f32 %v2713, 0.5
  %v2746 = vmul.f32 %v2732, 0.5
  %v2747 = vmul.f32 %v2639, 0.5
  %v2748 = vmul.f32 %v2658, 0.5
  %v2749 = vmul.f32 %v2677, 0.5
  %v2750 = vmul.f32 %v2696, 0.5
  %v2751 = vmul.f32 %v2715, 0.5
  %v2752 = vmul.f32 %v2734, 0.5
  %v2753 = vmul.f32 %v2642, 0.5
  %v2754 = vmul.f32 %v2661, 0.5
  %v2755 = vmul.f32 %v2680, 0.5
  %v2756 = vmul.f32 %v2699, 0.5
  %v2757 = vmul.f32 %v2718, 0.5
  %v2758 = vmul.f32 %v2737, 0.5
  %v2759 = vmul.f32 %v2644, 0.5
  %v2760 = vmul.f32 %v2663, 0.5
  %v2761 = vmul.f32 %v2682, 0.5
  %v2762 = vmul.f32 %v2701, 0.5
  %v2763 = vmul.f32 %v2720, 0.5
  %v2764 = vmul.f32 %v2739, 0.5
  %v2765 = vmul.f32 %v2637, %v2637
  %v2766 = vmul.f32 %v2656, %v2656
  %v2767 = vmul.f32 %v2675, %v2675
  %v2768 = vmul.f32 %v2694, %v2694
  %v2769 = vmul.f32 %v2713, %v2713
  %v2770 = vmul.f32 %v2732, %v2732
  %v2771 = vmul.f32 %v2639, %v2639
  %v2772 = vmul.f32 %v2658, %v2658
  %v2773 = vmul.f32 %v2677, %v2677
  %v2774 = vmul.f32 %v2696, %v2696
  %v2775 = vmul.f32 %v2715, %v2715
  %v2776 = vmul.f32 %v2734, %v2734
  %v2777 = vmul.f32 %v2642, %v2642
  %v2778 = vmul.f32 %v2661, %v2661
  %v2779 = vmul.f32 %v2680, %v2680
  %v2780 = vmul.f32 %v2699, %v2699
  %v2781 = vmul.f32 %v2718, %v2718
  %v2782 = vmul.f32 %v2737, %v2737
  %v2783 = vmul.f32 %v2644, %v2644
  %v2784 = vmul.f32 %v2663, %v2663
  %v2785 = vmul.f32 %v2682, %v2682
  %v2786 = vmul.f32 %v2701, %v2701
  %v2787 = vmul.f32 %v2720, %v2720
  %v2788 = vmul.f32 %v2739, %v2739
  %v2789 = vadd.f32 %v2765, 1.0
  %v2790 = vadd.f32 %v2766, 1.0
  %v2791 = vadd.f32 %v2767, 1.0
  %v2792 = vadd.f32 %v2768, 1.0
  %v2793 = vadd.f32 %v2769, 1.0
  %v2794 = vadd.f32 %v2770, 1.0
  %v2795 = vadd.f32 %v2771, 1.0
  %v2796 = vadd.f32 %v2772, 1.0
  %v2797 = vadd.f32 %v2773, 1.0
  %v2798 = vadd.f32 %v2774, 1.0
  %v2799 = vadd.f32 %v2775, 1.0
  %v2800 = vadd.f32 %v2776, 1.0
  %v2801 = vadd.f32 %v2777, 1.0
  %v2802 = vadd.f32 %v2778, 1.0
  %v2803 = vadd.f32 %v2779, 1.0
  %v2804 = vadd.f32 %v2780, 1.0
  %v2805 = vadd.f32 %v2781, 1.0
  %v2806 = vadd.f32 %v2782, 1.0
  %v2807 = vadd.f32 %v2783, 1.0
  %v2808 = vadd.f32 %v2784, 1.0
  %v2809 = vadd.f32 %v2785, 1.0
  %v2810 = vadd.f32 %v2786, 1.0
  %v2811 = vadd.f32 %v2787, 1.0
  %v2812 = vadd.f32 %v2788, 1.0
  %v2813 = vrsqrt.pop %v2789
  %v2814 = vmul.f32 %v2813, %v2789
  %v2815 = vmul.f32 %v2814, %v2813
  %v2816 = vmul.f32 0.5, %v2815
  %v2817 = vsub.f32 1.5, %v2816
  %v2818 = vmul.f32 %v2813, %v2817
  %v2819 = vmul.f32 %v2789, %v2818
  %vm2820 = vcmp.eq.f32.partialorder %v2789, inf
  %v2821 = vsel %vm2820, %v2789, %v2819
  %vm2822 = vcmp.eq.f32.partialorder %v2789, 0.0
  %v2823 = vand.u32 %v2789, 2147483648
  %v2824 = vsel %vm2822, %v2823, %v2821
  %v2825 = vrsqrt.pop %v2790
  %v2826 = vmul.f32 %v2825, %v2790
  %v2827 = vmul.f32 %v2826, %v2825
  %v2828 = vmul.f32 0.5, %v2827
  %v2829 = vsub.f32 1.5, %v2828
  %v2830 = vmul.f32 %v2825, %v2829
  %v2831 = vmul.f32 %v2790, %v2830
  %vm2832 = vcmp.eq.f32.partialorder %v2790, inf
  %v2833 = vsel %vm2832, %v2790, %v2831
  %vm2834 = vcmp.eq.f32.partialorder %v2790, 0.0
  %v2835 = vand.u32 %v2790, 2147483648
  %v2836 = vsel %vm2834, %v2835, %v2833
  %v2837 = vrsqrt.pop %v2791
  %v2838 = vmul.f32 %v2837, %v2791
  %v2839 = vmul.f32 %v2838, %v2837
  %v2840 = vmul.f32 0.5, %v2839
  %v2841 = vsub.f32 1.5, %v2840
  %v2842 = vmul.f32 %v2837, %v2841
  %v2843 = vmul.f32 %v2791, %v2842
  %vm2844 = vcmp.eq.f32.partialorder %v2791, inf
  %v2845 = vsel %vm2844, %v2791, %v2843
  %vm2846 = vcmp.eq.f32.partialorder %v2791, 0.0
  %v2847 = vand.u32 %v2791, 2147483648
  %v2848 = vsel %vm2846, %v2847, %v2845
  %v2849 = vrsqrt.pop %v2792
  %v2850 = vmul.f32 %v2849, %v2792
  %v2851 = vmul.f32 %v2850, %v2849
  %v2852 = vmul.f32 0.5, %v2851
  %v2853 = vsub.f32 1.5, %v2852
  %v2854 = vmul.f32 %v2849, %v2853
  %v2855 = vmul.f32 %v2792, %v2854
  %vm2856 = vcmp.eq.f32.partialorder %v2792, inf
  %v2857 = vsel %vm2856, %v2792, %v2855
  %vm2858 = vcmp.eq.f32.partialorder %v2792, 0.0
  %v2859 = vand.u32 %v2792, 2147483648
  %v2860 = vsel %vm2858, %v2859, %v2857
  %v2861 = vrsqrt.pop %v2793
  %v2862 = vmul.f32 %v2861, %v2793
  %v2863 = vmul.f32 %v2862, %v2861
  %v2864 = vmul.f32 0.5, %v2863
  %v2865 = vsub.f32 1.5, %v2864
  %v2866 = vmul.f32 %v2861, %v2865
  %v2867 = vmul.f32 %v2793, %v2866
  %vm2868 = vcmp.eq.f32.partialorder %v2793, inf
  %v2869 = vsel %vm2868, %v2793, %v2867
  %vm2870 = vcmp.eq.f32.partialorder %v2793, 0.0
  %v2871 = vand.u32 %v2793, 2147483648
  %v2872 = vsel %vm2870, %v2871, %v2869
  %v2873 = vrsqrt.pop %v2794
  %v2874 = vmul.f32 %v2873, %v2794
  %v2875 = vmul.f32 %v2874, %v2873
  %v2876 = vmul.f32 0.5, %v2875
  %v2877 = vsub.f32 1.5, %v2876
  %v2878 = vmul.f32 %v2873, %v2877
  %v2879 = vmul.f32 %v2794, %v2878
  %vm2880 = vcmp.eq.f32.partialorder %v2794, inf
  %v2881 = vsel %vm2880, %v2794, %v2879
  %vm2882 = vcmp.eq.f32.partialorder %v2794, 0.0
  %v2883 = vand.u32 %v2794, 2147483648
  %v2884 = vsel %vm2882, %v2883, %v2881
  %v2885 = vrsqrt.pop %v2795
  %v2886 = vmul.f32 %v2885, %v2795
  %v2887 = vmul.f32 %v2886, %v2885
  %v2888 = vmul.f32 0.5, %v2887
  %v2889 = vsub.f32 1.5, %v2888
  %v2890 = vmul.f32 %v2885, %v2889
  %v2891 = vmul.f32 %v2795, %v2890
  %vm2892 = vcmp.eq.f32.partialorder %v2795, inf
  %v2893 = vsel %vm2892, %v2795, %v2891
  %vm2894 = vcmp.eq.f32.partialorder %v2795, 0.0
  %v2895 = vand.u32 %v2795, 2147483648
  %v2896 = vsel %vm2894, %v2895, %v2893
  %v2897 = vrsqrt.pop %v2796
  %v2898 = vmul.f32 %v2897, %v2796
  %v2899 = vmul.f32 %v2898, %v2897
  %v2900 = vmul.f32 0.5, %v2899
  %v2901 = vsub.f32 1.5, %v2900
  %v2902 = vmul.f32 %v2897, %v2901
  %v2903 = vmul.f32 %v2796, %v2902
  %vm2904 = vcmp.eq.f32.partialorder %v2796, inf
  %v2905 = vsel %vm2904, %v2796, %v2903
  %vm2906 = vcmp.eq.f32.partialorder %v2796, 0.0
  %v2907 = vand.u32 %v2796, 2147483648
  %v2908 = vsel %vm2906, %v2907, %v2905
  %v2909 = vrsqrt.pop %v2797
  %v2910 = vmul.f32 %v2909, %v2797
  %v2911 = vmul.f32 %v2910, %v2909
  %v2912 = vmul.f32 0.5, %v2911
  %v2913 = vsub.f32 1.5, %v2912
  %v2914 = vmul.f32 %v2909, %v2913
  %v2915 = vmul.f32 %v2797, %v2914
  %vm2916 = vcmp.eq.f32.partialorder %v2797, inf
  %v2917 = vsel %vm2916, %v2797, %v2915
  %vm2918 = vcmp.eq.f32.partialorder %v2797, 0.0
  %v2919 = vand.u32 %v2797, 2147483648
  %v2920 = vsel %vm2918, %v2919, %v2917
  %v2921 = vrsqrt.pop %v2798
  %v2922 = vmul.f32 %v2921, %v2798
  %v2923 = vmul.f32 %v2922, %v2921
  %v2924 = vmul.f32 0.5, %v2923
  %v2925 = vsub.f32 1.5, %v2924
  %v2926 = vmul.f32 %v2921, %v2925
  %v2927 = vmul.f32 %v2798, %v2926
  %vm2928 = vcmp.eq.f32.partialorder %v2798, inf
  %v2929 = vsel %vm2928, %v2798, %v2927
  %vm2930 = vcmp.eq.f32.partialorder %v2798, 0.0
  %v2931 = vand.u32 %v2798, 2147483648
  %v2932 = vsel %vm2930, %v2931, %v2929
  %v2933 = vrsqrt.pop %v2799
  %v2934 = vmul.f32 %v2933, %v2799
  %v2935 = vmul.f32 %v2934, %v2933
  %v2936 = vmul.f32 0.5, %v2935
  %v2937 = vsub.f32 1.5, %v2936
  %v2938 = vmul.f32 %v2933, %v2937
  %v2939 = vmul.f32 %v2799, %v2938
  %vm2940 = vcmp.eq.f32.partialorder %v2799, inf
  %v2941 = vsel %vm2940, %v2799, %v2939
  %vm2942 = vcmp.eq.f32.partialorder %v2799, 0.0
  %v2943 = vand.u32 %v2799, 2147483648
  %v2944 = vsel %vm2942, %v2943, %v2941
  %v2945 = vrsqrt.pop %v2800
  %v2946 = vmul.f32 %v2945, %v2800
  %v2947 = vmul.f32 %v2946, %v2945
  %v2948 = vmul.f32 0.5, %v2947
  %v2949 = vsub.f32 1.5, %v2948
  %v2950 = vmul.f32 %v2945, %v2949
  %v2951 = vmul.f32 %v2800, %v2950
  %vm2952 = vcmp.eq.f32.partialorder %v2800, inf
  %v2953 = vsel %vm2952, %v2800, %v2951
  %vm2954 = vcmp.eq.f32.partialorder %v2800, 0.0
  %v2955 = vand.u32 %v2800, 2147483648
  %v2956 = vsel %vm2954, %v2955, %v2953
  %v2957 = vrsqrt.pop %v2801
  %v2958 = vmul.f32 %v2957, %v2801
  %v2959 = vmul.f32 %v2958, %v2957
  %v2960 = vmul.f32 0.5, %v2959
  %v2961 = vsub.f32 1.5, %v2960
  %v2962 = vmul.f32 %v2957, %v2961
  %v2963 = vmul.f32 %v2801, %v2962
  %vm2964 = vcmp.eq.f32.partialorder %v2801, inf
  %v2965 = vsel %vm2964, %v2801, %v2963
  %vm2966 = vcmp.eq.f32.partialorder %v2801, 0.0
  %v2967 = vand.u32 %v2801, 2147483648
  %v2968 = vsel %vm2966, %v2967, %v2965
  %v2969 = vrsqrt.pop %v2802
  %v2970 = vmul.f32 %v2969, %v2802
  %v2971 = vmul.f32 %v2970, %v2969
  %v2972 = vmul.f32 0.5, %v2971
  %v2973 = vsub.f32 1.5, %v2972
  %v2974 = vmul.f32 %v2969, %v2973
  %v2975 = vmul.f32 %v2802, %v2974
  %vm2976 = vcmp.eq.f32.partialorder %v2802, inf
  %v2977 = vsel %vm2976, %v2802, %v2975
  %vm2978 = vcmp.eq.f32.partialorder %v2802, 0.0
  %v2979 = vand.u32 %v2802, 2147483648
  %v2980 = vsel %vm2978, %v2979, %v2977
  %v2981 = vrsqrt.pop %v2803
  %v2982 = vmul.f32 %v2981, %v2803
  %v2983 = vmul.f32 %v2982, %v2981
  %v2984 = vmul.f32 0.5, %v2983
  %v2985 = vsub.f32 1.5, %v2984
  %v2986 = vmul.f32 %v2981, %v2985
  %v2987 = vmul.f32 %v2803, %v2986
  %vm2988 = vcmp.eq.f32.partialorder %v2803, inf
  %v2989 = vsel %vm2988, %v2803, %v2987
  %vm2990 = vcmp.eq.f32.partialorder %v2803, 0.0
  %v2991 = vand.u32 %v2803, 2147483648
  %v2992 = vsel %vm2990, %v2991, %v2989
  %v2993 = vrsqrt.pop %v2804
  %v2994 = vmul.f32 %v2993, %v2804
  %v2995 = vmul.f32 %v2994, %v2993
  %v2996 = vmul.f32 0.5, %v2995
  %v2997 = vsub.f32 1.5, %v2996
  %v2998 = vmul.f32 %v2993, %v2997
  %v2999 = vmul.f32 %v2804, %v2998
  %vm3000 = vcmp.eq.f32.partialorder %v2804, inf
  %v3001 = vsel %vm3000, %v2804, %v2999
  %vm3002 = vcmp.eq.f32.partialorder %v2804, 0.0
  %v3003 = vand.u32 %v2804, 2147483648
  %v3004 = vsel %vm3002, %v3003, %v3001
  %v3005 = vrsqrt.pop %v2805
  %v3006 = vmul.f32 %v3005, %v2805
  %v3007 = vmul.f32 %v3006, %v3005
  %v3008 = vmul.f32 0.5, %v3007
  %v3009 = vsub.f32 1.5, %v3008
  %v3010 = vmul.f32 %v3005, %v3009
  %v3011 = vmul.f32 %v2805, %v3010
  %vm3012 = vcmp.eq.f32.partialorder %v2805, inf
  %v3013 = vsel %vm3012, %v2805, %v3011
  %vm3014 = vcmp.eq.f32.partialorder %v2805, 0.0
  %v3015 = vand.u32 %v2805, 2147483648
  %v3016 = vsel %vm3014, %v3015, %v3013
  %v3017 = vrsqrt.pop %v2806
  %v3018 = vmul.f32 %v3017, %v2806
  %v3019 = vmul.f32 %v3018, %v3017
  %v3020 = vmul.f32 0.5, %v3019
  %v3021 = vsub.f32 1.5, %v3020
  %v3022 = vmul.f32 %v3017, %v3021
  %v3023 = vmul.f32 %v2806, %v3022
  %vm3024 = vcmp.eq.f32.partialorder %v2806, inf
  %v3025 = vsel %vm3024, %v2806, %v3023
  %vm3026 = vcmp.eq.f32.partialorder %v2806, 0.0
  %v3027 = vand.u32 %v2806, 2147483648
  %v3028 = vsel %vm3026, %v3027, %v3025
  %v3029 = vrsqrt.pop %v2807
  %v3030 = vmul.f32 %v3029, %v2807
  %v3031 = vmul.f32 %v3030, %v3029
  %v3032 = vmul.f32 0.5, %v3031
  %v3033 = vsub.f32 1.5, %v3032
  %v3034 = vmul.f32 %v3029, %v3033
  %v3035 = vmul.f32 %v2807, %v3034
  %vm3036 = vcmp.eq.f32.partialorder %v2807, inf
  %v3037 = vsel %vm3036, %v2807, %v3035
  %vm3038 = vcmp.eq.f32.partialorder %v2807, 0.0
  %v3039 = vand.u32 %v2807, 2147483648
  %v3040 = vsel %vm3038, %v3039, %v3037
  %v3041 = vrsqrt.pop %v2808
  %v3042 = vmul.f32 %v3041, %v2808
  %v3043 = vmul.f32 %v3042, %v3041
  %v3044 = vmul.f32 0.5, %v3043
  %v3045 = vsub.f32 1.5, %v3044
  %v3046 = vmul.f32 %v3041, %v3045
  %v3047 = vmul.f32 %v2808, %v3046
  %vm3048 = vcmp.eq.f32.partialorder %v2808, inf
  %v3049 = vsel %vm3048, %v2808, %v3047
  %vm3050 = vcmp.eq.f32.partialorder %v2808, 0.0
  %v3051 = vand.u32 %v2808, 2147483648
  %v3052 = vsel %vm3050, %v3051, %v3049
  %v3053 = vrsqrt.pop %v2809
  %v3054 = vmul.f32 %v3053, %v2809
  %v3055 = vmul.f32 %v3054, %v3053
  %v3056 = vmul.f32 0.5, %v3055
  %v3057 = vsub.f32 1.5, %v3056
  %v3058 = vmul.f32 %v3053, %v3057
  %v3059 = vmul.f32 %v2809, %v3058
  %vm3060 = vcmp.eq.f32.partialorder %v2809, inf
  %v3061 = vsel %vm3060, %v2809, %v3059
  %vm3062 = vcmp.eq.f32.partialorder %v2809, 0.0
  %v3063 = vand.u32 %v2809, 2147483648
  %v3064 = vsel %vm3062, %v3063, %v3061
  %v3065 = vrsqrt.pop %v2810
  %v3066 = vmul.f32 %v3065, %v2810
  %v3067 = vmul.f32 %v3066, %v3065
  %v3068 = vmul.f32 0.5, %v3067
  %v3069 = vsub.f32 1.5, %v3068
  %v3070 = vmul.f32 %v3065, %v3069
  %v3071 = vmul.f32 %v2810, %v3070
  %vm3072 = vcmp.eq.f32.partialorder %v2810, inf
  %v3073 = vsel %vm3072, %v2810, %v3071
  %vm3074 = vcmp.eq.f32.partialorder %v2810, 0.0
  %v3075 = vand.u32 %v2810, 2147483648
  %v3076 = vsel %vm3074, %v3075, %v3073
  %v3077 = vrsqrt.pop %v2811
  %v3078 = vmul.f32 %v3077, %v2811
  %v3079 = vmul.f32 %v3078, %v3077
  %v3080 = vmul.f32 0.5, %v3079
  %v3081 = vsub.f32 1.5, %v3080
  %v3082 = vmul.f32 %v3077, %v3081
  %v3083 = vmul.f32 %v2811, %v3082
  %vm3084 = vcmp.eq.f32.partialorder %v2811, inf
  %v3085 = vsel %vm3084, %v2811, %v3083
  %vm3086 = vcmp.eq.f32.partialorder %v2811, 0.0
  %v3087 = vand.u32 %v2811, 2147483648
  %v3088 = vsel %vm3086, %v3087, %v3085
  %v3089 = vrsqrt.pop %v2812
  %v3090 = vmul.f32 %v3089, %v2812
  %v3091 = vmul.f32 %v3090, %v3089
  %v3092 = vmul.f32 0.5, %v3091
  %v3093 = vsub.f32 1.5, %v3092
  %v3094 = vmul.f32 %v3089, %v3093
  %v3095 = vmul.f32 %v2812, %v3094
  %vm3096 = vcmp.eq.f32.partialorder %v2812, inf
  %v3097 = vsel %vm3096, %v2812, %v3095
  %vm3098 = vcmp.eq.f32.partialorder %v2812, 0.0
  %v3099 = vand.u32 %v2812, 2147483648
  %v3100 = vsel %vm3098, %v3099, %v3097
  %v3101 = vmul.f32 %v2824, 0.5
  %v3102 = vmul.f32 %v2836, 0.5
  %v3103 = vmul.f32 %v2848, 0.5
  %v3104 = vmul.f32 %v2860, 0.5
  %v3105 = vmul.f32 %v2872, 0.5
  %v3106 = vmul.f32 %v2884, 0.5
  %v3107 = vmul.f32 %v2896, 0.5
  %v3108 = vmul.f32 %v2908, 0.5
  %v3109 = vmul.f32 %v2920, 0.5
  %v3110 = vmul.f32 %v2932, 0.5
  %v3111 = vmul.f32 %v2944, 0.5
  %v3112 = vmul.f32 %v2956, 0.5
  %v3113 = vmul.f32 %v2968, 0.5
  %v3114 = vmul.f32 %v2980, 0.5
  %v3115 = vmul.f32 %v2992, 0.5
  %v3116 = vmul.f32 %v3004, 0.5
  %v3117 = vmul.f32 %v3016, 0.5
  %v3118 = vmul.f32 %v3028, 0.5
  %v3119 = vmul.f32 %v3040, 0.5
  %v3120 = vmul.f32 %v3052, 0.5
  %v3121 = vmul.f32 %v3064, 0.5
  %v3122 = vmul.f32 %v3076, 0.5
  %v3123 = vmul.f32 %v3088, 0.5
  %v3124 = vmul.f32 %v3100, 0.5
  %v3125 = vadd.f32 %v2741, %v3101
  %v3126 = vadd.f32 %v2742, %v3102
  %v3127 = vadd.f32 %v2743, %v3103
  %v3128 = vadd.f32 %v2744, %v3104
  %v3129 = vadd.f32 %v2745, %v3105
  %v3130 = vadd.f32 %v2746, %v3106
  %v3131 = vadd.f32 %v2747, %v3107
  %v3132 = vadd.f32 %v2748, %v3108
  %v3133 = vadd.f32 %v2749, %v3109
  %v3134 = vadd.f32 %v2750, %v3110
  %v3135 = vadd.f32 %v2751, %v3111
  %v3136 = vadd.f32 %v2752, %v3112
  %v3137 = vadd.f32 %v2753, %v3113
  %v3138 = vadd.f32 %v2754, %v3114
  %v3139 = vadd.f32 %v2755, %v3115
  %v3140 = vadd.f32 %v2756, %v3116
  %v3141 = vadd.f32 %v2757, %v3117
  %v3142 = vadd.f32 %v2758, %v3118
  %v3143 = vadd.f32 %v2759, %v3119
  %v3144 = vadd.f32 %v2760, %v3120
  %v3145 = vadd.f32 %v2761, %v3121
  %v3146 = vadd.f32 %v2762, %v3122
  %v3147 = vadd.f32 %v2763, %v3123
  %v3148 = vadd.f32 %v2764, %v3124
  %v3149 = vsub.f32 %v3125, 0.5
  %v3150 = vsub.f32 %v3126, 0.5
  %v3151 = vsub.f32 %v3127, 0.5
  %v3152 = vsub.f32 %v3128, 0.5
  %v3153 = vsub.f32 %v3129, 0.5
  %v3154 = vsub.f32 %v3130, 0.5
  %v3155 = vsub.f32 %v3131, 0.5
  %v3156 = vsub.f32 %v3132, 0.5
  %v3157 = vsub.f32 %v3133, 0.5
  %v3158 = vsub.f32 %v3134, 0.5
  %v3159 = vsub.f32 %v3135, 0.5
  %v3160 = vsub.f32 %v3136, 0.5
  %v3161 = vsub.f32 %v3137, 0.5
  %v3162 = vsub.f32 %v3138, 0.5
  %v3163 = vsub.f32 %v3139, 0.5
  %v3164 = vsub.f32 %v3140, 0.5
  %v3165 = vsub.f32 %v3141, 0.5
  %v3166 = vsub.f32 %v3142, 0.5
  %v3167 = vsub.f32 %v3143, 0.5
  %v3168 = vsub.f32 %v3144, 0.5
  %v3169 = vsub.f32 %v3145, 0.5
  %v3170 = vsub.f32 %v3146, 0.5
  %v3171 = vsub.f32 %v3147, 0.5
  %v3172 = vsub.f32 %v3148, 0.5
  %s3173 = scalar_lea.vmem %s8, 4
  %v3174 = vld [vmem:[%s3173] sm:$0xf]
  %v3175 = vpack.c.bf16 %v3155, %v3149
  %v3176 = vpack.c.bf16 %v3156, %v3150
  %v3177 = vpack.c.bf16 %v3157, %v3151
  %v3178 = vpack.c.bf16 %v3158, %v3152
  %v3179 = vpack.c.bf16 %v3159, %v3153
  %v3180 = vpack.c.bf16 %v3160, %v3154
  %v3181 = vpack.c.bf16 %v3167, %v3161
  %v3182 = vpack.c.bf16 %v3168, %v3162
  %v3183 = vpack.c.bf16 %v3169, %v3163
  %v3184 = vpack.c.bf16 %v3170, %v3164
  %v3185 = vpack.c.bf16 %v3171, %v3165
  %v3186 = vpack.c.bf16 %v3172, %v3166
  %v3188 = vsel %vm1587, %v3174, 0
  %3190 = vmatpush.bf16.msra.mxu0 0
  %3191 = vmatpush.bf16.msra.mxu0 0
  %3192 = vmatpush.bf16.msra.mxu0 0
  %3193 = vmatpush.bf16.msra.mxu0 0
  %3194 = vmatpush.bf16.msra.mxu0 0
  %3195 = vmatpush.bf16.msra.mxu0 0
  %3196 = vmatpush.bf16.msra.mxu0 %v3181
  %3197 = vmatpush.bf16.msra.mxu0 %v3175
  %3198 = vmatmul.bf16.gmra.mxu0 %v3188
  %v3199 = vpop.f32.mrf.mxu0
  %v3200 = vadd.f32 0.0, %v3199
  %v3201 = vpop.f32.mrf.mxu0
  %3202 = vdwg.mxu0
  %3203 = vmatpush.bf16.msra.mxu0 0
  %3204 = vmatpush.bf16.msra.mxu0 0
  %3205 = vmatpush.bf16.msra.mxu0 0
  %3206 = vmatpush.bf16.msra.mxu0 0
  %3207 = vmatpush.bf16.msra.mxu0 0
  %3208 = vmatpush.bf16.msra.mxu0 0
  %3209 = vmatpush.bf16.msra.mxu0 %v3182
  %3210 = vmatpush.bf16.msra.mxu0 %v3176
  %3211 = vmatmul.bf16.gmra.mxu0 %v3188
  %v3212 = vpop.f32.mrf.mxu0
  %v3213 = vadd.f32 0.0, %v3212
  %v3214 = vpop.f32.mrf.mxu0
  %3215 = vdwg.mxu0
  %3216 = vmatpush.bf16.msra.mxu0 0
  %3217 = vmatpush.bf16.msra.mxu0 0
  %3218 = vmatpush.bf16.msra.mxu0 0
  %3219 = vmatpush.bf16.msra.mxu0 0
  %3220 = vmatpush.bf16.msra.mxu0 0
  %3221 = vmatpush.bf16.msra.mxu0 0
  %3222 = vmatpush.bf16.msra.mxu0 %v3183
  %3223 = vmatpush.bf16.msra.mxu0 %v3177
  %3224 = vmatmul.bf16.gmra.mxu0 %v3188
  %v3225 = vpop.f32.mrf.mxu0
  %v3226 = vadd.f32 0.0, %v3225
  %v3227 = vpop.f32.mrf.mxu0
  %3228 = vdwg.mxu0
  %3229 = vmatpush.bf16.msra.mxu0 0
  %3230 = vmatpush.bf16.msra.mxu0 0
  %3231 = vmatpush.bf16.msra.mxu0 0
  %3232 = vmatpush.bf16.msra.mxu0 0
  %3233 = vmatpush.bf16.msra.mxu0 0
  %3234 = vmatpush.bf16.msra.mxu0 0
  %3235 = vmatpush.bf16.msra.mxu0 %v3184
  %3236 = vmatpush.bf16.msra.mxu0 %v3178
  %3237 = vmatmul.bf16.gmra.mxu0 %v3188
  %v3238 = vpop.f32.mrf.mxu0
  %v3239 = vadd.f32 0.0, %v3238
  %v3240 = vpop.f32.mrf.mxu0
  %3241 = vdwg.mxu0
  %3242 = vmatpush.bf16.msra.mxu0 0
  %3243 = vmatpush.bf16.msra.mxu0 0
  %3244 = vmatpush.bf16.msra.mxu0 0
  %3245 = vmatpush.bf16.msra.mxu0 0
  %3246 = vmatpush.bf16.msra.mxu0 0
  %3247 = vmatpush.bf16.msra.mxu0 0
  %3248 = vmatpush.bf16.msra.mxu0 %v3185
  %3249 = vmatpush.bf16.msra.mxu0 %v3179
  %3250 = vmatmul.bf16.gmra.mxu0 %v3188
  %v3251 = vpop.f32.mrf.mxu0
  %v3252 = vadd.f32 0.0, %v3251
  %v3253 = vpop.f32.mrf.mxu0
  %3254 = vdwg.mxu0
  %3255 = vmatpush.bf16.msra.mxu0 0
  %3256 = vmatpush.bf16.msra.mxu0 0
  %3257 = vmatpush.bf16.msra.mxu0 0
  %3258 = vmatpush.bf16.msra.mxu0 0
  %3259 = vmatpush.bf16.msra.mxu0 0
  %3260 = vmatpush.bf16.msra.mxu0 0
  %3261 = vmatpush.bf16.msra.mxu0 %v3186
  %3262 = vmatpush.bf16.msra.mxu0 %v3180
  %3263 = vmatmul.bf16.gmra.mxu0 %v3188
  %v3264 = vpop.f32.mrf.mxu0
  %v3265 = vadd.f32 0.0, %v3264
  %v3266 = vpop.f32.mrf.mxu0
  %3267 = vdwg.mxu0
  %v3268 = vadd.f32 %v2551, %v3200
  %v3269 = vadd.f32 %v2552, %v3213
  %v3270 = vadd.f32 %v2553, %v3226
  %v3271 = vadd.f32 %v2554, %v3239
  %v3272 = vadd.f32 %v2555, %v3252
  %v3273 = vadd.f32 %v2556, %v3265
  %s3274 = scalar_lea.vmem %s9, 8
  %v3275 = vld [vmem:[%s3274] sm:$0xff]
  %3277 = vset.pattern.permute.xlu0 0
  %3278 = vperm.xlu0 %3277, %v3275
  %v3279 = vpop.permute.xlu0 %3278
  %v3281 = vadd.f32 %v3268, %v3279
  %v3282 = vadd.f32 %v3269, %v3279
  %v3283 = vadd.f32 %v3270, %v3279
  %v3284 = vadd.f32 %v3271, %v3279
  %v3285 = vadd.f32 %v3272, %v3279
  %v3286 = vadd.f32 %v3273, %v3279
  %3287 = vst [vmem:[%s10] sm:$0xff] %v3281
  %3288 = vst [vmem:[%s10 + $0x8] sm:$0xff] %v3282
  %3289 = vst [vmem:[%s10 + $0x10] sm:$0xff] %v3283
  %3290 = vst [vmem:[%s10 + $0x18] sm:$0xff] %v3284
  %3291 = vst [vmem:[%s10 + $0x20] sm:$0xff] %v3285
  %3292 = vst [vmem:[%s10 + $0x28] sm:$0xff] %v3286
  // Predicated region
  $region42: #{dehazeformer_block_forward.1} parent=0 // pred_check
    _
  $region43: #{dehazeformer_block_forward.1} parent=0 // pred_check_branch
    %3294 = sbr.rel (0) target = $region45
  $region44: #{dehazeformer_block_forward.1} parent=0 // pred_region
    _
  $region45: #{dehazeformer_block_forward.1} parent=0 // pred_fallthru
    _
  // Predicated region
  $region46: #{dehazeformer_block_forward.1} parent=0 // pred_check
    _
  $region47: #{dehazeformer_block_forward.1} parent=0 // pred_check_branch
    %3296 = sbr.rel (0) target = $region49
  $region48: #{dehazeformer_block_forward.1} parent=0 // pred_region
    _
  $region49: #{dehazeformer_block_forward.1} parent=0 // pred_fallthru
    _

</llo_original>
